<compile_context>
chip_gen: v7x
topology: tpu7x:2x2x1
jax: 0.10.0
libtpu: 0.0.40
codegen_flags: <defaults>
</compile_context>

<pallas_src>
import functools

import jax
import jax.numpy as jnp
import numpy as np
from jax import lax
from jax.experimental import pallas as pl
from jax.experimental.pallas import tpu as pltpu

EPS = 1e-5
_LANE = 128
# MXU operand dtype.  bf16 runs the MXU at native rate on v5e/v6e/v7x
# (accumulation stays f32 via preferred_element_type); the self-test in
# __main__ relaxes its tolerance accordingly.  Set to jnp.float32 for a
# bit-accurate comparison against the f32 reference.
_MXU_DTYPE = jnp.bfloat16
_MAX_IMGS_PER_STEP = 8        # bounds static unrolling of the packing loop


def _round_up(x, m):
    return (x + m - 1) // m * m


def _vmem_limit_bytes():
    """Per-chip scoped-VMEM limit: ~3/4 of physical capacity, capped at 100MiB
    (v5e/v6e: 128 MiB physical; v7x: 64 MiB per TensorCore)."""
    cap = 64 * 1024 * 1024                      # conservative fallback (v7x)
    try:
        cap = int(getattr(pltpu.get_tpu_info(), "vmem_capacity_bytes", cap))
    except Exception:
        pass
    return min(cap * 3 // 4, 100 * 1024 * 1024)


def _pick_images_per_step(n, hw, cin, cp, vmem_limit):
    """Largest divisor of n that (a) fits ~half the VMEM budget, (b) keeps the
    grid deep enough to pipeline / split across TensorCores, (c) bounds the
    static unroll of the tap-packing loop."""
    # Rough per-image per-step f32 bytes (stage 2 is the larger stage):
    #   2x double-buffered conv input (cp lanes) + 2x residual (cin lanes)
    #   + 2x double-buffered output (cp lanes) + packed scratch (9*cin lanes).
    per_img = 4 * hw * (4 * cp + 2 * cin + 9 * cin)
    budget = vmem_limit // 2
    best = 1
    for cand in range(1, min(n, _MAX_IMGS_PER_STEP) + 1):
        if n % cand:
            continue
        if cand * per_img > budget:
            continue
        if (n // cand) < min(n, 4):
            continue
        best = cand
    return best


# ---------------------------------------------------------------------------
# In-kernel helpers: pack the 3x3 taps into the contraction dimension and run
# a single MXU matmul per grid step.
# ---------------------------------------------------------------------------
def _pack_taps(packed_ref, y_l, y_c, y_r, *, n_img, hw_img, w_img, cin):
    """packed[r, t*cin:(t+1)*cin] = activation of tap t for output pixel r.

    For tap t = kh*3+kw the source row is r + (kh-1)*W + (kw-1); rows outside
    the image are the (tiny) zeroed halo, and W-boundary wrap-around is
    removed by the pre-masked y_l / y_r variants (kw==0 / kw==2 taps)."""
    ys = (y_l, y_c, y_r)
    for img in range(n_img):
        r0 = img * hw_img
        for kh in range(3):
            for kw in range(3):
                t = kh * 3 + kw
                off = (kh - 1) * w_img + (kw - 1)
                a = max(0, -off)                 # first valid output row
                b = min(hw_img, hw_img - off)    # one past last valid row
                col = t * cin
                # Halo rows of this tap (at most W+1 rows): zero them only.
                if a > 0:
                    packed_ref[r0:r0 + a, col:col + cin] = jnp.zeros(
                        (a, cin), jnp.float32)
                if b < hw_img:
                    packed_ref[r0 + b:r0 + hw_img, col:col + cin] = jnp.zeros(
                        (hw_img - b, cin), jnp.float32)
                # Valid rows: shifted slice of the (kw-masked) activations.
                packed_ref[r0 + a:r0 + b, col:col + cin] = (
                    ys[kw][r0 + a + off:r0 + b + off, :])


def _bn_relu_conv(x, scale, shift, w_flat, packed_ref, *, n_img, hw_img,
                  w_img):
    """relu(x*scale + shift) followed by a 3x3 conv as ONE packed-K matmul."""
    cin = x.shape[-1]
    m = x.shape[0]
    y = jnp.maximum(x * scale + shift, 0.0)

    # W-boundary masks from an in-kernel iota (no HBM mask inputs): a kw==0
    # tap never legally reads a source pixel in column W-1, a kw==2 tap never
    # legally reads column 0 -- zeroing those source columns removes the wrap.
    wpos = lax.broadcasted_iota(jnp.int32, (m, 1), 0) % w_img
    y_l = jnp.where(wpos == w_img - 1, 0.0, y)   # used by kw == 0 taps
    y_r = jnp.where(wpos == 0, 0.0, y)           # used by kw == 2 taps

    _pack_taps(packed_ref, y_l, y, y_r,
               n_img=n_img, hw_img=hw_img, w_img=w_img, cin=cin)

    # Single MXU matmul with K = 9*Cin (bf16 operands, f32 accumulation).
    return jnp.dot(packed_ref[...].astype(_MXU_DTYPE), w_flat,
                   preferred_element_type=jnp.float32)


# ---------------------------------------------------------------------------
# Stage 1: bn1-affine + ReLU + conv1 + bias, plus per-step sum / centered
# sum-of-squares side outputs (bn2 batch statistics partials).
# ---------------------------------------------------------------------------
def _stage1_kernel(x_ref, scale_ref, shift_ref, w_ref, b_ref,
                   out_ref, sum_ref, ssq_ref, packed_ref,
                   *, w_img, hw_img, n_img):
    cin = x_ref.shape[-1]
    m = n_img * hw_img

    x = x_ref[...].reshape(m, cin)
    acc = _bn_relu_conv(x, scale_ref[...], shift_ref[...], w_ref[...],
                        packed_ref, n_img=n_img, hw_img=hw_img, w_img=w_img)
    o = acc + b_ref[...]
    out_ref[...] = o.reshape(out_ref.shape)

    # bn2 statistic partials, centered about the per-step mean so the wrapper
    # can combine them without E[x^2] - E[x]^2 cancellation.
    s = jnp.sum(o, axis=0, keepdims=True)
    mu = s * (1.0 / m)
    sum_ref[...] = s
    ssq_ref[...] = jnp.sum((o - mu) ** 2, axis=0, keepdims=True)


def _stage1_call(x3, scale1, shift1, w_k, b_k, *, w_img, nt, vmem_limit):
    n, hw, cin = x3.shape
    cp = w_k.shape[-1]
    steps = n // nt
    flops = 2 * n * hw * (9 * cin) * cp
    bytes_acc = (4 * (n * hw * cin + n * hw * cp + 2 * steps * cp + cp
                      + 2 * cin) + 2 * int(w_k.size))
    return pl.pallas_call(
        functools.partial(_stage1_kernel, w_img=w_img, hw_img=hw, n_img=nt),
        out_shape=(jax.ShapeDtypeStruct((n, hw, cp), jnp.float32),
                   jax.ShapeDtypeStruct((steps, 1, cp), jnp.float32),
                   jax.ShapeDtypeStruct((steps, 1, cp), jnp.float32)),
        grid=(steps,),
        in_specs=[
            pl.BlockSpec((nt, hw, cin), lambda i: (i, 0, 0)),
            pl.BlockSpec((1, cin), lambda i: (0, 0)),
            pl.BlockSpec((1, cin), lambda i: (0, 0)),
            # Grid-invariant operands; pl.Buffered(1) would halve their VMEM
            # footprint for large Cin/Cout -- left at the default here.
            pl.BlockSpec((9 * cin, cp), lambda i: (0, 0)),
            pl.BlockSpec((1, cp), lambda i: (0, 0)),
        ],
        out_specs=(
            pl.BlockSpec((nt, hw, cp), lambda i: (i, 0, 0)),
            pl.BlockSpec((None, 1, cp), lambda i: (i, 0, 0)),
            pl.BlockSpec((None, 1, cp), lambda i: (i, 0, 0)),
        ),
        scratch_shapes=[pltpu.VMEM((nt * hw, 9 * cin), jnp.float32)],
        compiler_params=pltpu.CompilerParams(
            dimension_semantics=("parallel",),
            vmem_limit_bytes=vmem_limit),
        cost_estimate=pl.CostEstimate(flops=flops, transcendentals=0,
                                      bytes_accessed=bytes_acc),
    )(x3, scale1, shift1, w_k, b_k)


# ---------------------------------------------------------------------------
# Stage 2: bn2-affine + ReLU + conv2 + bias + residual add.
# ---------------------------------------------------------------------------
def _stage2_kernel(x_ref, res_ref, scale_ref, shift_ref, w_ref, b_ref,
                   out_ref, packed_ref, *, w_img, hw_img, n_img):
    cin = res_ref.shape[-1]           # true channel count (planes)
    cp = out_ref.shape[-1]
    m = n_img * hw_img

    x = x_ref[...].reshape(m, cp)
    if cp > cin:                      # drop the lane padding of the o1 input
        x = x[:, :cin]
    acc = _bn_relu_conv(x, scale_ref[...], shift_ref[...], w_ref[...],
                        packed_ref, n_img=n_img, hw_img=hw_img, w_img=w_img)

    # Residual arrives unpadded; lane-pad it in VMEM (cheap vs. an HBM copy).
    res = res_ref[...].reshape(m, cin)
    if cp > cin:
        res = jnp.concatenate(
            [res, jnp.zeros((m, cp - cin), jnp.float32)], axis=-1)
    out_ref[...] = (acc + b_ref[...] + res).reshape(out_ref.shape)


def _stage2_call(o1, res, scale2, shift2, w_k, b_k, *, w_img, nt, vmem_limit):
    n, hw, cp = o1.shape
    cin = res.shape[-1]
    steps = n // nt
    flops = 2 * n * hw * (9 * cin) * cp
    bytes_acc = (4 * (2 * n * hw * cp + n * hw * cin + cp + 2 * cin)
                 + 2 * int(w_k.size))
    return pl.pallas_call(
        functools.partial(_stage2_kernel, w_img=w_img, hw_img=hw, n_img=nt),
        out_shape=jax.ShapeDtypeStruct((n, hw, cp), jnp.float32),
        grid=(steps,),
        in_specs=[
            pl.BlockSpec((nt, hw, cp), lambda i: (i, 0, 0)),    # o1
            pl.BlockSpec((nt, hw, cin), lambda i: (i, 0, 0)),   # residual x
            pl.BlockSpec((1, cin), lambda i: (0, 0)),
            pl.BlockSpec((1, cin), lambda i: (0, 0)),
            pl.BlockSpec((9 * cin, cp), lambda i: (0, 0)),
            pl.BlockSpec((1, cp), lambda i: (0, 0)),
        ],
        out_specs=pl.BlockSpec((nt, hw, cp), lambda i: (i, 0, 0)),
        scratch_shapes=[pltpu.VMEM((nt * hw, 9 * cin), jnp.float32)],
        compiler_params=pltpu.CompilerParams(
            dimension_semantics=("parallel",),
            vmem_limit_bytes=vmem_limit),
        cost_estimate=pl.CostEstimate(flops=flops, transcendentals=0,
                                      bytes_accessed=bytes_acc),
    )(o1, res, scale2, shift2, w_k, b_k)


# ---------------------------------------------------------------------------
# JAX glue: curve-coefficient parameter combination + layout plumbing.
# ---------------------------------------------------------------------------
def _combine_curve(stacked, coeffs):
    # stacked: (num_bends, *param_shape); effective param = sum_j coeffs[j]*p_j
    return jnp.tensordot(coeffs, stacked, axes=1)


def basic_block_curve_forward(x_nchw, coeffs_t, params):
    # TODO(synk): stride != 1 / downsample branch of BasicBlockCurve is not
    # implemented (this instantiation uses stride=1, downsample=None).
    N, C, H, W = x_nchw.shape
    HW = H * W
    M = N * HW

    g1 = _combine_curve(params["bn1_weight"], coeffs_t)
    b1 = _combine_curve(params["bn1_bias"], coeffs_t)
    w1 = _combine_curve(params["conv1_weight"], coeffs_t)   # (planes, C, 3, 3)
    c1b = _combine_curve(params["conv1_bias"], coeffs_t)
    g2 = _combine_curve(params["bn2_weight"], coeffs_t)
    b2 = _combine_curve(params["bn2_bias"], coeffs_t)
    w2 = _combine_curve(params["conv2_weight"], coeffs_t)   # (planes, planes, 3, 3)
    c2b = _combine_curve(params["conv2_bias"], coeffs_t)

    planes = w1.shape[0]
    assert planes == C, "identity residual requires inplanes == planes"
    CP = _round_up(planes, _LANE)                            # lane-dense Cout

    x3 = jnp.transpose(x_nchw, (0, 2, 3, 1)).reshape(N, HW, C)   # (N, HW, C)

    # ---- bn1 batch statistics: single fused XLA reduction over x -----------
    xs = jnp.sum(x_nchw, axis=(0, 2, 3))
    xss = jnp.sum(x_nchw * x_nchw, axis=(0, 2, 3))
    mean1 = xs / M
    var1 = jnp.maximum(xss / M - mean1 * mean1, 0.0)         # biased variance
    inv1 = lax.rsqrt(var1 + EPS)
    scale1 = (g1 * inv1).reshape(1, C)
    shift1 = (b1 - mean1 * g1 * inv1).reshape(1, C)

    # conv weights: OIHW -> (9*Cin, Cout_pad) in the MXU dtype, bias f32.
    def _prep_w(w, cin):
        wk = jnp.transpose(w, (2, 3, 1, 0)).reshape(9 * cin, w.shape[0])
        return jnp.pad(wk, ((0, 0), (0, CP - w.shape[0]))).astype(_MXU_DTYPE)

    w1_k = _prep_w(w1, C)
    w2_k = _prep_w(w2, planes)
    b1_k = jnp.pad(c1b, (0, CP - planes)).reshape(1, CP)
    b2_k = jnp.pad(c2b, (0, CP - planes)).reshape(1, CP)

    vmem_limit = _vmem_limit_bytes()
    nt = _pick_images_per_step(N, HW, C, CP, vmem_limit)

    # ---- stage 1: bn1 + relu + conv1 (+ bn2 statistic partials) ------------
    o1, s_sum, s_ssq = _stage1_call(x3, scale1, shift1, w1_k, b1_k,
                                    w_img=W, nt=nt, vmem_limit=vmem_limit)

    cnt = nt * HW
    sums = s_sum[:, 0, :planes]                              # (steps, planes)
    ssqs = s_ssq[:, 0, :planes]
    mean2 = jnp.sum(sums, axis=0) / M
    mu_s = sums / cnt
    # Parallel-variance combination of per-step-centered partials (avoids the
    # single-pass E[x^2]-E[x]^2 cancellation flagged in review).
    var2 = (jnp.sum(ssqs, axis=0)
            + cnt * jnp.sum((mu_s - mean2) ** 2, axis=0)) / M
    var2 = jnp.maximum(var2, 0.0)
    inv2 = lax.rsqrt(var2 + EPS)
    scale2 = (g2 * inv2).reshape(1, planes)
    shift2 = (b2 - mean2 * g2 * inv2).reshape(1, planes)

    # ---- stage 2: bn2 + relu + conv2 + residual -----------------------------
    o2 = _stage2_call(o1, x3, scale2, shift2, w2_k, b2_k,
                      w_img=W, nt=nt, vmem_limit=vmem_limit)

    out = o2[:, :, :planes].reshape(N, H, W, planes)
    return jnp.transpose(out, (0, 3, 1, 2))                  # back to NCHW


# ---------------------------------------------------------------------------
# Pure-JAX reference (NCHW) used to validate the Pallas path.
# ---------------------------------------------------------------------------
def ref_forward(x, coeffs_t, params):
    def bn(y, g, b):
        mean = jnp.mean(y, axis=(0, 2, 3), keepdims=True)
        var = jnp.mean((y - mean) ** 2, axis=(0, 2, 3), keepdims=True)
        return ((y - mean) / jnp.sqrt(var + EPS) * g.reshape(1, -1, 1, 1)
                + b.reshape(1, -1, 1, 1))

    def conv(y, w, b):
        out = lax.conv_general_dilated(
            y, w, window_strides=(1, 1), padding=[(1, 1), (1, 1)],
            dimension_numbers=("NCHW", "OIHW", "NCHW"))
        return out + b.reshape(1, -1, 1, 1)

    g1 = _combine_curve(params["bn1_weight"], coeffs_t)
    b1 = _combine_curve(params["bn1_bias"], coeffs_t)
    w1 = _combine_curve(params["conv1_weight"], coeffs_t)
    c1b = _combine_curve(params["conv1_bias"], coeffs_t)
    g2 = _combine_curve(params["bn2_weight"], coeffs_t)
    b2 = _combine_curve(params["bn2_bias"], coeffs_t)
    w2 = _combine_curve(params["conv2_weight"], coeffs_t)
    c2b = _combine_curve(params["conv2_bias"], coeffs_t)

    out = jax.nn.relu(bn(x, g1, b1))
    out = conv(out, w1, c1b)
    out = jax.nn.relu(bn(out, g2, b2))
    out = conv(out, w2, c2b)
    return out + x


if __name__ == "__main__":
    key = jax.random.PRNGKey(0)
    num_bends = 3                 # fix_points = [True, False, True]
    inplanes = planes = 4
    N, H, W = 2, 16, 16

    ks = jax.random.split(key, 9)
    params = {
        "bn1_weight":   1.0 + 0.1 * jax.random.normal(ks[0], (num_bends, inplanes), jnp.float32),
        "bn1_bias":     0.1 * jax.random.normal(ks[1], (num_bends, inplanes), jnp.float32),
        "conv1_weight": 0.2 * jax.random.normal(ks[2], (num_bends, planes, inplanes, 3, 3), jnp.float32),
        "conv1_bias":   0.1 * jax.random.normal(ks[3], (num_bends, planes), jnp.float32),
        "bn2_weight":   1.0 + 0.1 * jax.random.normal(ks[4], (num_bends, planes), jnp.float32),
        "bn2_bias":     0.1 * jax.random.normal(ks[5], (num_bends, planes), jnp.float32),
        "conv2_weight": 0.2 * jax.random.normal(ks[6], (num_bends, planes, planes, 3, 3), jnp.float32),
        "conv2_bias":   0.1 * jax.random.normal(ks[7], (num_bends, planes), jnp.float32),
    }
    x = jax.random.normal(ks[8], (N, inplanes, H, W), jnp.float32)

    # Bezier-curve coefficients at t = 0.3 for 3 bends.
    t = 0.3
    coeffs_t = jnp.array([(1 - t) ** 2, 2 * t * (1 - t), t ** 2], jnp.float32)

    fwd = jax.jit(basic_block_curve_forward)
    out = jax.block_until_ready(fwd(x, coeffs_t, params))
    ref = jax.block_until_ready(jax.jit(ref_forward)(x, coeffs_t, params))

    # bf16 MXU operands -> relaxed tolerance vs. the pure-f32 reference.
    tol = 1e-4 if _MXU_DTYPE == jnp.float32 else 5e-2
    np.testing.assert_allclose(np.asarray(out), np.asarray(ref),
                               rtol=tol, atol=tol)
    print("KERNEL_OK")
</pallas_src>

<mosaic_0001>
module attributes {stable_mosaic.version = 11 : i64} {
  func.func @_stage1_kernel(%arg0: i32, %arg1: memref<1x256x4xf32, #tpu.memory_space<vmem>>, %arg2: memref<1x4xf32, #tpu.memory_space<vmem>>, %arg3: memref<1x4xf32, #tpu.memory_space<vmem>>, %arg4: memref<36x128xbf16, #tpu.memory_space<vmem>>, %arg5: memref<1x128xf32, #tpu.memory_space<vmem>>, %arg6: memref<1x256x128xf32, #tpu.memory_space<vmem>>, %arg7: memref<1x1x128xf32, #tpu.memory_space<vmem>>, %arg8: memref<1x1x128xf32, #tpu.memory_space<vmem>>, %arg9: memref<256x36xf32, #tpu.memory_space<vmem>>) attributes {dimension_semantics = [#tpu.dimension_semantics<parallel>], iteration_bounds = array<i64: 2>, scalar_prefetch = 0 : i64, scratch_operands = 1 : i64, tpu.core_type = #tpu.core_type<tc>, window_params = [{transform_indices = @transform_0, window_bounds = array<i64: 1, 256, 4>}, {pipeline_mode = #tpu.pipeline_mode<synchronous>, transform_indices = @transform_1, window_bounds = array<i64: 1, 4>}, {pipeline_mode = #tpu.pipeline_mode<synchronous>, transform_indices = @transform_2, window_bounds = array<i64: 1, 4>}, {pipeline_mode = #tpu.pipeline_mode<synchronous>, transform_indices = @transform_3, window_bounds = array<i64: 36, 128>}, {pipeline_mode = #tpu.pipeline_mode<synchronous>, transform_indices = @transform_4, window_bounds = array<i64: 1, 128>}, {transform_indices = @transform_5, window_bounds = array<i64: 1, 256, 128>}, {transform_indices = @transform_6, window_bounds = array<i64: 1, 1, 128>}, {transform_indices = @transform_7, window_bounds = array<i64: 1, 1, 128>}]} {
    %c0 = arith.constant 0 : index
    %c0_0 = arith.constant 0 : index
    %c0_1 = arith.constant 0 : index
    %0 = vector.load %arg1[%c0, %c0_0, %c0_1] : memref<1x256x4xf32, #tpu.memory_space<vmem>>, vector<1x256x4xf32>
    %1 = vector.shape_cast %0 : vector<1x256x4xf32> to vector<256x4xf32>
    %c0_2 = arith.constant 0 : index
    %c0_3 = arith.constant 0 : index
    %2 = vector.load %arg2[%c0_2, %c0_3] : memref<1x4xf32, #tpu.memory_space<vmem>>, vector<1x4xf32>
    %c0_4 = arith.constant 0 : index
    %c0_5 = arith.constant 0 : index
    %3 = vector.load %arg3[%c0_4, %c0_5] : memref<1x4xf32, #tpu.memory_space<vmem>>, vector<1x4xf32>
    %c0_6 = arith.constant 0 : index
    %c0_7 = arith.constant 0 : index
    %4 = vector.load %arg4[%c0_6, %c0_7] : memref<36x128xbf16, #tpu.memory_space<vmem>>, vector<36x128xbf16>
    %5 = vector.broadcast %2 : vector<1x4xf32> to vector<256x4xf32>
    %6 = arith.mulf %1, %5 : vector<256x4xf32>
    %7 = vector.broadcast %3 : vector<1x4xf32> to vector<256x4xf32>
    %8 = arith.addf %6, %7 : vector<256x4xf32>
    %cst = arith.constant 0.000000e+00 : f32
    %9 = vector.broadcast %cst : f32 to vector<256x4xf32>
    %10 = arith.maximumf %8, %9 : vector<256x4xf32>
    %11 = tpu.iota {dimensions = array<i32: 0>} : vector<256x1xi32>
    %c16_i32 = arith.constant 16 : i32
    %c0_i32 = arith.constant 0 : i32
    %12 = arith.cmpi eq, %c16_i32, %c0_i32 : i32
    %c1_i32 = arith.constant 1 : i32
    %13 = arith.select %12, %c1_i32, %c16_i32 : i32
    %14 = vector.broadcast %13 : i32 to vector<256x1xi32>
    %15 = arith.remsi %11, %14 : vector<256x1xi32>
    %c0_i32_8 = arith.constant 0 : i32
    %16 = vector.broadcast %c0_i32_8 : i32 to vector<256x1xi32>
    %17 = arith.cmpi ne, %15, %16 : vector<256x1xi32>
    %c0_i32_9 = arith.constant 0 : i32
    %18 = vector.broadcast %c0_i32_9 : i32 to vector<256x1xi32>
    %19 = arith.cmpi slt, %15, %18 : vector<256x1xi32>
    %c0_i32_10 = arith.constant 0 : i32
    %20 = arith.cmpi slt, %13, %c0_i32_10 : i32
    %21 = vector.broadcast %20 : i1 to vector<256x1xi1>
    %22 = vector.broadcast %21 : vector<256x1xi1> to vector<256x1xi1>
    %23 = arith.xori %19, %22 : vector<256x1xi1>
    %24 = arith.andi %23, %17 : vector<256x1xi1>
    %25 = vector.broadcast %13 : i32 to vector<256x1xi32>
    %26 = arith.addi %15, %25 : vector<256x1xi32>
    %27 = arith.select %24, %26, %15 : vector<256x1xi1>, vector<256x1xi32>
    %c15_i32 = arith.constant 15 : i32
    %28 = vector.broadcast %c15_i32 : i32 to vector<256x1xi32>
    %29 = arith.cmpi eq, %27, %28 : vector<256x1xi32>
    %cst_11 = arith.constant 0.000000e+00 : f32
    %30 = vector.shape_cast %29 : vector<256x1xi1> to vector<256x1xi1>
    %31 = vector.broadcast %30 : vector<256x1xi1> to vector<256x4xi1>
    %32 = vector.broadcast %cst_11 : f32 to vector<256x4xf32>
    %33 = arith.select %31, %32, %10 : vector<256x4xi1>, vector<256x4xf32>
    %c0_i32_12 = arith.constant 0 : i32
    %34 = vector.broadcast %c0_i32_12 : i32 to vector<256x1xi32>
    %35 = arith.cmpi eq, %27, %34 : vector<256x1xi32>
    %cst_13 = arith.constant 0.000000e+00 : f32
    %36 = vector.shape_cast %35 : vector<256x1xi1> to vector<256x1xi1>
    %37 = vector.broadcast %36 : vector<256x1xi1> to vector<256x4xi1>
    %38 = vector.broadcast %cst_13 : f32 to vector<256x4xf32>
    %39 = arith.select %37, %38, %10 : vector<256x4xi1>, vector<256x4xf32>
    %cst_14 = arith.constant 0.000000e+00 : f32
    %40 = vector.broadcast %cst_14 : f32 to vector<17x4xf32>
    %c0_15 = arith.constant 0 : index
    %c0_16 = arith.constant 0 : index
    %41 = vector.load %arg9[%c0_15, %c0_16] : memref<256x36xf32, #tpu.memory_space<vmem>>, vector<17x4xf32>
    tpu.vector_store %arg9[%c0_15, %c0_16], %40 {strides = array<i32>} : memref<256x36xf32, #tpu.memory_space<vmem>>, vector<17x4xf32>,
    %42 = vector.extract_strided_slice %33 {offsets = [0, 0], sizes = [239, 4], strides = [1, 1]} : vector<256x4xf32> to vector<239x4xf32>
    %c17 = arith.constant 17 : index
    %c0_17 = arith.constant 0 : index
    %43 = vector.load %arg9[%c17, %c0_17] : memref<256x36xf32, #tpu.memory_space<vmem>>, vector<239x4xf32>
    tpu.vector_store %arg9[%c17, %c0_17], %42 {strides = array<i32>} : memref<256x36xf32, #tpu.memory_space<vmem>>, vector<239x4xf32>,
    %cst_18 = arith.constant 0.000000e+00 : f32
    %44 = vector.broadcast %cst_18 : f32 to vector<16x4xf32>
    %c0_19 = arith.constant 0 : index
    %c4 = arith.constant 4 : index
    %45 = vector.load %arg9[%c0_19, %c4] : memref<256x36xf32, #tpu.memory_space<vmem>>, vector<16x4xf32>
    tpu.vector_store %arg9[%c0_19, %c4], %44 {strides = array<i32>} : memref<256x36xf32, #tpu.memory_space<vmem>>, vector<16x4xf32>,
    %46 = vector.extract_strided_slice %10 {offsets = [0, 0], sizes = [240, 4], strides = [1, 1]} : vector<256x4xf32> to vector<240x4xf32>
    %c16 = arith.constant 16 : index
    %c4_20 = arith.constant 4 : index
    %47 = vector.load %arg9[%c16, %c4_20] : memref<256x36xf32, #tpu.memory_space<vmem>>, vector<240x4xf32>
    tpu.vector_store %arg9[%c16, %c4_20], %46 {strides = array<i32>} : memref<256x36xf32, #tpu.memory_space<vmem>>, vector<240x4xf32>,
    %cst_21 = arith.constant 0.000000e+00 : f32
    %48 = vector.broadcast %cst_21 : f32 to vector<15x4xf32>
    %c0_22 = arith.constant 0 : index
    %c8 = arith.constant 8 : index
    %49 = vector.load %arg9[%c0_22, %c8] : memref<256x36xf32, #tpu.memory_space<vmem>>, vector<15x4xf32>
    tpu.vector_store %arg9[%c0_22, %c8], %48 {strides = array<i32>} : memref<256x36xf32, #tpu.memory_space<vmem>>, vector<15x4xf32>,
    %50 = vector.extract_strided_slice %39 {offsets = [0, 0], sizes = [241, 4], strides = [1, 1]} : vector<256x4xf32> to vector<241x4xf32>
    %c15 = arith.constant 15 : index
    %c8_23 = arith.constant 8 : index
    %51 = vector.load %arg9[%c15, %c8_23] : memref<256x36xf32, #tpu.memory_space<vmem>>, vector<241x4xf32>
    tpu.vector_store %arg9[%c15, %c8_23], %50 {strides = array<i32>} : memref<256x36xf32, #tpu.memory_space<vmem>>, vector<241x4xf32>,
    %cst_24 = arith.constant 0.000000e+00 : f32
    %52 = vector.broadcast %cst_24 : f32 to vector<1x4xf32>
    %c0_25 = arith.constant 0 : index
    %c12 = arith.constant 12 : index
    %53 = vector.load %arg9[%c0_25, %c12] : memref<256x36xf32, #tpu.memory_space<vmem>>, vector<1x4xf32>
    tpu.vector_store %arg9[%c0_25, %c12], %52 {strides = array<i32>} : memref<256x36xf32, #tpu.memory_space<vmem>>, vector<1x4xf32>,
    %54 = vector.extract_strided_slice %33 {offsets = [0, 0], sizes = [255, 4], strides = [1, 1]} : vector<256x4xf32> to vector<255x4xf32>
    %c1 = arith.constant 1 : index
    %c12_26 = arith.constant 12 : index
    %55 = vector.load %arg9[%c1, %c12_26] : memref<256x36xf32, #tpu.memory_space<vmem>>, vector<255x4xf32>
    tpu.vector_store %arg9[%c1, %c12_26], %54 {strides = array<i32>} : memref<256x36xf32, #tpu.memory_space<vmem>>, vector<255x4xf32>,
    %c0_27 = arith.constant 0 : index
    %c16_28 = arith.constant 16 : index
    %56 = vector.load %arg9[%c0_27, %c16_28] : memref<256x36xf32, #tpu.memory_space<vmem>>, vector<256x4xf32>
    tpu.vector_store %arg9[%c0_27, %c16_28], %10 {strides = array<i32>} : memref<256x36xf32, #tpu.memory_space<vmem>>, vector<256x4xf32>,
    %cst_29 = arith.constant 0.000000e+00 : f32
    %57 = vector.broadcast %cst_29 : f32 to vector<1x4xf32>
    %c255 = arith.constant 255 : index
    %c20 = arith.constant 20 : index
    %58 = vector.load %arg9[%c255, %c20] : memref<256x36xf32, #tpu.memory_space<vmem>>, vector<1x4xf32>
    tpu.vector_store %arg9[%c255, %c20], %57 {strides = array<i32>} : memref<256x36xf32, #tpu.memory_space<vmem>>, vector<1x4xf32>,
    %59 = vector.extract_strided_slice %39 {offsets = [1, 0], sizes = [255, 4], strides = [1, 1]} : vector<256x4xf32> to vector<255x4xf32>
    %c0_30 = arith.constant 0 : index
    %c20_31 = arith.constant 20 : index
    %60 = vector.load %arg9[%c0_30, %c20_31] : memref<256x36xf32, #tpu.memory_space<vmem>>, vector<255x4xf32>
    tpu.vector_store %arg9[%c0_30, %c20_31], %59 {strides = array<i32>} : memref<256x36xf32, #tpu.memory_space<vmem>>, vector<255x4xf32>,
    %cst_32 = arith.constant 0.000000e+00 : f32
    %61 = vector.broadcast %cst_32 : f32 to vector<15x4xf32>
    %c241 = arith.constant 241 : index
    %c24 = arith.constant 24 : index
    %62 = vector.load %arg9[%c241, %c24] : memref<256x36xf32, #tpu.memory_space<vmem>>, vector<15x4xf32>
    tpu.vector_store %arg9[%c241, %c24], %61 {strides = array<i32>} : memref<256x36xf32, #tpu.memory_space<vmem>>, vector<15x4xf32>,
    %63 = vector.extract_strided_slice %33 {offsets = [15, 0], sizes = [241, 4], strides = [1, 1]} : vector<256x4xf32> to vector<241x4xf32>
    %c0_33 = arith.constant 0 : index
    %c24_34 = arith.constant 24 : index
    %64 = vector.load %arg9[%c0_33, %c24_34] : memref<256x36xf32, #tpu.memory_space<vmem>>, vector<241x4xf32>
    tpu.vector_store %arg9[%c0_33, %c24_34], %63 {strides = array<i32>} : memref<256x36xf32, #tpu.memory_space<vmem>>, vector<241x4xf32>,
    %cst_35 = arith.constant 0.000000e+00 : f32
    %65 = vector.broadcast %cst_35 : f32 to vector<16x4xf32>
    %c240 = arith.constant 240 : index
    %c28 = arith.constant 28 : index
    %66 = vector.load %arg9[%c240, %c28] : memref<256x36xf32, #tpu.memory_space<vmem>>, vector<16x4xf32>
    tpu.vector_store %arg9[%c240, %c28], %65 {strides = array<i32>} : memref<256x36xf32, #tpu.memory_space<vmem>>, vector<16x4xf32>,
    %67 = vector.extract_strided_slice %10 {offsets = [16, 0], sizes = [240, 4], strides = [1, 1]} : vector<256x4xf32> to vector<240x4xf32>
    %c0_36 = arith.constant 0 : index
    %c28_37 = arith.constant 28 : index
    %68 = vector.load %arg9[%c0_36, %c28_37] : memref<256x36xf32, #tpu.memory_space<vmem>>, vector<240x4xf32>
    tpu.vector_store %arg9[%c0_36, %c28_37], %67 {strides = array<i32>} : memref<256x36xf32, #tpu.memory_space<vmem>>, vector<240x4xf32>,
    %cst_38 = arith.constant 0.000000e+00 : f32
    %69 = vector.broadcast %cst_38 : f32 to vector<17x4xf32>
    %c239 = arith.constant 239 : index
    %c32 = arith.constant 32 : index
    %70 = vector.load %arg9[%c239, %c32] : memref<256x36xf32, #tpu.memory_space<vmem>>, vector<17x4xf32>
    tpu.vector_store %arg9[%c239, %c32], %69 {strides = array<i32>} : memref<256x36xf32, #tpu.memory_space<vmem>>, vector<17x4xf32>,
    %71 = vector.extract_strided_slice %39 {offsets = [17, 0], sizes = [239, 4], strides = [1, 1]} : vector<256x4xf32> to vector<239x4xf32>
    %c0_39 = arith.constant 0 : index
    %c32_40 = arith.constant 32 : index
    %72 = vector.load %arg9[%c0_39, %c32_40] : memref<256x36xf32, #tpu.memory_space<vmem>>, vector<239x4xf32>
    tpu.vector_store %arg9[%c0_39, %c32_40], %71 {strides = array<i32>} : memref<256x36xf32, #tpu.memory_space<vmem>>, vector<239x4xf32>,
    %c0_41 = arith.constant 0 : index
    %c0_42 = arith.constant 0 : index
    %73 = vector.load %arg9[%c0_41, %c0_42] : memref<256x36xf32, #tpu.memory_space<vmem>>, vector<256x36xf32>
    %74 = arith.truncf %73 : vector<256x36xf32> to vector<256x36xbf16>
    %cst_43 = arith.constant dense<0.000000e+00> : vector<256x128xf32>
    %75 = tpu.matmul %74, %4, %cst_43 {dimension_numbers = #tpu.dot_dimension_numbers<[1], [0], [0], [1], [0, 0, 1, 1], [], []>} : vector<256x36xbf16>, vector<36x128xbf16>, vector<256x128xf32> -> vector<256x128xf32>
    %c0_44 = arith.constant 0 : index
    %c0_45 = arith.constant 0 : index
    %76 = vector.load %arg5[%c0_44, %c0_45] : memref<1x128xf32, #tpu.memory_space<vmem>>, vector<1x128xf32>
    %77 = vector.broadcast %76 : vector<1x128xf32> to vector<256x128xf32>
    %78 = arith.addf %75, %77 : vector<256x128xf32>
    %79 = vector.shape_cast %78 : vector<256x128xf32> to vector<1x256x128xf32>
    %c0_46 = arith.constant 0 : index
    %c0_47 = arith.constant 0 : index
    %c0_48 = arith.constant 0 : index
    %80 = vector.load %arg6[%c0_46, %c0_47, %c0_48] : memref<1x256x128xf32, #tpu.memory_space<vmem>>, vector<1x256x128xf32>
    tpu.vector_store %arg6[%c0_46, %c0_47, %c0_48], %79 {strides = array<i32>} : memref<1x256x128xf32, #tpu.memory_space<vmem>>, vector<1x256x128xf32>,
    %cst_49 = arith.constant dense<0.000000e+00> : vector<128xf32>
    %81 = vector.multi_reduction <add>, %78, %cst_49 [0] : vector<256x128xf32> to vector<128xf32>
    %82 = vector.shape_cast %81 : vector<128xf32> to vector<1x128xf32>
    %cst_50 = arith.constant 3.906250e-03 : f32
    %83 = vector.broadcast %cst_50 : f32 to vector<1x128xf32>
    %84 = arith.mulf %82, %83 : vector<1x128xf32>
    %c0_51 = arith.constant 0 : index
    %c0_52 = arith.constant 0 : index
    %c0_53 = arith.constant 0 : index
    %85 = vector.load %arg7[%c0_51, %c0_52, %c0_53] : memref<1x1x128xf32, #tpu.memory_space<vmem>>, vector<1x1x128xf32>
    %86 = vector.shape_cast %85 : vector<1x1x128xf32> to vector<1x128xf32>
    %87 = vector.shape_cast %82 : vector<1x128xf32> to vector<1x1x128xf32>
    tpu.vector_store %arg7[%c0_51, %c0_52, %c0_53], %87 {strides = array<i32>} : memref<1x1x128xf32, #tpu.memory_space<vmem>>, vector<1x1x128xf32>,
    %88 = vector.broadcast %84 : vector<1x128xf32> to vector<256x128xf32>
    %89 = arith.subf %78, %88 : vector<256x128xf32>
    %90 = arith.mulf %89, %89 : vector<256x128xf32>
    %cst_54 = arith.constant dense<0.000000e+00> : vector<128xf32>
    %91 = vector.multi_reduction <add>, %90, %cst_54 [0] : vector<256x128xf32> to vector<128xf32>
    %92 = vector.shape_cast %91 : vector<128xf32> to vector<1x128xf32>
    %c0_55 = arith.constant 0 : index
    %c0_56 = arith.constant 0 : index
    %c0_57 = arith.constant 0 : index
    %93 = vector.load %arg8[%c0_55, %c0_56, %c0_57] : memref<1x1x128xf32, #tpu.memory_space<vmem>>, vector<1x1x128xf32>
    %94 = vector.shape_cast %93 : vector<1x1x128xf32> to vector<1x128xf32>
    %95 = vector.shape_cast %92 : vector<1x128xf32> to vector<1x1x128xf32>
    tpu.vector_store %arg8[%c0_55, %c0_56, %c0_57], %95 {strides = array<i32>} : memref<1x1x128xf32, #tpu.memory_space<vmem>>, vector<1x1x128xf32>,
    return
  }
  func.func @transform_0(%arg0: i32) -> (i32, i32, i32) {
    %c0_i32 = arith.constant 0 : i32
    %c0_i32_0 = arith.constant 0 : i32
    %c0_i32_1 = arith.constant 0 : i32
    return %arg0, %c0_i32, %c0_i32_0 : i32, i32, i32
  }
  func.func @transform_1(%arg0: i32) -> (i32, i32) {
    %c0_i32 = arith.constant 0 : i32
    %c0_i32_0 = arith.constant 0 : i32
    %c0_i32_1 = arith.constant 0 : i32
    return %c0_i32, %c0_i32_0 : i32, i32
  }
  func.func @transform_2(%arg0: i32) -> (i32, i32) {
    %c0_i32 = arith.constant 0 : i32
    %c0_i32_0 = arith.constant 0 : i32
    %c0_i32_1 = arith.constant 0 : i32
    return %c0_i32, %c0_i32_0 : i32, i32
  }
  func.func @transform_3(%arg0: i32) -> (i32, i32) {
    %c0_i32 = arith.constant 0 : i32
    %c0_i32_0 = arith.constant 0 : i32
    %c0_i32_1 = arith.constant 0 : i32
    return %c0_i32, %c0_i32_0 : i32, i32
  }
  func.func @transform_4(%arg0: i32) -> (i32, i32) {
    %c0_i32 = arith.constant 0 : i32
    %c0_i32_0 = arith.constant 0 : i32
    %c0_i32_1 = arith.constant 0 : i32
    return %c0_i32, %c0_i32_0 : i32, i32
  }
  func.func @transform_5(%arg0: i32) -> (i32, i32, i32) {
    %c0_i32 = arith.constant 0 : i32
    %c0_i32_0 = arith.constant 0 : i32
    %c0_i32_1 = arith.constant 0 : i32
    return %arg0, %c0_i32, %c0_i32_0 : i32, i32, i32
  }
  func.func @transform_6(%arg0: i32) -> (i32, i32, i32) {
    %c0_i32 = arith.constant 0 : i32
    %c0_i32_0 = arith.constant 0 : i32
    %c0_i32_1 = arith.constant 0 : i32
    return %arg0, %c0_i32, %c0_i32_0 : i32, i32, i32
  }
  func.func @transform_7(%arg0: i32) -> (i32, i32, i32) {
    %c0_i32 = arith.constant 0 : i32
    %c0_i32_0 = arith.constant 0 : i32
    %c0_i32_1 = arith.constant 0 : i32
    return %arg0, %c0_i32, %c0_i32_0 : i32, i32, i32
  }
}

module attributes {stable_mosaic.version = 11 : i64} {
  func.func @_stage2_kernel(%arg0: i32, %arg1: memref<1x256x128xf32, #tpu.memory_space<vmem>>, %arg2: memref<1x256x4xf32, #tpu.memory_space<vmem>>, %arg3: memref<1x4xf32, #tpu.memory_space<vmem>>, %arg4: memref<1x4xf32, #tpu.memory_space<vmem>>, %arg5: memref<36x128xbf16, #tpu.memory_space<vmem>>, %arg6: memref<1x128xf32, #tpu.memory_space<vmem>>, %arg7: memref<1x256x128xf32, #tpu.memory_space<vmem>>, %arg8: memref<256x36xf32, #tpu.memory_space<vmem>>) attributes {dimension_semantics = [#tpu.dimension_semantics<parallel>], iteration_bounds = array<i64: 2>, scalar_prefetch = 0 : i64, scratch_operands = 1 : i64, tpu.core_type = #tpu.core_type<tc>, window_params = [{transform_indices = @transform_0, window_bounds = array<i64: 1, 256, 128>}, {transform_indices = @transform_1, window_bounds = array<i64: 1, 256, 4>}, {pipeline_mode = #tpu.pipeline_mode<synchronous>, transform_indices = @transform_2, window_bounds = array<i64: 1, 4>}, {pipeline_mode = #tpu.pipeline_mode<synchronous>, transform_indices = @transform_3, window_bounds = array<i64: 1, 4>}, {pipeline_mode = #tpu.pipeline_mode<synchronous>, transform_indices = @transform_4, window_bounds = array<i64: 36, 128>}, {pipeline_mode = #tpu.pipeline_mode<synchronous>, transform_indices = @transform_5, window_bounds = array<i64: 1, 128>}, {transform_indices = @transform_6, window_bounds = array<i64: 1, 256, 128>}]} {
    %c0 = arith.constant 0 : index
    %c0_0 = arith.constant 0 : index
    %c0_1 = arith.constant 0 : index
    %0 = vector.load %arg1[%c0, %c0_0, %c0_1] : memref<1x256x128xf32, #tpu.memory_space<vmem>>, vector<1x256x128xf32>
    %1 = vector.shape_cast %0 : vector<1x256x128xf32> to vector<256x128xf32>
    %2 = vector.extract_strided_slice %1 {offsets = [0, 0], sizes = [256, 4], strides = [1, 1]} : vector<256x128xf32> to vector<256x4xf32>
    %c0_2 = arith.constant 0 : index
    %c0_3 = arith.constant 0 : index
    %3 = vector.load %arg3[%c0_2, %c0_3] : memref<1x4xf32, #tpu.memory_space<vmem>>, vector<1x4xf32>
    %c0_4 = arith.constant 0 : index
    %c0_5 = arith.constant 0 : index
    %4 = vector.load %arg4[%c0_4, %c0_5] : memref<1x4xf32, #tpu.memory_space<vmem>>, vector<1x4xf32>
    %c0_6 = arith.constant 0 : index
    %c0_7 = arith.constant 0 : index
    %5 = vector.load %arg5[%c0_6, %c0_7] : memref<36x128xbf16, #tpu.memory_space<vmem>>, vector<36x128xbf16>
    %6 = vector.broadcast %3 : vector<1x4xf32> to vector<256x4xf32>
    %7 = arith.mulf %2, %6 : vector<256x4xf32>
    %8 = vector.broadcast %4 : vector<1x4xf32> to vector<256x4xf32>
    %9 = arith.addf %7, %8 : vector<256x4xf32>
    %cst = arith.constant 0.000000e+00 : f32
    %10 = vector.broadcast %cst : f32 to vector<256x4xf32>
    %11 = arith.maximumf %9, %10 : vector<256x4xf32>
    %12 = tpu.iota {dimensions = array<i32: 0>} : vector<256x1xi32>
    %c16_i32 = arith.constant 16 : i32
    %c0_i32 = arith.constant 0 : i32
    %13 = arith.cmpi eq, %c16_i32, %c0_i32 : i32
    %c1_i32 = arith.constant 1 : i32
    %14 = arith.select %13, %c1_i32, %c16_i32 : i32
    %15 = vector.broadcast %14 : i32 to vector<256x1xi32>
    %16 = arith.remsi %12, %15 : vector<256x1xi32>
    %c0_i32_8 = arith.constant 0 : i32
    %17 = vector.broadcast %c0_i32_8 : i32 to vector<256x1xi32>
    %18 = arith.cmpi ne, %16, %17 : vector<256x1xi32>
    %c0_i32_9 = arith.constant 0 : i32
    %19 = vector.broadcast %c0_i32_9 : i32 to vector<256x1xi32>
    %20 = arith.cmpi slt, %16, %19 : vector<256x1xi32>
    %c0_i32_10 = arith.constant 0 : i32
    %21 = arith.cmpi slt, %14, %c0_i32_10 : i32
    %22 = vector.broadcast %21 : i1 to vector<256x1xi1>
    %23 = vector.broadcast %22 : vector<256x1xi1> to vector<256x1xi1>
    %24 = arith.xori %20, %23 : vector<256x1xi1>
    %25 = arith.andi %24, %18 : vector<256x1xi1>
    %26 = vector.broadcast %14 : i32 to vector<256x1xi32>
    %27 = arith.addi %16, %26 : vector<256x1xi32>
    %28 = arith.select %25, %27, %16 : vector<256x1xi1>, vector<256x1xi32>
    %c15_i32 = arith.constant 15 : i32
    %29 = vector.broadcast %c15_i32 : i32 to vector<256x1xi32>
    %30 = arith.cmpi eq, %28, %29 : vector<256x1xi32>
    %cst_11 = arith.constant 0.000000e+00 : f32
    %31 = vector.shape_cast %30 : vector<256x1xi1> to vector<256x1xi1>
    %32 = vector.broadcast %31 : vector<256x1xi1> to vector<256x4xi1>
    %33 = vector.broadcast %cst_11 : f32 to vector<256x4xf32>
    %34 = arith.select %32, %33, %11 : vector<256x4xi1>, vector<256x4xf32>
    %c0_i32_12 = arith.constant 0 : i32
    %35 = vector.broadcast %c0_i32_12 : i32 to vector<256x1xi32>
    %36 = arith.cmpi eq, %28, %35 : vector<256x1xi32>
    %cst_13 = arith.constant 0.000000e+00 : f32
    %37 = vector.shape_cast %36 : vector<256x1xi1> to vector<256x1xi1>
    %38 = vector.broadcast %37 : vector<256x1xi1> to vector<256x4xi1>
    %39 = vector.broadcast %cst_13 : f32 to vector<256x4xf32>
    %40 = arith.select %38, %39, %11 : vector<256x4xi1>, vector<256x4xf32>
    %cst_14 = arith.constant 0.000000e+00 : f32
    %41 = vector.broadcast %cst_14 : f32 to vector<17x4xf32>
    %c0_15 = arith.constant 0 : index
    %c0_16 = arith.constant 0 : index
    %42 = vector.load %arg8[%c0_15, %c0_16] : memref<256x36xf32, #tpu.memory_space<vmem>>, vector<17x4xf32>
    tpu.vector_store %arg8[%c0_15, %c0_16], %41 {strides = array<i32>} : memref<256x36xf32, #tpu.memory_space<vmem>>, vector<17x4xf32>,
    %43 = vector.extract_strided_slice %34 {offsets = [0, 0], sizes = [239, 4], strides = [1, 1]} : vector<256x4xf32> to vector<239x4xf32>
    %c17 = arith.constant 17 : index
    %c0_17 = arith.constant 0 : index
    %44 = vector.load %arg8[%c17, %c0_17] : memref<256x36xf32, #tpu.memory_space<vmem>>, vector<239x4xf32>
    tpu.vector_store %arg8[%c17, %c0_17], %43 {strides = array<i32>} : memref<256x36xf32, #tpu.memory_space<vmem>>, vector<239x4xf32>,
    %cst_18 = arith.constant 0.000000e+00 : f32
    %45 = vector.broadcast %cst_18 : f32 to vector<16x4xf32>
    %c0_19 = arith.constant 0 : index
    %c4 = arith.constant 4 : index
    %46 = vector.load %arg8[%c0_19, %c4] : memref<256x36xf32, #tpu.memory_space<vmem>>, vector<16x4xf32>
    tpu.vector_store %arg8[%c0_19, %c4], %45 {strides = array<i32>} : memref<256x36xf32, #tpu.memory_space<vmem>>, vector<16x4xf32>,
    %47 = vector.extract_strided_slice %11 {offsets = [0, 0], sizes = [240, 4], strides = [1, 1]} : vector<256x4xf32> to vector<240x4xf32>
    %c16 = arith.constant 16 : index
    %c4_20 = arith.constant 4 : index
    %48 = vector.load %arg8[%c16, %c4_20] : memref<256x36xf32, #tpu.memory_space<vmem>>, vector<240x4xf32>
    tpu.vector_store %arg8[%c16, %c4_20], %47 {strides = array<i32>} : memref<256x36xf32, #tpu.memory_space<vmem>>, vector<240x4xf32>,
    %cst_21 = arith.constant 0.000000e+00 : f32
    %49 = vector.broadcast %cst_21 : f32 to vector<15x4xf32>
    %c0_22 = arith.constant 0 : index
    %c8 = arith.constant 8 : index
    %50 = vector.load %arg8[%c0_22, %c8] : memref<256x36xf32, #tpu.memory_space<vmem>>, vector<15x4xf32>
    tpu.vector_store %arg8[%c0_22, %c8], %49 {strides = array<i32>} : memref<256x36xf32, #tpu.memory_space<vmem>>, vector<15x4xf32>,
    %51 = vector.extract_strided_slice %40 {offsets = [0, 0], sizes = [241, 4], strides = [1, 1]} : vector<256x4xf32> to vector<241x4xf32>
    %c15 = arith.constant 15 : index
    %c8_23 = arith.constant 8 : index
    %52 = vector.load %arg8[%c15, %c8_23] : memref<256x36xf32, #tpu.memory_space<vmem>>, vector<241x4xf32>
    tpu.vector_store %arg8[%c15, %c8_23], %51 {strides = array<i32>} : memref<256x36xf32, #tpu.memory_space<vmem>>, vector<241x4xf32>,
    %cst_24 = arith.constant 0.000000e+00 : f32
    %53 = vector.broadcast %cst_24 : f32 to vector<1x4xf32>
    %c0_25 = arith.constant 0 : index
    %c12 = arith.constant 12 : index
    %54 = vector.load %arg8[%c0_25, %c12] : memref<256x36xf32, #tpu.memory_space<vmem>>, vector<1x4xf32>
    tpu.vector_store %arg8[%c0_25, %c12], %53 {strides = array<i32>} : memref<256x36xf32, #tpu.memory_space<vmem>>, vector<1x4xf32>,
    %55 = vector.extract_strided_slice %34 {offsets = [0, 0], sizes = [255, 4], strides = [1, 1]} : vector<256x4xf32> to vector<255x4xf32>
    %c1 = arith.constant 1 : index
    %c12_26 = arith.constant 12 : index
    %56 = vector.load %arg8[%c1, %c12_26] : memref<256x36xf32, #tpu.memory_space<vmem>>, vector<255x4xf32>
    tpu.vector_store %arg8[%c1, %c12_26], %55 {strides = array<i32>} : memref<256x36xf32, #tpu.memory_space<vmem>>, vector<255x4xf32>,
    %c0_27 = arith.constant 0 : index
    %c16_28 = arith.constant 16 : index
    %57 = vector.load %arg8[%c0_27, %c16_28] : memref<256x36xf32, #tpu.memory_space<vmem>>, vector<256x4xf32>
    tpu.vector_store %arg8[%c0_27, %c16_28], %11 {strides = array<i32>} : memref<256x36xf32, #tpu.memory_space<vmem>>, vector<256x4xf32>,
    %cst_29 = arith.constant 0.000000e+00 : f32
    %58 = vector.broadcast %cst_29 : f32 to vector<1x4xf32>
    %c255 = arith.constant 255 : index
    %c20 = arith.constant 20 : index
    %59 = vector.load %arg8[%c255, %c20] : memref<256x36xf32, #tpu.memory_space<vmem>>, vector<1x4xf32>
    tpu.vector_store %arg8[%c255, %c20], %58 {strides = array<i32>} : memref<256x36xf32, #tpu.memory_space<vmem>>, vector<1x4xf32>,
    %60 = vector.extract_strided_slice %40 {offsets = [1, 0], sizes = [255, 4], strides = [1, 1]} : vector<256x4xf32> to vector<255x4xf32>
    %c0_30 = arith.constant 0 : index
    %c20_31 = arith.constant 20 : index
    %61 = vector.load %arg8[%c0_30, %c20_31] : memref<256x36xf32, #tpu.memory_space<vmem>>, vector<255x4xf32>
    tpu.vector_store %arg8[%c0_30, %c20_31], %60 {strides = array<i32>} : memref<256x36xf32, #tpu.memory_space<vmem>>, vector<255x4xf32>,
    %cst_32 = arith.constant 0.000000e+00 : f32
    %62 = vector.broadcast %cst_32 : f32 to vector<15x4xf32>
    %c241 = arith.constant 241 : index
    %c24 = arith.constant 24 : index
    %63 = vector.load %arg8[%c241, %c24] : memref<256x36xf32, #tpu.memory_space<vmem>>, vector<15x4xf32>
    tpu.vector_store %arg8[%c241, %c24], %62 {strides = array<i32>} : memref<256x36xf32, #tpu.memory_space<vmem>>, vector<15x4xf32>,
    %64 = vector.extract_strided_slice %34 {offsets = [15, 0], sizes = [241, 4], strides = [1, 1]} : vector<256x4xf32> to vector<241x4xf32>
    %c0_33 = arith.constant 0 : index
    %c24_34 = arith.constant 24 : index
    %65 = vector.load %arg8[%c0_33, %c24_34] : memref<256x36xf32, #tpu.memory_space<vmem>>, vector<241x4xf32>
    tpu.vector_store %arg8[%c0_33, %c24_34], %64 {strides = array<i32>} : memref<256x36xf32, #tpu.memory_space<vmem>>, vector<241x4xf32>,
    %cst_35 = arith.constant 0.000000e+00 : f32
    %66 = vector.broadcast %cst_35 : f32 to vector<16x4xf32>
    %c240 = arith.constant 240 : index
    %c28 = arith.constant 28 : index
    %67 = vector.load %arg8[%c240, %c28] : memref<256x36xf32, #tpu.memory_space<vmem>>, vector<16x4xf32>
    tpu.vector_store %arg8[%c240, %c28], %66 {strides = array<i32>} : memref<256x36xf32, #tpu.memory_space<vmem>>, vector<16x4xf32>,
    %68 = vector.extract_strided_slice %11 {offsets = [16, 0], sizes = [240, 4], strides = [1, 1]} : vector<256x4xf32> to vector<240x4xf32>
    %c0_36 = arith.constant 0 : index
    %c28_37 = arith.constant 28 : index
    %69 = vector.load %arg8[%c0_36, %c28_37] : memref<256x36xf32, #tpu.memory_space<vmem>>, vector<240x4xf32>
    tpu.vector_store %arg8[%c0_36, %c28_37], %68 {strides = array<i32>} : memref<256x36xf32, #tpu.memory_space<vmem>>, vector<240x4xf32>,
    %cst_38 = arith.constant 0.000000e+00 : f32
    %70 = vector.broadcast %cst_38 : f32 to vector<17x4xf32>
    %c239 = arith.constant 239 : index
    %c32 = arith.constant 32 : index
    %71 = vector.load %arg8[%c239, %c32] : memref<256x36xf32, #tpu.memory_space<vmem>>, vector<17x4xf32>
    tpu.vector_store %arg8[%c239, %c32], %70 {strides = array<i32>} : memref<256x36xf32, #tpu.memory_space<vmem>>, vector<17x4xf32>,
    %72 = vector.extract_strided_slice %40 {offsets = [17, 0], sizes = [239, 4], strides = [1, 1]} : vector<256x4xf32> to vector<239x4xf32>
    %c0_39 = arith.constant 0 : index
    %c32_40 = arith.constant 32 : index
    %73 = vector.load %arg8[%c0_39, %c32_40] : memref<256x36xf32, #tpu.memory_space<vmem>>, vector<239x4xf32>
    tpu.vector_store %arg8[%c0_39, %c32_40], %72 {strides = array<i32>} : memref<256x36xf32, #tpu.memory_space<vmem>>, vector<239x4xf32>,
    %c0_41 = arith.constant 0 : index
    %c0_42 = arith.constant 0 : index
    %74 = vector.load %arg8[%c0_41, %c0_42] : memref<256x36xf32, #tpu.memory_space<vmem>>, vector<256x36xf32>
    %75 = arith.truncf %74 : vector<256x36xf32> to vector<256x36xbf16>
    %cst_43 = arith.constant dense<0.000000e+00> : vector<256x128xf32>
    %76 = tpu.matmul %75, %5, %cst_43 {dimension_numbers = #tpu.dot_dimension_numbers<[1], [0], [0], [1], [0, 0, 1, 1], [], []>} : vector<256x36xbf16>, vector<36x128xbf16>, vector<256x128xf32> -> vector<256x128xf32>
    %c0_44 = arith.constant 0 : index
    %c0_45 = arith.constant 0 : index
    %c0_46 = arith.constant 0 : index
    %77 = vector.load %arg2[%c0_44, %c0_45, %c0_46] : memref<1x256x4xf32, #tpu.memory_space<vmem>>, vector<1x256x4xf32>
    %78 = vector.shape_cast %77 : vector<1x256x4xf32> to vector<256x4xf32>
    %cst_47 = arith.constant 0.000000e+00 : f32
    %79 = vector.broadcast %cst_47 : f32 to vector<256x124xf32>
    %80 = tpu.concatenate %78, %79 in 1 : vector<256x4xf32>, vector<256x124xf32> -> vector<256x128xf32>
    %c0_48 = arith.constant 0 : index
    %c0_49 = arith.constant 0 : index
    %81 = vector.load %arg6[%c0_48, %c0_49] : memref<1x128xf32, #tpu.memory_space<vmem>>, vector<1x128xf32>
    %82 = vector.broadcast %81 : vector<1x128xf32> to vector<256x128xf32>
    %83 = arith.addf %76, %82 : vector<256x128xf32>
    %84 = arith.addf %83, %80 : vector<256x128xf32>
    %85 = vector.shape_cast %84 : vector<256x128xf32> to vector<1x256x128xf32>
    %c0_50 = arith.constant 0 : index
    %c0_51 = arith.constant 0 : index
    %c0_52 = arith.constant 0 : index
    %86 = vector.load %arg7[%c0_50, %c0_51, %c0_52] : memref<1x256x128xf32, #tpu.memory_space<vmem>>, vector<1x256x128xf32>
    tpu.vector_store %arg7[%c0_50, %c0_51, %c0_52], %85 {strides = array<i32>} : memref<1x256x128xf32, #tpu.memory_space<vmem>>, vector<1x256x128xf32>,
    return
  }
  func.func @transform_0(%arg0: i32) -> (i32, i32, i32) {
    %c0_i32 = arith.constant 0 : i32
    %c0_i32_0 = arith.constant 0 : i32
    %c0_i32_1 = arith.constant 0 : i32
    return %arg0, %c0_i32, %c0_i32_0 : i32, i32, i32
  }
  func.func @transform_1(%arg0: i32) -> (i32, i32, i32) {
    %c0_i32 = arith.constant 0 : i32
    %c0_i32_0 = arith.constant 0 : i32
    %c0_i32_1 = arith.constant 0 : i32
    return %arg0, %c0_i32, %c0_i32_0 : i32, i32, i32
  }
  func.func @transform_2(%arg0: i32) -> (i32, i32) {
    %c0_i32 = arith.constant 0 : i32
    %c0_i32_0 = arith.constant 0 : i32
    %c0_i32_1 = arith.constant 0 : i32
    return %c0_i32, %c0_i32_0 : i32, i32
  }
  func.func @transform_3(%arg0: i32) -> (i32, i32) {
    %c0_i32 = arith.constant 0 : i32
    %c0_i32_0 = arith.constant 0 : i32
    %c0_i32_1 = arith.constant 0 : i32
    return %c0_i32, %c0_i32_0 : i32, i32
  }
  func.func @transform_4(%arg0: i32) -> (i32, i32) {
    %c0_i32 = arith.constant 0 : i32
    %c0_i32_0 = arith.constant 0 : i32
    %c0_i32_1 = arith.constant 0 : i32
    return %c0_i32, %c0_i32_0 : i32, i32
  }
  func.func @transform_5(%arg0: i32) -> (i32, i32) {
    %c0_i32 = arith.constant 0 : i32
    %c0_i32_0 = arith.constant 0 : i32
    %c0_i32_1 = arith.constant 0 : i32
    return %c0_i32, %c0_i32_0 : i32, i32
  }
  func.func @transform_6(%arg0: i32) -> (i32, i32, i32) {
    %c0_i32 = arith.constant 0 : i32
    %c0_i32_0 = arith.constant 0 : i32
    %c0_i32_1 = arith.constant 0 : i32
    return %arg0, %c0_i32, %c0_i32_0 : i32, i32, i32
  }
}

</mosaic_0001>

<llo_original>
// kernel: basic_block_curve_forward.2
$region0: #{basic_block_curve_forward.2}
  #allocation0 [shape = 'u32[]', space=smem, size = 0x4, offset = 0x4, fixed_abs, tag = 'smem constant byte address 0x4 - core index']
  #allocation1 [shape = 'u32[144,128]{1,0:T(1,128)}', space=vmem, size = 0x12000, scoped, tag = 'internal scratch']
  #allocation2 [shape = 'f32[256,36]{1,0:T(8,128)}', space=vmem, size = 0x20000, scoped, tag = 'scratch operand']
  %s0 = inlined_call_operand.vmem [shape: f32[2,256,4], index: 0, kind: input, shape index: {}]
  %s1 = inlined_call_operand.vmem [shape: f32[1,4], index: 1, kind: input, shape index: {}]
  %s2 = inlined_call_operand.vmem [shape: f32[1,4], index: 2, kind: input, shape index: {}]
  %s3 = inlined_call_operand.vmem [shape: bf16[36,128], index: 3, kind: input, shape index: {}]
  %s4 = inlined_call_operand.vmem [shape: f32[1,128], index: 4, kind: input, shape index: {}]
  %s5 = inlined_call_operand.vmem [shape: f32[2,256,128], index: 5, kind: output, shape index: {0}]
  %s6 = inlined_call_operand.vmem [shape: f32[2,1,128], index: 6, kind: output, shape index: {1}]
  %s7 = inlined_call_operand.vmem [shape: f32[2,1,128], index: 7, kind: output, shape index: {2}]
  %8 = xla_tuple %s5, %s6, %s7
  %s9 = sld [smem:[#allocation0]]
  $region69: #{basic_block_curve_forward.2} parent=0
    _
  %s11 = ssub.s32 1, %s9
  %s12 = scalar_select 0, %s11, %s9
  loop: start=0, step=1, limit=4
  $region2: #{basic_block_curve_forward.2} parent=0 // loop_pre_header
    _
  $region3: #{basic_block_curve_forward.2} parent=0 // loop_header
    %s14 = sphi 0, %s18
    %p15 = scmp.ge.s32.totalorder %s14, 4
    %s24 = sphi 0, %s26
    %s27 = sphi 0, %s24
    %s28 = sphi 0, %s27
    %s44 = sphi 0, %s28
    %s48 = sphi 0, %s48
    %s50 = sphi 0, %s48
    %s51 = sphi 0, %s50
    %s65 = sphi 0, %s51
    %s69 = sphi 0, %s69
    %s71 = sphi 0, %s69
    %s72 = sphi 0, %s71
    %s86 = sphi 0, %s72
    %s90 = sphi 0, %s90
    %s92 = sphi 0, %s90
    %s93 = sphi 0, %s92
    %s107 = sphi 0, %s93
    %s111 = sphi 0, %s111
    %s113 = sphi 0, %s111
    %s114 = sphi 0, %s113
    %s128 = sphi 0, %s114
    %s134 = sphi 0, %s136
    %s137 = sphi 0, %s134
    %s138 = sphi 0, %s137
    %s154 = sphi 0, %s138
    %s160 = sphi 0, %s162
    %s163 = sphi 0, %s160
    %s164 = sphi 0, %s163
    %s180 = sphi 0, %s164
    %s186 = sphi 0, %s188
    %s189 = sphi 0, %s186
    %s190 = sphi 0, %s189
    %s206 = sphi 0, %s190
  $region4: #{basic_block_curve_forward.2} parent=0 // loop_header_branch
    %17 = sbr.rel (%p15) target = $region8
  $region5: #{basic_block_curve_forward.2} parent=0 // loop_body
    %s19 = ssub.s32 %s14, 1
    %s20 = ssub.s32 %s14, 2
    %s21 = sadd.s32 %s14, 1
    %s22 = ssub.s32 %s14, %s21
    %p23 = scmp.eq.s32.totalorder %s22, 0
    %s25 = sadd.s32 %s24, 1
    %s26 = scalar_select %p23, %s24, %s25
    %p29 = pneg %p23
    %p30 = scmp.eq.s32.totalorder %s14, 1
    %p31 = por %p29, %p30
    %p32 = scmp.ne.s32.totalorder %s24, %s27
    %p33 = scmp.eq.s32.totalorder %s14, 0
    %p34 = por %p32, %p33
    %p35 = scmp.ne.s32.totalorder %s24, %s27
    %p36 = scmp.eq.s32.totalorder %s19, 1
    %p37 = por %p35, %p36
    %p38 = scmp.ne.s32.totalorder %s27, %s28
    %p39 = scmp.eq.s32.totalorder %s19, 0
    %p40 = por %p38, %p39
    %p41 = scmp.ne.s32.totalorder %s27, %s28
    %p42 = scmp.eq.s32.totalorder %s20, 1
    %p43 = por %p41, %p42
    %p45 = scmp.ne.s32.totalorder %s28, %s44
    %p46 = scmp.eq.s32.totalorder %s20, 0
    %p47 = por %p45, %p46
    %s49 = sadd.s32 %s48, 1
    %p52 = scmp.eq.s32.totalorder %s14, 1
    %p53 = scmp.ne.s32.totalorder %s48, %s50
    %p54 = scmp.eq.s32.totalorder %s14, 0
    %p55 = por %p53, %p54
    %p56 = scmp.ne.s32.totalorder %s48, %s50
    %p57 = scmp.eq.s32.totalorder %s19, 1
    %p58 = por %p56, %p57
    %p59 = scmp.ne.s32.totalorder %s50, %s51
    %p60 = scmp.eq.s32.totalorder %s19, 0
    %p61 = por %p59, %p60
    %p62 = scmp.ne.s32.totalorder %s50, %s51
    %p63 = scmp.eq.s32.totalorder %s20, 1
    %p64 = por %p62, %p63
    %p66 = scmp.ne.s32.totalorder %s51, %s65
    %p67 = scmp.eq.s32.totalorder %s20, 0
    %p68 = por %p66, %p67
    %s70 = sadd.s32 %s69, 1
    %p73 = scmp.eq.s32.totalorder %s14, 1
    %p74 = scmp.ne.s32.totalorder %s69, %s71
    %p75 = scmp.eq.s32.totalorder %s14, 0
    %p76 = por %p74, %p75
    %p77 = scmp.ne.s32.totalorder %s69, %s71
    %p78 = scmp.eq.s32.totalorder %s19, 1
    %p79 = por %p77, %p78
    %p80 = scmp.ne.s32.totalorder %s71, %s72
    %p81 = scmp.eq.s32.totalorder %s19, 0
    %p82 = por %p80, %p81
    %p83 = scmp.ne.s32.totalorder %s71, %s72
    %p84 = scmp.eq.s32.totalorder %s20, 1
    %p85 = por %p83, %p84
    %p87 = scmp.ne.s32.totalorder %s72, %s86
    %p88 = scmp.eq.s32.totalorder %s20, 0
    %p89 = por %p87, %p88
    %s91 = sadd.s32 %s90, 1
    %p94 = scmp.eq.s32.totalorder %s14, 1
    %p95 = scmp.ne.s32.totalorder %s90, %s92
    %p96 = scmp.eq.s32.totalorder %s14, 0
    %p97 = por %p95, %p96
    %p98 = scmp.ne.s32.totalorder %s90, %s92
    %p99 = scmp.eq.s32.totalorder %s19, 1
    %p100 = por %p98, %p99
    %p101 = scmp.ne.s32.totalorder %s92, %s93
    %p102 = scmp.eq.s32.totalorder %s19, 0
    %p103 = por %p101, %p102
    %p104 = scmp.ne.s32.totalorder %s92, %s93
    %p105 = scmp.eq.s32.totalorder %s20, 1
    %p106 = por %p104, %p105
    %p108 = scmp.ne.s32.totalorder %s93, %s107
    %p109 = scmp.eq.s32.totalorder %s20, 0
    %p110 = por %p108, %p109
    %s112 = sadd.s32 %s111, 1
    %p115 = scmp.eq.s32.totalorder %s14, 1
    %p116 = scmp.ne.s32.totalorder %s111, %s113
    %p117 = scmp.eq.s32.totalorder %s14, 0
    %p118 = por %p116, %p117
    %p119 = scmp.ne.s32.totalorder %s111, %s113
    %p120 = scmp.eq.s32.totalorder %s19, 1
    %p121 = por %p119, %p120
    %p122 = scmp.ne.s32.totalorder %s113, %s114
    %p123 = scmp.eq.s32.totalorder %s19, 0
    %p124 = por %p122, %p123
    %p125 = scmp.ne.s32.totalorder %s113, %s114
    %p126 = scmp.eq.s32.totalorder %s20, 1
    %p127 = por %p125, %p126
    %p129 = scmp.ne.s32.totalorder %s114, %s128
    %p130 = scmp.eq.s32.totalorder %s20, 0
    %p131 = por %p129, %p130
    %s132 = ssub.s32 %s14, %s21
    %p133 = scmp.eq.s32.totalorder %s132, 0
    %s135 = sadd.s32 %s134, 1
    %s136 = scalar_select %p133, %s134, %s135
    %p139 = pneg %p133
    %p140 = scmp.eq.s32.totalorder %s14, 1
    %p141 = por %p139, %p140
    %p142 = scmp.ne.s32.totalorder %s134, %s137
    %p143 = scmp.eq.s32.totalorder %s14, 0
    %p144 = por %p142, %p143
    %p145 = scmp.ne.s32.totalorder %s134, %s137
    %p146 = scmp.eq.s32.totalorder %s19, 1
    %p147 = por %p145, %p146
    %p148 = scmp.ne.s32.totalorder %s137, %s138
    %p149 = scmp.eq.s32.totalorder %s19, 0
    %p150 = por %p148, %p149
    %p151 = scmp.ne.s32.totalorder %s137, %s138
    %p152 = scmp.eq.s32.totalorder %s20, 1
    %p153 = por %p151, %p152
    %p155 = scmp.ne.s32.totalorder %s138, %s154
    %p156 = scmp.eq.s32.totalorder %s20, 0
    %p157 = por %p155, %p156
    %s158 = ssub.s32 %s14, %s21
    %p159 = scmp.eq.s32.totalorder %s158, 0
    %s161 = sadd.s32 %s160, 1
    %s162 = scalar_select %p159, %s160, %s161
    %p165 = pneg %p159
    %p166 = scmp.eq.s32.totalorder %s14, 1
    %p167 = por %p165, %p166
    %p168 = scmp.ne.s32.totalorder %s160, %s163
    %p169 = scmp.eq.s32.totalorder %s14, 0
    %p170 = por %p168, %p169
    %p171 = scmp.ne.s32.totalorder %s160, %s163
    %p172 = scmp.eq.s32.totalorder %s19, 1
    %p173 = por %p171, %p172
    %p174 = scmp.ne.s32.totalorder %s163, %s164
    %p175 = scmp.eq.s32.totalorder %s19, 0
    %p176 = por %p174, %p175
    %p177 = scmp.ne.s32.totalorder %s163, %s164
    %p178 = scmp.eq.s32.totalorder %s20, 1
    %p179 = por %p177, %p178
    %p181 = scmp.ne.s32.totalorder %s164, %s180
    %p182 = scmp.eq.s32.totalorder %s20, 0
    %p183 = por %p181, %p182
    %s184 = ssub.s32 %s14, %s21
    %p185 = scmp.eq.s32.totalorder %s184, 0
    %s187 = sadd.s32 %s186, 1
    %s188 = scalar_select %p185, %s186, %s187
    %p191 = pneg %p185
    %p192 = scmp.eq.s32.totalorder %s14, 1
    %p193 = por %p191, %p192
    %p194 = scmp.ne.s32.totalorder %s186, %s189
    %p195 = scmp.eq.s32.totalorder %s14, 0
    %p196 = por %p194, %p195
    %p197 = scmp.ne.s32.totalorder %s186, %s189
    %p198 = scmp.eq.s32.totalorder %s19, 1
    %p199 = por %p197, %p198
    %p200 = scmp.ne.s32.totalorder %s189, %s190
    %p201 = scmp.eq.s32.totalorder %s19, 0
    %p202 = por %p200, %p201
    %p203 = scmp.ne.s32.totalorder %s189, %s190
    %p204 = scmp.eq.s32.totalorder %s20, 1
    %p205 = por %p203, %p204
    %p207 = scmp.ne.s32.totalorder %s190, %s206
    %p208 = scmp.eq.s32.totalorder %s20, 0
    %p209 = por %p207, %p208
    %p210 = scmp.le.s32.totalorder 1, %s14
    %p211 = scmp.lt.s32.totalorder %s14, 3
    %p212 = pnand %p210, %p211
    %p213 = pneg %p212
    // Predicated region
    $region9: #{basic_block_curve_forward.2} parent=5 // pred_check
      _
    $region10: #{basic_block_curve_forward.2} parent=5 // pred_check_branch
      %215 = sbr.rel (%p212) target = $region12
    $region11: #{basic_block_curve_forward.2} parent=5 // pred_region
      %s216 = ssub.s32 %s14, 1
      // Predicated region
      $region13: #{basic_block_curve_forward.2} parent=11 // pred_check
        %p217 = pneg %p61
      $region14: #{basic_block_curve_forward.2} parent=11 // pred_check_branch
        %219 = sbr.rel (%p217) target = $region16
      $region15: #{basic_block_curve_forward.2} parent=11 // pred_region
        _
      $region16: #{basic_block_curve_forward.2} parent=11 // pred_fallthru
        _
      // Predicated region
      $region17: #{basic_block_curve_forward.2} parent=11 // pred_check
        %p220 = pneg %p82
      $region18: #{basic_block_curve_forward.2} parent=11 // pred_check_branch
        %222 = sbr.rel (%p220) target = $region20
      $region19: #{basic_block_curve_forward.2} parent=11 // pred_region
        _
      $region20: #{basic_block_curve_forward.2} parent=11 // pred_fallthru
        _
      // Predicated region
      $region21: #{basic_block_curve_forward.2} parent=11 // pred_check
        %p223 = pneg %p103
      $region22: #{basic_block_curve_forward.2} parent=11 // pred_check_branch
        %225 = sbr.rel (%p223) target = $region24
      $region23: #{basic_block_curve_forward.2} parent=11 // pred_region
        _
      $region24: #{basic_block_curve_forward.2} parent=11 // pred_fallthru
        _
      // Predicated region
      $region25: #{basic_block_curve_forward.2} parent=11 // pred_check
        %p226 = pneg %p124
      $region26: #{basic_block_curve_forward.2} parent=11 // pred_check_branch
        %228 = sbr.rel (%p226) target = $region28
      $region27: #{basic_block_curve_forward.2} parent=11 // pred_region
        _
      $region28: #{basic_block_curve_forward.2} parent=11 // pred_fallthru
        _
    $region12: #{basic_block_curve_forward.2} parent=5 // pred_fallthru
      _
    %p229 = scmp.lt.s32.totalorder %s14, 2
    // Predicated region
    $region29: #{basic_block_curve_forward.2} parent=5 // pred_check
      %p230 = pneg %p229
    $region30: #{basic_block_curve_forward.2} parent=5 // pred_check_branch
      %232 = sbr.rel (%p230) target = $region32
    $region31: #{basic_block_curve_forward.2} parent=5 // pred_region
      // Predicated region
      $region33: #{basic_block_curve_forward.2} parent=31 // pred_check
        %p233 = pneg %p34
      $region34: #{basic_block_curve_forward.2} parent=31 // pred_check_branch
        %235 = sbr.rel (%p233) target = $region36
      $region35: #{basic_block_curve_forward.2} parent=31 // pred_region
        %p236 = scmp.lt.s32.totalorder %s14, 1
        %s237 = scalar_select %p236, %s14, 1
        %s238 = smul.addr %s237, 32
        %s239 = smul.addr %s238, 8
        %s240 = scalar_lea.vmem %s0, %s239
      $region36: #{basic_block_curve_forward.2} parent=31 // pred_fallthru
        _
    $region32: #{basic_block_curve_forward.2} parent=5 // pred_fallthru
      _
    %p241 = scmp.le.s32.totalorder 1, %s14
    %p242 = scmp.lt.s32.totalorder %s14, 3
    %p243 = pnand %p241, %p242
    %p244 = pneg %p243
    // Predicated region
    $region37: #{basic_block_curve_forward.2} parent=5 // pred_check
      _
    $region38: #{basic_block_curve_forward.2} parent=5 // pred_check_branch
      %246 = sbr.rel (%p243) target = $region40
    $region39: #{basic_block_curve_forward.2} parent=5 // pred_region
      %s247 = ssub.s32 %s14, 1
      %p248 = scmp.lt.s32.totalorder %s19, 1
      %s249 = scalar_select %p248, %s19, 1
      %s250 = smul.addr %s249, 32
      %s251 = smul.addr %s250, 8
      %s252 = scalar_lea.vmem %s0, %s251
      %p253 = pneg %p40
      %p254 = pneg %p37
      %p255 = pneg %p61
      %p256 = pneg %p58
      %p257 = pneg %p82
      %p258 = pneg %p79
      %p259 = pneg %p103
      %p260 = pneg %p100
      %p261 = pneg %p124
      %p262 = pneg %p121
      %p263 = pneg %p150
      %p264 = pneg %p147
      %p265 = scmp.lt.s32.totalorder %s19, 1
      %s266 = scalar_select %p265, %s19, 1
      %s267 = smul.addr %s266, 32
      %s268 = smul.addr %s267, 8
      %s269 = scalar_lea.vmem %s5, %s268
      %p270 = pneg %p176
      %p271 = pneg %p173
      %p272 = scmp.lt.s32.totalorder %s19, 1
      %s273 = scalar_select %p272, %s19, 1
      %s274 = scalar_lea.vmem %s6, %s273
      %p275 = pneg %p202
      %p276 = pneg %p199
      %p277 = scmp.lt.s32.totalorder %s19, 1
      %s278 = scalar_select %p277, %s19, 1
      %s279 = scalar_lea.vmem %s7, %s278
      %p280 = scmp.lt.s32.totalorder %s19, 1
      %s281 = scalar_select %p280, %s19, 1
      %s282 = smul.addr %s281, 32
      %s283 = smul.addr %s282, 8
      %s284 = scalar_lea.vmem %s0, %s283
      %p285 = scmp.lt.s32.totalorder %s19, 1
      %s286 = scalar_select %p285, %s19, 1
      %s287 = smul.addr %s286, 32
      %s288 = smul.addr %s287, 8
      %s289 = scalar_lea.vmem %s5, %s288
      %p290 = scmp.lt.s32.totalorder %s19, 1
      %s291 = scalar_select %p290, %s19, 1
      %s292 = scalar_lea.vmem %s6, %s291
      %p293 = scmp.lt.s32.totalorder %s19, 1
      %s294 = scalar_select %p293, %s19, 1
      %s295 = scalar_lea.vmem %s7, %s294
      %v297 = vld [vmem:[%s284] sm:$0xff]
      %v298 = vld [vmem:[%s284 + $0x8] sm:$0xff]
      %v299 = vld [vmem:[%s284 + $0x10] sm:$0xff]
      %v300 = vld [vmem:[%s284 + $0x18] sm:$0xff]
      %v301 = vld [vmem:[%s284 + $0x20] sm:$0xff]
      %v302 = vld [vmem:[%s284 + $0x28] sm:$0xff]
      %v303 = vld [vmem:[%s284 + $0x30] sm:$0xff]
      %v304 = vld [vmem:[%s284 + $0x38] sm:$0xff]
      %v305 = vld [vmem:[%s284 + $0x40] sm:$0xff]
      %v306 = vld [vmem:[%s284 + $0x48] sm:$0xff]
      %v307 = vld [vmem:[%s284 + $0x50] sm:$0xff]
      %v308 = vld [vmem:[%s284 + $0x58] sm:$0xff]
      %v309 = vld [vmem:[%s284 + $0x60] sm:$0xff]
      %v310 = vld [vmem:[%s284 + $0x68] sm:$0xff]
      %v311 = vld [vmem:[%s284 + $0x70] sm:$0xff]
      %v312 = vld [vmem:[%s284 + $0x78] sm:$0xff]
      %v313 = vld [vmem:[%s284 + $0x80] sm:$0xff]
      %v314 = vld [vmem:[%s284 + $0x88] sm:$0xff]
      %v315 = vld [vmem:[%s284 + $0x90] sm:$0xff]
      %v316 = vld [vmem:[%s284 + $0x98] sm:$0xff]
      %v317 = vld [vmem:[%s284 + $0xa0] sm:$0xff]
      %v318 = vld [vmem:[%s284 + $0xa8] sm:$0xff]
      %v319 = vld [vmem:[%s284 + $0xb0] sm:$0xff]
      %v320 = vld [vmem:[%s284 + $0xb8] sm:$0xff]
      %v321 = vld [vmem:[%s284 + $0xc0] sm:$0xff]
      %v322 = vld [vmem:[%s284 + $0xc8] sm:$0xff]
      %v323 = vld [vmem:[%s284 + $0xd0] sm:$0xff]
      %v324 = vld [vmem:[%s284 + $0xd8] sm:$0xff]
      %v325 = vld [vmem:[%s284 + $0xe0] sm:$0xff]
      %v326 = vld [vmem:[%s284 + $0xe8] sm:$0xff]
      %v327 = vld [vmem:[%s284 + $0xf0] sm:$0xff]
      %v328 = vld [vmem:[%s284 + $0xf8] sm:$0xff]
      %v329 = vld [vmem:[%s1] sm:$0x1]
      %v330 = vld [vmem:[%s2] sm:$0x1]
      %v331 = vld [vmem:[%s3] sm:$0xf]
      %v332 = vld [vmem:[%s3 + $0x4] sm:$0xf]
      %v333 = vld [vmem:[%s3 + $0x8] sm:$0xf]
      %v334 = vld [vmem:[%s3 + $0xc] sm:$0xf]
      %v335 = vld [vmem:[%s3 + $0x10] sm:$0x3]
      %v337 = vlaneseq
      %v338 = vshrl.u32 %v337, 7
      %v339 = vsub.s32 0, %v338
      %v340 = vrot.slane %v329, %v339
      %v342 = vmul.f32 %v297, %v340
      %v343 = vmul.f32 %v298, %v340
      %v344 = vmul.f32 %v299, %v340
      %v345 = vmul.f32 %v300, %v340
      %v346 = vmul.f32 %v301, %v340
      %v347 = vmul.f32 %v302, %v340
      %v348 = vmul.f32 %v303, %v340
      %v349 = vmul.f32 %v304, %v340
      %v350 = vmul.f32 %v305, %v340
      %v351 = vmul.f32 %v306, %v340
      %v352 = vmul.f32 %v307, %v340
      %v353 = vmul.f32 %v308, %v340
      %v354 = vmul.f32 %v309, %v340
      %v355 = vmul.f32 %v310, %v340
      %v356 = vmul.f32 %v311, %v340
      %v357 = vmul.f32 %v312, %v340
      %v358 = vmul.f32 %v313, %v340
      %v359 = vmul.f32 %v314, %v340
      %v360 = vmul.f32 %v315, %v340
      %v361 = vmul.f32 %v316, %v340
      %v362 = vmul.f32 %v317, %v340
      %v363 = vmul.f32 %v318, %v340
      %v364 = vmul.f32 %v319, %v340
      %v365 = vmul.f32 %v320, %v340
      %v366 = vmul.f32 %v321, %v340
      %v367 = vmul.f32 %v322, %v340
      %v368 = vmul.f32 %v323, %v340
      %v369 = vmul.f32 %v324, %v340
      %v370 = vmul.f32 %v325, %v340
      %v371 = vmul.f32 %v326, %v340
      %v372 = vmul.f32 %v327, %v340
      %v373 = vmul.f32 %v328, %v340
      %v375 = vlaneseq
      %v376 = vshrl.u32 %v375, 7
      %v377 = vsub.s32 0, %v376
      %v378 = vrot.slane %v330, %v377
      %v380 = vadd.f32 %v342, %v378
      %v381 = vadd.f32 %v343, %v378
      %v382 = vadd.f32 %v344, %v378
      %v383 = vadd.f32 %v345, %v378
      %v384 = vadd.f32 %v346, %v378
      %v385 = vadd.f32 %v347, %v378
      %v386 = vadd.f32 %v348, %v378
      %v387 = vadd.f32 %v349, %v378
      %v388 = vadd.f32 %v350, %v378
      %v389 = vadd.f32 %v351, %v378
      %v390 = vadd.f32 %v352, %v378
      %v391 = vadd.f32 %v353, %v378
      %v392 = vadd.f32 %v354, %v378
      %v393 = vadd.f32 %v355, %v378
      %v394 = vadd.f32 %v356, %v378
      %v395 = vadd.f32 %v357, %v378
      %v396 = vadd.f32 %v358, %v378
      %v397 = vadd.f32 %v359, %v378
      %v398 = vadd.f32 %v360, %v378
      %v399 = vadd.f32 %v361, %v378
      %v400 = vadd.f32 %v362, %v378
      %v401 = vadd.f32 %v363, %v378
      %v402 = vadd.f32 %v364, %v378
      %v403 = vadd.f32 %v365, %v378
      %v404 = vadd.f32 %v366, %v378
      %v405 = vadd.f32 %v367, %v378
      %v406 = vadd.f32 %v368, %v378
      %v407 = vadd.f32 %v369, %v378
      %v408 = vadd.f32 %v370, %v378
      %v409 = vadd.f32 %v371, %v378
      %v410 = vadd.f32 %v372, %v378
      %v411 = vadd.f32 %v373, %v378
      %v412 = vmax.f32 %v380, 0.0
      %v413 = vmax.f32 %v381, 0.0
      %v414 = vmax.f32 %v382, 0.0
      %v415 = vmax.f32 %v383, 0.0
      %v416 = vmax.f32 %v384, 0.0
      %v417 = vmax.f32 %v385, 0.0
      %v418 = vmax.f32 %v386, 0.0
      %v419 = vmax.f32 %v387, 0.0
      %v420 = vmax.f32 %v388, 0.0
      %v421 = vmax.f32 %v389, 0.0
      %v422 = vmax.f32 %v390, 0.0
      %v423 = vmax.f32 %v391, 0.0
      %v424 = vmax.f32 %v392, 0.0
      %v425 = vmax.f32 %v393, 0.0
      %v426 = vmax.f32 %v394, 0.0
      %v427 = vmax.f32 %v395, 0.0
      %v428 = vmax.f32 %v396, 0.0
      %v429 = vmax.f32 %v397, 0.0
      %v430 = vmax.f32 %v398, 0.0
      %v431 = vmax.f32 %v399, 0.0
      %v432 = vmax.f32 %v400, 0.0
      %v433 = vmax.f32 %v401, 0.0
      %v434 = vmax.f32 %v402, 0.0
      %v435 = vmax.f32 %v403, 0.0
      %v436 = vmax.f32 %v404, 0.0
      %v437 = vmax.f32 %v405, 0.0
      %v438 = vmax.f32 %v406, 0.0
      %v439 = vmax.f32 %v407, 0.0
      %v440 = vmax.f32 %v408, 0.0
      %v441 = vmax.f32 %v409, 0.0
      %v442 = vmax.f32 %v410, 0.0
      %v443 = vmax.f32 %v411, 0.0
      %v444 = vlaneseq
      %v445 = vshrl.u32 %v444, 7
      %v446 = vadd.s32 %v445, 8
      %v447 = vadd.s32 %v445, 16
      %v448 = vadd.s32 %v445, 24
      %v449 = vadd.s32 %v445, 32
      %v450 = vadd.s32 %v445, 40
      %v451 = vadd.s32 %v445, 48
      %v452 = vadd.s32 %v445, 56
      %v453 = vadd.s32 %v445, 64
      %v454 = vadd.s32 %v445, 72
      %v455 = vadd.s32 %v445, 80
      %v456 = vadd.s32 %v445, 88
      %v457 = vadd.s32 %v445, 96
      %v458 = vadd.s32 %v445, 104
      %v459 = vadd.s32 %v445, 112
      %v460 = vadd.s32 %v445, 120
      %v461 = vadd.s32 %v445, 128
      %v462 = vadd.s32 %v445, 136
      %v463 = vadd.s32 %v445, 144
      %v464 = vadd.s32 %v445, 152
      %v465 = vadd.s32 %v445, 160
      %v466 = vadd.s32 %v445, 168
      %v467 = vadd.s32 %v445, 176
      %v468 = vadd.s32 %v445, 184
      %v469 = vadd.s32 %v445, 192
      %v470 = vadd.s32 %v445, 200
      %v471 = vadd.s32 %v445, 208
      %v472 = vadd.s32 %v445, 216
      %v473 = vadd.s32 %v445, 224
      %v474 = vadd.s32 %v445, 232
      %v475 = vadd.s32 %v445, 240
      %v476 = vadd.s32 %v445, 248
      %vm477 = vcmp.lt.s32.totalorder %v445, 0
      %v478 = vsub.s32 0, %v445
      %v479 = vsel %vm477, %v478, %v445
      %v480 = vshrl.u32 %v479, 4
      %v481 = vand.u32 %v479, 15
      %v482 = vsub.s32 0, %v481
      %v483 = vsel %vm477, %v482, %v481
      %vm484 = vcmp.lt.s32.totalorder %v446, 0
      %v485 = vsub.s32 0, %v446
      %v486 = vsel %vm484, %v485, %v446
      %v487 = vshrl.u32 %v486, 4
      %v488 = vand.u32 %v486, 15
      %v489 = vsub.s32 0, %v488
      %v490 = vsel %vm484, %v489, %v488
      %vm491 = vcmp.lt.s32.totalorder %v447, 0
      %v492 = vsub.s32 0, %v447
      %v493 = vsel %vm491, %v492, %v447
      %v494 = vshrl.u32 %v493, 4
      %v495 = vand.u32 %v493, 15
      %v496 = vsub.s32 0, %v495
      %v497 = vsel %vm491, %v496, %v495
      %vm498 = vcmp.lt.s32.totalorder %v448, 0
      %v499 = vsub.s32 0, %v448
      %v500 = vsel %vm498, %v499, %v448
      %v501 = vshrl.u32 %v500, 4
      %v502 = vand.u32 %v500, 15
      %v503 = vsub.s32 0, %v502
      %v504 = vsel %vm498, %v503, %v502
      %vm505 = vcmp.lt.s32.totalorder %v449, 0
      %v506 = vsub.s32 0, %v449
      %v507 = vsel %vm505, %v506, %v449
      %v508 = vshrl.u32 %v507, 4
      %v509 = vand.u32 %v507, 15
      %v510 = vsub.s32 0, %v509
      %v511 = vsel %vm505, %v510, %v509
      %vm512 = vcmp.lt.s32.totalorder %v450, 0
      %v513 = vsub.s32 0, %v450
      %v514 = vsel %vm512, %v513, %v450
      %v515 = vshrl.u32 %v514, 4
      %v516 = vand.u32 %v514, 15
      %v517 = vsub.s32 0, %v516
      %v518 = vsel %vm512, %v517, %v516
      %vm519 = vcmp.lt.s32.totalorder %v451, 0
      %v520 = vsub.s32 0, %v451
      %v521 = vsel %vm519, %v520, %v451
      %v522 = vshrl.u32 %v521, 4
      %v523 = vand.u32 %v521, 15
      %v524 = vsub.s32 0, %v523
      %v525 = vsel %vm519, %v524, %v523
      %vm526 = vcmp.lt.s32.totalorder %v452, 0
      %v527 = vsub.s32 0, %v452
      %v528 = vsel %vm526, %v527, %v452
      %v529 = vshrl.u32 %v528, 4
      %v530 = vand.u32 %v528, 15
      %v531 = vsub.s32 0, %v530
      %v532 = vsel %vm526, %v531, %v530
      %vm533 = vcmp.lt.s32.totalorder %v453, 0
      %v534 = vsub.s32 0, %v453
      %v535 = vsel %vm533, %v534, %v453
      %v536 = vshrl.u32 %v535, 4
      %v537 = vand.u32 %v535, 15
      %v538 = vsub.s32 0, %v537
      %v539 = vsel %vm533, %v538, %v537
      %vm540 = vcmp.lt.s32.totalorder %v454, 0
      %v541 = vsub.s32 0, %v454
      %v542 = vsel %vm540, %v541, %v454
      %v543 = vshrl.u32 %v542, 4
      %v544 = vand.u32 %v542, 15
      %v545 = vsub.s32 0, %v544
      %v546 = vsel %vm540, %v545, %v544
      %vm547 = vcmp.lt.s32.totalorder %v455, 0
      %v548 = vsub.s32 0, %v455
      %v549 = vsel %vm547, %v548, %v455
      %v550 = vshrl.u32 %v549, 4
      %v551 = vand.u32 %v549, 15
      %v552 = vsub.s32 0, %v551
      %v553 = vsel %vm547, %v552, %v551
      %vm554 = vcmp.lt.s32.totalorder %v456, 0
      %v555 = vsub.s32 0, %v456
      %v556 = vsel %vm554, %v555, %v456
      %v557 = vshrl.u32 %v556, 4
      %v558 = vand.u32 %v556, 15
      %v559 = vsub.s32 0, %v558
      %v560 = vsel %vm554, %v559, %v558
      %vm561 = vcmp.lt.s32.totalorder %v457, 0
      %v562 = vsub.s32 0, %v457
      %v563 = vsel %vm561, %v562, %v457
      %v564 = vshrl.u32 %v563, 4
      %v565 = vand.u32 %v563, 15
      %v566 = vsub.s32 0, %v565
      %v567 = vsel %vm561, %v566, %v565
      %vm568 = vcmp.lt.s32.totalorder %v458, 0
      %v569 = vsub.s32 0, %v458
      %v570 = vsel %vm568, %v569, %v458
      %v571 = vshrl.u32 %v570, 4
      %v572 = vand.u32 %v570, 15
      %v573 = vsub.s32 0, %v572
      %v574 = vsel %vm568, %v573, %v572
      %vm575 = vcmp.lt.s32.totalorder %v459, 0
      %v576 = vsub.s32 0, %v459
      %v577 = vsel %vm575, %v576, %v459
      %v578 = vshrl.u32 %v577, 4
      %v579 = vand.u32 %v577, 15
      %v580 = vsub.s32 0, %v579
      %v581 = vsel %vm575, %v580, %v579
      %vm582 = vcmp.lt.s32.totalorder %v460, 0
      %v583 = vsub.s32 0, %v460
      %v584 = vsel %vm582, %v583, %v460
      %v585 = vshrl.u32 %v584, 4
      %v586 = vand.u32 %v584, 15
      %v587 = vsub.s32 0, %v586
      %v588 = vsel %vm582, %v587, %v586
      %vm589 = vcmp.lt.s32.totalorder %v461, 0
      %v590 = vsub.s32 0, %v461
      %v591 = vsel %vm589, %v590, %v461
      %v592 = vshrl.u32 %v591, 4
      %v593 = vand.u32 %v591, 15
      %v594 = vsub.s32 0, %v593
      %v595 = vsel %vm589, %v594, %v593
      %vm596 = vcmp.lt.s32.totalorder %v462, 0
      %v597 = vsub.s32 0, %v462
      %v598 = vsel %vm596, %v597, %v462
      %v599 = vshrl.u32 %v598, 4
      %v600 = vand.u32 %v598, 15
      %v601 = vsub.s32 0, %v600
      %v602 = vsel %vm596, %v601, %v600
      %vm603 = vcmp.lt.s32.totalorder %v463, 0
      %v604 = vsub.s32 0, %v463
      %v605 = vsel %vm603, %v604, %v463
      %v606 = vshrl.u32 %v605, 4
      %v607 = vand.u32 %v605, 15
      %v608 = vsub.s32 0, %v607
      %v609 = vsel %vm603, %v608, %v607
      %vm610 = vcmp.lt.s32.totalorder %v464, 0
      %v611 = vsub.s32 0, %v464
      %v612 = vsel %vm610, %v611, %v464
      %v613 = vshrl.u32 %v612, 4
      %v614 = vand.u32 %v612, 15
      %v615 = vsub.s32 0, %v614
      %v616 = vsel %vm610, %v615, %v614
      %vm617 = vcmp.lt.s32.totalorder %v465, 0
      %v618 = vsub.s32 0, %v465
      %v619 = vsel %vm617, %v618, %v465
      %v620 = vshrl.u32 %v619, 4
      %v621 = vand.u32 %v619, 15
      %v622 = vsub.s32 0, %v621
      %v623 = vsel %vm617, %v622, %v621
      %vm624 = vcmp.lt.s32.totalorder %v466, 0
      %v625 = vsub.s32 0, %v466
      %v626 = vsel %vm624, %v625, %v466
      %v627 = vshrl.u32 %v626, 4
      %v628 = vand.u32 %v626, 15
      %v629 = vsub.s32 0, %v628
      %v630 = vsel %vm624, %v629, %v628
      %vm631 = vcmp.lt.s32.totalorder %v467, 0
      %v632 = vsub.s32 0, %v467
      %v633 = vsel %vm631, %v632, %v467
      %v634 = vshrl.u32 %v633, 4
      %v635 = vand.u32 %v633, 15
      %v636 = vsub.s32 0, %v635
      %v637 = vsel %vm631, %v636, %v635
      %vm638 = vcmp.lt.s32.totalorder %v468, 0
      %v639 = vsub.s32 0, %v468
      %v640 = vsel %vm638, %v639, %v468
      %v641 = vshrl.u32 %v640, 4
      %v642 = vand.u32 %v640, 15
      %v643 = vsub.s32 0, %v642
      %v644 = vsel %vm638, %v643, %v642
      %vm645 = vcmp.lt.s32.totalorder %v469, 0
      %v646 = vsub.s32 0, %v469
      %v647 = vsel %vm645, %v646, %v469
      %v648 = vshrl.u32 %v647, 4
      %v649 = vand.u32 %v647, 15
      %v650 = vsub.s32 0, %v649
      %v651 = vsel %vm645, %v650, %v649
      %vm652 = vcmp.lt.s32.totalorder %v470, 0
      %v653 = vsub.s32 0, %v470
      %v654 = vsel %vm652, %v653, %v470
      %v655 = vshrl.u32 %v654, 4
      %v656 = vand.u32 %v654, 15
      %v657 = vsub.s32 0, %v656
      %v658 = vsel %vm652, %v657, %v656
      %vm659 = vcmp.lt.s32.totalorder %v471, 0
      %v660 = vsub.s32 0, %v471
      %v661 = vsel %vm659, %v660, %v471
      %v662 = vshrl.u32 %v661, 4
      %v663 = vand.u32 %v661, 15
      %v664 = vsub.s32 0, %v663
      %v665 = vsel %vm659, %v664, %v663
      %vm666 = vcmp.lt.s32.totalorder %v472, 0
      %v667 = vsub.s32 0, %v472
      %v668 = vsel %vm666, %v667, %v472
      %v669 = vshrl.u32 %v668, 4
      %v670 = vand.u32 %v668, 15
      %v671 = vsub.s32 0, %v670
      %v672 = vsel %vm666, %v671, %v670
      %vm673 = vcmp.lt.s32.totalorder %v473, 0
      %v674 = vsub.s32 0, %v473
      %v675 = vsel %vm673, %v674, %v473
      %v676 = vshrl.u32 %v675, 4
      %v677 = vand.u32 %v675, 15
      %v678 = vsub.s32 0, %v677
      %v679 = vsel %vm673, %v678, %v677
      %vm680 = vcmp.lt.s32.totalorder %v474, 0
      %v681 = vsub.s32 0, %v474
      %v682 = vsel %vm680, %v681, %v474
      %v683 = vshrl.u32 %v682, 4
      %v684 = vand.u32 %v682, 15
      %v685 = vsub.s32 0, %v684
      %v686 = vsel %vm680, %v685, %v684
      %vm687 = vcmp.lt.s32.totalorder %v475, 0
      %v688 = vsub.s32 0, %v475
      %v689 = vsel %vm687, %v688, %v475
      %v690 = vshrl.u32 %v689, 4
      %v691 = vand.u32 %v689, 15
      %v692 = vsub.s32 0, %v691
      %v693 = vsel %vm687, %v692, %v691
      %vm694 = vcmp.lt.s32.totalorder %v476, 0
      %v695 = vsub.s32 0, %v476
      %v696 = vsel %vm694, %v695, %v476
      %v697 = vshrl.u32 %v696, 4
      %v698 = vand.u32 %v696, 15
      %v699 = vsub.s32 0, %v698
      %v700 = vsel %vm694, %v699, %v698
      %vm701 = vcmp.ne.s32.totalorder %v483, 0
      %vm702 = vcmp.ne.s32.totalorder %v490, 0
      %vm703 = vcmp.ne.s32.totalorder %v497, 0
      %vm704 = vcmp.ne.s32.totalorder %v504, 0
      %vm705 = vcmp.ne.s32.totalorder %v511, 0
      %vm706 = vcmp.ne.s32.totalorder %v518, 0
      %vm707 = vcmp.ne.s32.totalorder %v525, 0
      %vm708 = vcmp.ne.s32.totalorder %v532, 0
      %vm709 = vcmp.ne.s32.totalorder %v539, 0
      %vm710 = vcmp.ne.s32.totalorder %v546, 0
      %vm711 = vcmp.ne.s32.totalorder %v553, 0
      %vm712 = vcmp.ne.s32.totalorder %v560, 0
      %vm713 = vcmp.ne.s32.totalorder %v567, 0
      %vm714 = vcmp.ne.s32.totalorder %v574, 0
      %vm715 = vcmp.ne.s32.totalorder %v581, 0
      %vm716 = vcmp.ne.s32.totalorder %v588, 0
      %vm717 = vcmp.ne.s32.totalorder %v595, 0
      %vm718 = vcmp.ne.s32.totalorder %v602, 0
      %vm719 = vcmp.ne.s32.totalorder %v609, 0
      %vm720 = vcmp.ne.s32.totalorder %v616, 0
      %vm721 = vcmp.ne.s32.totalorder %v623, 0
      %vm722 = vcmp.ne.s32.totalorder %v630, 0
      %vm723 = vcmp.ne.s32.totalorder %v637, 0
      %vm724 = vcmp.ne.s32.totalorder %v644, 0
      %vm725 = vcmp.ne.s32.totalorder %v651, 0
      %vm726 = vcmp.ne.s32.totalorder %v658, 0
      %vm727 = vcmp.ne.s32.totalorder %v665, 0
      %vm728 = vcmp.ne.s32.totalorder %v672, 0
      %vm729 = vcmp.ne.s32.totalorder %v679, 0
      %vm730 = vcmp.ne.s32.totalorder %v686, 0
      %vm731 = vcmp.ne.s32.totalorder %v693, 0
      %vm732 = vcmp.ne.s32.totalorder %v700, 0
      %vm733 = vcmp.lt.s32.totalorder %v483, 0
      %vm734 = vcmp.lt.s32.totalorder %v490, 0
      %vm735 = vcmp.lt.s32.totalorder %v497, 0
      %vm736 = vcmp.lt.s32.totalorder %v504, 0
      %vm737 = vcmp.lt.s32.totalorder %v511, 0
      %vm738 = vcmp.lt.s32.totalorder %v518, 0
      %vm739 = vcmp.lt.s32.totalorder %v525, 0
      %vm740 = vcmp.lt.s32.totalorder %v532, 0
      %vm741 = vcmp.lt.s32.totalorder %v539, 0
      %vm742 = vcmp.lt.s32.totalorder %v546, 0
      %vm743 = vcmp.lt.s32.totalorder %v553, 0
      %vm744 = vcmp.lt.s32.totalorder %v560, 0
      %vm745 = vcmp.lt.s32.totalorder %v567, 0
      %vm746 = vcmp.lt.s32.totalorder %v574, 0
      %vm747 = vcmp.lt.s32.totalorder %v581, 0
      %vm748 = vcmp.lt.s32.totalorder %v588, 0
      %vm749 = vcmp.lt.s32.totalorder %v595, 0
      %vm750 = vcmp.lt.s32.totalorder %v602, 0
      %vm751 = vcmp.lt.s32.totalorder %v609, 0
      %vm752 = vcmp.lt.s32.totalorder %v616, 0
      %vm753 = vcmp.lt.s32.totalorder %v623, 0
      %vm754 = vcmp.lt.s32.totalorder %v630, 0
      %vm755 = vcmp.lt.s32.totalorder %v637, 0
      %vm756 = vcmp.lt.s32.totalorder %v644, 0
      %vm757 = vcmp.lt.s32.totalorder %v651, 0
      %vm758 = vcmp.lt.s32.totalorder %v658, 0
      %vm759 = vcmp.lt.s32.totalorder %v665, 0
      %vm760 = vcmp.lt.s32.totalorder %v672, 0
      %vm761 = vcmp.lt.s32.totalorder %v679, 0
      %vm762 = vcmp.lt.s32.totalorder %v686, 0
      %vm763 = vcmp.lt.s32.totalorder %v693, 0
      %vm764 = vcmp.lt.s32.totalorder %v700, 0
      %vm765 = vmand %vm733, %vm701
      %vm766 = vmand %vm734, %vm702
      %vm767 = vmand %vm735, %vm703
      %vm768 = vmand %vm736, %vm704
      %vm769 = vmand %vm737, %vm705
      %vm770 = vmand %vm738, %vm706
      %vm771 = vmand %vm739, %vm707
      %vm772 = vmand %vm740, %vm708
      %vm773 = vmand %vm741, %vm709
      %vm774 = vmand %vm742, %vm710
      %vm775 = vmand %vm743, %vm711
      %vm776 = vmand %vm744, %vm712
      %vm777 = vmand %vm745, %vm713
      %vm778 = vmand %vm746, %vm714
      %vm779 = vmand %vm747, %vm715
      %vm780 = vmand %vm748, %vm716
      %vm781 = vmand %vm749, %vm717
      %vm782 = vmand %vm750, %vm718
      %vm783 = vmand %vm751, %vm719
      %vm784 = vmand %vm752, %vm720
      %vm785 = vmand %vm753, %vm721
      %vm786 = vmand %vm754, %vm722
      %vm787 = vmand %vm755, %vm723
      %vm788 = vmand %vm756, %vm724
      %vm789 = vmand %vm757, %vm725
      %vm790 = vmand %vm758, %vm726
      %vm791 = vmand %vm759, %vm727
      %vm792 = vmand %vm760, %vm728
      %vm793 = vmand %vm761, %vm729
      %vm794 = vmand %vm762, %vm730
      %vm795 = vmand %vm763, %vm731
      %vm796 = vmand %vm764, %vm732
      %v797 = vadd.s32 %v483, 16
      %v798 = vadd.s32 %v490, 16
      %v799 = vadd.s32 %v497, 16
      %v800 = vadd.s32 %v504, 16
      %v801 = vadd.s32 %v511, 16
      %v802 = vadd.s32 %v518, 16
      %v803 = vadd.s32 %v525, 16
      %v804 = vadd.s32 %v532, 16
      %v805 = vadd.s32 %v539, 16
      %v806 = vadd.s32 %v546, 16
      %v807 = vadd.s32 %v553, 16
      %v808 = vadd.s32 %v560, 16
      %v809 = vadd.s32 %v567, 16
      %v810 = vadd.s32 %v574, 16
      %v811 = vadd.s32 %v581, 16
      %v812 = vadd.s32 %v588, 16
      %v813 = vadd.s32 %v595, 16
      %v814 = vadd.s32 %v602, 16
      %v815 = vadd.s32 %v609, 16
      %v816 = vadd.s32 %v616, 16
      %v817 = vadd.s32 %v623, 16
      %v818 = vadd.s32 %v630, 16
      %v819 = vadd.s32 %v637, 16
      %v820 = vadd.s32 %v644, 16
      %v821 = vadd.s32 %v651, 16
      %v822 = vadd.s32 %v658, 16
      %v823 = vadd.s32 %v665, 16
      %v824 = vadd.s32 %v672, 16
      %v825 = vadd.s32 %v679, 16
      %v826 = vadd.s32 %v686, 16
      %v827 = vadd.s32 %v693, 16
      %v828 = vadd.s32 %v700, 16
      %v829 = vsel %vm765, %v797, %v483
      %v830 = vsel %vm766, %v798, %v490
      %v831 = vsel %vm767, %v799, %v497
      %v832 = vsel %vm768, %v800, %v504
      %v833 = vsel %vm769, %v801, %v511
      %v834 = vsel %vm770, %v802, %v518
      %v835 = vsel %vm771, %v803, %v525
      %v836 = vsel %vm772, %v804, %v532
      %v837 = vsel %vm773, %v805, %v539
      %v838 = vsel %vm774, %v806, %v546
      %v839 = vsel %vm775, %v807, %v553
      %v840 = vsel %vm776, %v808, %v560
      %v841 = vsel %vm777, %v809, %v567
      %v842 = vsel %vm778, %v810, %v574
      %v843 = vsel %vm779, %v811, %v581
      %v844 = vsel %vm780, %v812, %v588
      %v845 = vsel %vm781, %v813, %v595
      %v846 = vsel %vm782, %v814, %v602
      %v847 = vsel %vm783, %v815, %v609
      %v848 = vsel %vm784, %v816, %v616
      %v849 = vsel %vm785, %v817, %v623
      %v850 = vsel %vm786, %v818, %v630
      %v851 = vsel %vm787, %v819, %v637
      %v852 = vsel %vm788, %v820, %v644
      %v853 = vsel %vm789, %v821, %v651
      %v854 = vsel %vm790, %v822, %v658
      %v855 = vsel %vm791, %v823, %v665
      %v856 = vsel %vm792, %v824, %v672
      %v857 = vsel %vm793, %v825, %v679
      %v858 = vsel %vm794, %v826, %v686
      %v859 = vsel %vm795, %v827, %v693
      %v860 = vsel %vm796, %v828, %v700
      %vm861 = vcmp.eq.s32.totalorder %v829, 15
      %vm862 = vcmp.eq.s32.totalorder %v830, 15
      %vm863 = vcmp.eq.s32.totalorder %v831, 15
      %vm864 = vcmp.eq.s32.totalorder %v832, 15
      %vm865 = vcmp.eq.s32.totalorder %v833, 15
      %vm866 = vcmp.eq.s32.totalorder %v834, 15
      %vm867 = vcmp.eq.s32.totalorder %v835, 15
      %vm868 = vcmp.eq.s32.totalorder %v836, 15
      %vm869 = vcmp.eq.s32.totalorder %v837, 15
      %vm870 = vcmp.eq.s32.totalorder %v838, 15
      %vm871 = vcmp.eq.s32.totalorder %v839, 15
      %vm872 = vcmp.eq.s32.totalorder %v840, 15
      %vm873 = vcmp.eq.s32.totalorder %v841, 15
      %vm874 = vcmp.eq.s32.totalorder %v842, 15
      %vm875 = vcmp.eq.s32.totalorder %v843, 15
      %vm876 = vcmp.eq.s32.totalorder %v844, 15
      %vm877 = vcmp.eq.s32.totalorder %v845, 15
      %vm878 = vcmp.eq.s32.totalorder %v846, 15
      %vm879 = vcmp.eq.s32.totalorder %v847, 15
      %vm880 = vcmp.eq.s32.totalorder %v848, 15
      %vm881 = vcmp.eq.s32.totalorder %v849, 15
      %vm882 = vcmp.eq.s32.totalorder %v850, 15
      %vm883 = vcmp.eq.s32.totalorder %v851, 15
      %vm884 = vcmp.eq.s32.totalorder %v852, 15
      %vm885 = vcmp.eq.s32.totalorder %v853, 15
      %vm886 = vcmp.eq.s32.totalorder %v854, 15
      %vm887 = vcmp.eq.s32.totalorder %v855, 15
      %vm888 = vcmp.eq.s32.totalorder %v856, 15
      %vm889 = vcmp.eq.s32.totalorder %v857, 15
      %vm890 = vcmp.eq.s32.totalorder %v858, 15
      %vm891 = vcmp.eq.s32.totalorder %v859, 15
      %vm892 = vcmp.eq.s32.totalorder %v860, 15
      %v893 = vsel %vm861, 1, 0
      %v894 = vsel %vm862, 1, 0
      %v895 = vsel %vm863, 1, 0
      %v896 = vsel %vm864, 1, 0
      %v897 = vsel %vm865, 1, 0
      %v898 = vsel %vm866, 1, 0
      %v899 = vsel %vm867, 1, 0
      %v900 = vsel %vm868, 1, 0
      %v901 = vsel %vm869, 1, 0
      %v902 = vsel %vm870, 1, 0
      %v903 = vsel %vm871, 1, 0
      %v904 = vsel %vm872, 1, 0
      %v905 = vsel %vm873, 1, 0
      %v906 = vsel %vm874, 1, 0
      %v907 = vsel %vm875, 1, 0
      %v908 = vsel %vm876, 1, 0
      %v909 = vsel %vm877, 1, 0
      %v910 = vsel %vm878, 1, 0
      %v911 = vsel %vm879, 1, 0
      %v912 = vsel %vm880, 1, 0
      %v913 = vsel %vm881, 1, 0
      %v914 = vsel %vm882, 1, 0
      %v915 = vsel %vm883, 1, 0
      %v916 = vsel %vm884, 1, 0
      %v917 = vsel %vm885, 1, 0
      %v918 = vsel %vm886, 1, 0
      %v919 = vsel %vm887, 1, 0
      %v920 = vsel %vm888, 1, 0
      %v921 = vsel %vm889, 1, 0
      %v922 = vsel %vm890, 1, 0
      %v923 = vsel %vm891, 1, 0
      %v924 = vsel %vm892, 1, 0
      %vm925 = vcmp.eq.s32.totalorder %v893, 1
      %vm926 = vcmp.eq.s32.totalorder %v894, 1
      %vm927 = vcmp.eq.s32.totalorder %v895, 1
      %vm928 = vcmp.eq.s32.totalorder %v896, 1
      %vm929 = vcmp.eq.s32.totalorder %v897, 1
      %vm930 = vcmp.eq.s32.totalorder %v898, 1
      %vm931 = vcmp.eq.s32.totalorder %v899, 1
      %vm932 = vcmp.eq.s32.totalorder %v900, 1
      %vm933 = vcmp.eq.s32.totalorder %v901, 1
      %vm934 = vcmp.eq.s32.totalorder %v902, 1
      %vm935 = vcmp.eq.s32.totalorder %v903, 1
      %vm936 = vcmp.eq.s32.totalorder %v904, 1
      %vm937 = vcmp.eq.s32.totalorder %v905, 1
      %vm938 = vcmp.eq.s32.totalorder %v906, 1
      %vm939 = vcmp.eq.s32.totalorder %v907, 1
      %vm940 = vcmp.eq.s32.totalorder %v908, 1
      %vm941 = vcmp.eq.s32.totalorder %v909, 1
      %vm942 = vcmp.eq.s32.totalorder %v910, 1
      %vm943 = vcmp.eq.s32.totalorder %v911, 1
      %vm944 = vcmp.eq.s32.totalorder %v912, 1
      %vm945 = vcmp.eq.s32.totalorder %v913, 1
      %vm946 = vcmp.eq.s32.totalorder %v914, 1
      %vm947 = vcmp.eq.s32.totalorder %v915, 1
      %vm948 = vcmp.eq.s32.totalorder %v916, 1
      %vm949 = vcmp.eq.s32.totalorder %v917, 1
      %vm950 = vcmp.eq.s32.totalorder %v918, 1
      %vm951 = vcmp.eq.s32.totalorder %v919, 1
      %vm952 = vcmp.eq.s32.totalorder %v920, 1
      %vm953 = vcmp.eq.s32.totalorder %v921, 1
      %vm954 = vcmp.eq.s32.totalorder %v922, 1
      %vm955 = vcmp.eq.s32.totalorder %v923, 1
      %vm956 = vcmp.eq.s32.totalorder %v924, 1
      %v957 = vsel %vm925, 0.0, %v412
      %v958 = vsel %vm926, 0.0, %v413
      %v959 = vsel %vm927, 0.0, %v414
      %v960 = vsel %vm928, 0.0, %v415
      %v961 = vsel %vm929, 0.0, %v416
      %v962 = vsel %vm930, 0.0, %v417
      %v963 = vsel %vm931, 0.0, %v418
      %v964 = vsel %vm932, 0.0, %v419
      %v965 = vsel %vm933, 0.0, %v420
      %v966 = vsel %vm934, 0.0, %v421
      %v967 = vsel %vm935, 0.0, %v422
      %v968 = vsel %vm936, 0.0, %v423
      %v969 = vsel %vm937, 0.0, %v424
      %v970 = vsel %vm938, 0.0, %v425
      %v971 = vsel %vm939, 0.0, %v426
      %v972 = vsel %vm940, 0.0, %v427
      %v973 = vsel %vm941, 0.0, %v428
      %v974 = vsel %vm942, 0.0, %v429
      %v975 = vsel %vm943, 0.0, %v430
      %v976 = vsel %vm944, 0.0, %v431
      %v977 = vsel %vm945, 0.0, %v432
      %v978 = vsel %vm946, 0.0, %v433
      %v979 = vsel %vm947, 0.0, %v434
      %v980 = vsel %vm948, 0.0, %v435
      %v981 = vsel %vm949, 0.0, %v436
      %v982 = vsel %vm950, 0.0, %v437
      %v983 = vsel %vm951, 0.0, %v438
      %v984 = vsel %vm952, 0.0, %v439
      %v985 = vsel %vm953, 0.0, %v440
      %v986 = vsel %vm954, 0.0, %v441
      %v987 = vsel %vm955, 0.0, %v442
      %v988 = vsel %vm956, 0.0, %v443
      %vm989 = vcmp.eq.s32.totalorder %v829, 0
      %vm990 = vcmp.eq.s32.totalorder %v830, 0
      %vm991 = vcmp.eq.s32.totalorder %v831, 0
      %vm992 = vcmp.eq.s32.totalorder %v832, 0
      %vm993 = vcmp.eq.s32.totalorder %v833, 0
      %vm994 = vcmp.eq.s32.totalorder %v834, 0
      %vm995 = vcmp.eq.s32.totalorder %v835, 0
      %vm996 = vcmp.eq.s32.totalorder %v836, 0
      %vm997 = vcmp.eq.s32.totalorder %v837, 0
      %vm998 = vcmp.eq.s32.totalorder %v838, 0
      %vm999 = vcmp.eq.s32.totalorder %v839, 0
      %vm1000 = vcmp.eq.s32.totalorder %v840, 0
      %vm1001 = vcmp.eq.s32.totalorder %v841, 0
      %vm1002 = vcmp.eq.s32.totalorder %v842, 0
      %vm1003 = vcmp.eq.s32.totalorder %v843, 0
      %vm1004 = vcmp.eq.s32.totalorder %v844, 0
      %vm1005 = vcmp.eq.s32.totalorder %v845, 0
      %vm1006 = vcmp.eq.s32.totalorder %v846, 0
      %vm1007 = vcmp.eq.s32.totalorder %v847, 0
      %vm1008 = vcmp.eq.s32.totalorder %v848, 0
      %vm1009 = vcmp.eq.s32.totalorder %v849, 0
      %vm1010 = vcmp.eq.s32.totalorder %v850, 0
      %vm1011 = vcmp.eq.s32.totalorder %v851, 0
      %vm1012 = vcmp.eq.s32.totalorder %v852, 0
      %vm1013 = vcmp.eq.s32.totalorder %v853, 0
      %vm1014 = vcmp.eq.s32.totalorder %v854, 0
      %vm1015 = vcmp.eq.s32.totalorder %v855, 0
      %vm1016 = vcmp.eq.s32.totalorder %v856, 0
      %vm1017 = vcmp.eq.s32.totalorder %v857, 0
      %vm1018 = vcmp.eq.s32.totalorder %v858, 0
      %vm1019 = vcmp.eq.s32.totalorder %v859, 0
      %vm1020 = vcmp.eq.s32.totalorder %v860, 0
      %v1021 = vsel %vm989, 1, 0
      %v1022 = vsel %vm990, 1, 0
      %v1023 = vsel %vm991, 1, 0
      %v1024 = vsel %vm992, 1, 0
      %v1025 = vsel %vm993, 1, 0
      %v1026 = vsel %vm994, 1, 0
      %v1027 = vsel %vm995, 1, 0
      %v1028 = vsel %vm996, 1, 0
      %v1029 = vsel %vm997, 1, 0
      %v1030 = vsel %vm998, 1, 0
      %v1031 = vsel %vm999, 1, 0
      %v1032 = vsel %vm1000, 1, 0
      %v1033 = vsel %vm1001, 1, 0
      %v1034 = vsel %vm1002, 1, 0
      %v1035 = vsel %vm1003, 1, 0
      %v1036 = vsel %vm1004, 1, 0
      %v1037 = vsel %vm1005, 1, 0
      %v1038 = vsel %vm1006, 1, 0
      %v1039 = vsel %vm1007, 1, 0
      %v1040 = vsel %vm1008, 1, 0
      %v1041 = vsel %vm1009, 1, 0
      %v1042 = vsel %vm1010, 1, 0
      %v1043 = vsel %vm1011, 1, 0
      %v1044 = vsel %vm1012, 1, 0
      %v1045 = vsel %vm1013, 1, 0
      %v1046 = vsel %vm1014, 1, 0
      %v1047 = vsel %vm1015, 1, 0
      %v1048 = vsel %vm1016, 1, 0
      %v1049 = vsel %vm1017, 1, 0
      %v1050 = vsel %vm1018, 1, 0
      %v1051 = vsel %vm1019, 1, 0
      %v1052 = vsel %vm1020, 1, 0
      %vm1053 = vcmp.eq.s32.totalorder %v1021, 1
      %vm1054 = vcmp.eq.s32.totalorder %v1022, 1
      %vm1055 = vcmp.eq.s32.totalorder %v1023, 1
      %vm1056 = vcmp.eq.s32.totalorder %v1024, 1
      %vm1057 = vcmp.eq.s32.totalorder %v1025, 1
      %vm1058 = vcmp.eq.s32.totalorder %v1026, 1
      %vm1059 = vcmp.eq.s32.totalorder %v1027, 1
      %vm1060 = vcmp.eq.s32.totalorder %v1028, 1
      %vm1061 = vcmp.eq.s32.totalorder %v1029, 1
      %vm1062 = vcmp.eq.s32.totalorder %v1030, 1
      %vm1063 = vcmp.eq.s32.totalorder %v1031, 1
      %vm1064 = vcmp.eq.s32.totalorder %v1032, 1
      %vm1065 = vcmp.eq.s32.totalorder %v1033, 1
      %vm1066 = vcmp.eq.s32.totalorder %v1034, 1
      %vm1067 = vcmp.eq.s32.totalorder %v1035, 1
      %vm1068 = vcmp.eq.s32.totalorder %v1036, 1
      %vm1069 = vcmp.eq.s32.totalorder %v1037, 1
      %vm1070 = vcmp.eq.s32.totalorder %v1038, 1
      %vm1071 = vcmp.eq.s32.totalorder %v1039, 1
      %vm1072 = vcmp.eq.s32.totalorder %v1040, 1
      %vm1073 = vcmp.eq.s32.totalorder %v1041, 1
      %vm1074 = vcmp.eq.s32.totalorder %v1042, 1
      %vm1075 = vcmp.eq.s32.totalorder %v1043, 1
      %vm1076 = vcmp.eq.s32.totalorder %v1044, 1
      %vm1077 = vcmp.eq.s32.totalorder %v1045, 1
      %vm1078 = vcmp.eq.s32.totalorder %v1046, 1
      %vm1079 = vcmp.eq.s32.totalorder %v1047, 1
      %vm1080 = vcmp.eq.s32.totalorder %v1048, 1
      %vm1081 = vcmp.eq.s32.totalorder %v1049, 1
      %vm1082 = vcmp.eq.s32.totalorder %v1050, 1
      %vm1083 = vcmp.eq.s32.totalorder %v1051, 1
      %vm1084 = vcmp.eq.s32.totalorder %v1052, 1
      %v1085 = vsel %vm1053, 0.0, %v412
      %v1086 = vsel %vm1054, 0.0, %v413
      %v1087 = vsel %vm1055, 0.0, %v414
      %v1088 = vsel %vm1056, 0.0, %v415
      %v1089 = vsel %vm1057, 0.0, %v416
      %v1090 = vsel %vm1058, 0.0, %v417
      %v1091 = vsel %vm1059, 0.0, %v418
      %v1092 = vsel %vm1060, 0.0, %v419
      %v1093 = vsel %vm1061, 0.0, %v420
      %v1094 = vsel %vm1062, 0.0, %v421
      %v1095 = vsel %vm1063, 0.0, %v422
      %v1096 = vsel %vm1064, 0.0, %v423
      %v1097 = vsel %vm1065, 0.0, %v424
      %v1098 = vsel %vm1066, 0.0, %v425
      %v1099 = vsel %vm1067, 0.0, %v426
      %v1100 = vsel %vm1068, 0.0, %v427
      %v1101 = vsel %vm1069, 0.0, %v428
      %v1102 = vsel %vm1070, 0.0, %v429
      %v1103 = vsel %vm1071, 0.0, %v430
      %v1104 = vsel %vm1072, 0.0, %v431
      %v1105 = vsel %vm1073, 0.0, %v432
      %v1106 = vsel %vm1074, 0.0, %v433
      %v1107 = vsel %vm1075, 0.0, %v434
      %v1108 = vsel %vm1076, 0.0, %v435
      %v1109 = vsel %vm1077, 0.0, %v436
      %v1110 = vsel %vm1078, 0.0, %v437
      %v1111 = vsel %vm1079, 0.0, %v438
      %v1112 = vsel %vm1080, 0.0, %v439
      %v1113 = vsel %vm1081, 0.0, %v440
      %v1114 = vsel %vm1082, 0.0, %v441
      %v1115 = vsel %vm1083, 0.0, %v442
      %v1116 = vsel %vm1084, 0.0, %v443
      %vm1117 = vcmask 31744
      %1118 = vst.msk [vmem:[#allocation2] sm:$0xff] %vm1117, 0.0
      %1119 = vst.msk [vmem:[#allocation2 + $0x8] sm:$0xff] %vm1117, 0.0
      %vm1120 = vcmask 24576
      %1121 = vst.msk [vmem:[#allocation2 + $0x10] sm:$0x1] %vm1120, 0.0
      %1122 = vst.msk [vmem:[#allocation2 + $0x11] sm:$0xff] %vm1117, %v957
      %1123 = vst.msk [vmem:[#allocation2 + $0x19] sm:$0xff] %vm1117, %v958
      %1124 = vst.msk [vmem:[#allocation2 + $0x21] sm:$0xff] %vm1117, %v959
      %1125 = vst.msk [vmem:[#allocation2 + $0x29] sm:$0xff] %vm1117, %v960
      %1126 = vst.msk [vmem:[#allocation2 + $0x31] sm:$0xff] %vm1117, %v961
      %1127 = vst.msk [vmem:[#allocation2 + $0x39] sm:$0xff] %vm1117, %v962
      %1128 = vst.msk [vmem:[#allocation2 + $0x41] sm:$0xff] %vm1117, %v963
      %1129 = vst.msk [vmem:[#allocation2 + $0x49] sm:$0xff] %vm1117, %v964
      %1130 = vst.msk [vmem:[#allocation2 + $0x51] sm:$0xff] %vm1117, %v965
      %1131 = vst.msk [vmem:[#allocation2 + $0x59] sm:$0xff] %vm1117, %v966
      %1132 = vst.msk [vmem:[#allocation2 + $0x61] sm:$0xff] %vm1117, %v967
      %1133 = vst.msk [vmem:[#allocation2 + $0x69] sm:$0xff] %vm1117, %v968
      %1134 = vst.msk [vmem:[#allocation2 + $0x71] sm:$0xff] %vm1117, %v969
      %1135 = vst.msk [vmem:[#allocation2 + $0x79] sm:$0xff] %vm1117, %v970
      %1136 = vst.msk [vmem:[#allocation2 + $0x81] sm:$0xff] %vm1117, %v971
      %1137 = vst.msk [vmem:[#allocation2 + $0x89] sm:$0xff] %vm1117, %v972
      %1138 = vst.msk [vmem:[#allocation2 + $0x91] sm:$0xff] %vm1117, %v973
      %1139 = vst.msk [vmem:[#allocation2 + $0x99] sm:$0xff] %vm1117, %v974
      %1140 = vst.msk [vmem:[#allocation2 + $0xa1] sm:$0xff] %vm1117, %v975
      %1141 = vst.msk [vmem:[#allocation2 + $0xa9] sm:$0xff] %vm1117, %v976
      %1142 = vst.msk [vmem:[#allocation2 + $0xb1] sm:$0xff] %vm1117, %v977
      %1143 = vst.msk [vmem:[#allocation2 + $0xb9] sm:$0xff] %vm1117, %v978
      %1144 = vst.msk [vmem:[#allocation2 + $0xc1] sm:$0xff] %vm1117, %v979
      %1145 = vst.msk [vmem:[#allocation2 + $0xc9] sm:$0xff] %vm1117, %v980
      %1146 = vst.msk [vmem:[#allocation2 + $0xd1] sm:$0xff] %vm1117, %v981
      %1147 = vst.msk [vmem:[#allocation2 + $0xd9] sm:$0xff] %vm1117, %v982
      %1148 = vst.msk [vmem:[#allocation2 + $0xe1] sm:$0xff] %vm1117, %v983
      %1149 = vst.msk [vmem:[#allocation2 + $0xe9] sm:$0xff] %vm1117, %v984
      %1150 = vst.msk [vmem:[#allocation2 + $0xf1] sm:$0xff] %vm1117, %v985
      %vm1151 = vcmask 30720
      %1152 = vst.msk [vmem:[#allocation2 + $0xf9] sm:$0x7f] %vm1151, %v986
      %vm1153 = vcmask 64544
      %1154 = vst.msk [vmem:[#allocation2] sm:$0xff] %vm1153, 0.0
      %1155 = vst.msk [vmem:[#allocation2 + $0x8] sm:$0xff] %vm1153, 0.0
      %1186 = vrot.lane.b32.xlu0 %v412, 4
      %v1187 = vpop.permute.xlu0 %1186
      %1188 = vrot.lane.b32.xlu0 %v413, 4
      %v1189 = vpop.permute.xlu0 %1188
      %1190 = vrot.lane.b32.xlu0 %v414, 4
      %v1191 = vpop.permute.xlu0 %1190
      %1192 = vrot.lane.b32.xlu0 %v415, 4
      %v1193 = vpop.permute.xlu0 %1192
      %1194 = vrot.lane.b32.xlu0 %v416, 4
      %v1195 = vpop.permute.xlu0 %1194
      %1196 = vrot.lane.b32.xlu0 %v417, 4
      %v1197 = vpop.permute.xlu0 %1196
      %1198 = vrot.lane.b32.xlu0 %v418, 4
      %v1199 = vpop.permute.xlu0 %1198
      %1200 = vrot.lane.b32.xlu0 %v419, 4
      %v1201 = vpop.permute.xlu0 %1200
      %1202 = vrot.lane.b32.xlu0 %v420, 4
      %v1203 = vpop.permute.xlu0 %1202
      %1204 = vrot.lane.b32.xlu0 %v421, 4
      %v1205 = vpop.permute.xlu0 %1204
      %1206 = vrot.lane.b32.xlu0 %v422, 4
      %v1207 = vpop.permute.xlu0 %1206
      %1208 = vrot.lane.b32.xlu0 %v423, 4
      %v1209 = vpop.permute.xlu0 %1208
      %1210 = vrot.lane.b32.xlu0 %v424, 4
      %v1211 = vpop.permute.xlu0 %1210
      %1212 = vrot.lane.b32.xlu0 %v425, 4
      %v1213 = vpop.permute.xlu0 %1212
      %1214 = vrot.lane.b32.xlu0 %v426, 4
      %v1215 = vpop.permute.xlu0 %1214
      %1216 = vrot.lane.b32.xlu0 %v427, 4
      %v1217 = vpop.permute.xlu0 %1216
      %1218 = vrot.lane.b32.xlu0 %v428, 4
      %v1219 = vpop.permute.xlu0 %1218
      %1220 = vrot.lane.b32.xlu0 %v429, 4
      %v1221 = vpop.permute.xlu0 %1220
      %1222 = vrot.lane.b32.xlu0 %v430, 4
      %v1223 = vpop.permute.xlu0 %1222
      %1224 = vrot.lane.b32.xlu0 %v431, 4
      %v1225 = vpop.permute.xlu0 %1224
      %1226 = vrot.lane.b32.xlu0 %v432, 4
      %v1227 = vpop.permute.xlu0 %1226
      %1228 = vrot.lane.b32.xlu0 %v433, 4
      %v1229 = vpop.permute.xlu0 %1228
      %1230 = vrot.lane.b32.xlu0 %v434, 4
      %v1231 = vpop.permute.xlu0 %1230
      %1232 = vrot.lane.b32.xlu0 %v435, 4
      %v1233 = vpop.permute.xlu0 %1232
      %1234 = vrot.lane.b32.xlu0 %v436, 4
      %v1235 = vpop.permute.xlu0 %1234
      %1236 = vrot.lane.b32.xlu0 %v437, 4
      %v1237 = vpop.permute.xlu0 %1236
      %1238 = vrot.lane.b32.xlu0 %v438, 4
      %v1239 = vpop.permute.xlu0 %1238
      %1240 = vrot.lane.b32.xlu0 %v439, 4
      %v1241 = vpop.permute.xlu0 %1240
      %1242 = vrot.lane.b32.xlu0 %v440, 4
      %v1243 = vpop.permute.xlu0 %1242
      %1244 = vrot.lane.b32.xlu0 %v441, 4
      %v1245 = vpop.permute.xlu0 %1244
      %1276 = vst.msk [vmem:[#allocation2 + $0x10] sm:$0xff] %vm1153, %v1187
      %1277 = vst.msk [vmem:[#allocation2 + $0x18] sm:$0xff] %vm1153, %v1189
      %1278 = vst.msk [vmem:[#allocation2 + $0x20] sm:$0xff] %vm1153, %v1191
      %1279 = vst.msk [vmem:[#allocation2 + $0x28] sm:$0xff] %vm1153, %v1193
      %1280 = vst.msk [vmem:[#allocation2 + $0x30] sm:$0xff] %vm1153, %v1195
      %1281 = vst.msk [vmem:[#allocation2 + $0x38] sm:$0xff] %vm1153, %v1197
      %1282 = vst.msk [vmem:[#allocation2 + $0x40] sm:$0xff] %vm1153, %v1199
      %1283 = vst.msk [vmem:[#allocation2 + $0x48] sm:$0xff] %vm1153, %v1201
      %1284 = vst.msk [vmem:[#allocation2 + $0x50] sm:$0xff] %vm1153, %v1203
      %1285 = vst.msk [vmem:[#allocation2 + $0x58] sm:$0xff] %vm1153, %v1205
      %1286 = vst.msk [vmem:[#allocation2 + $0x60] sm:$0xff] %vm1153, %v1207
      %1287 = vst.msk [vmem:[#allocation2 + $0x68] sm:$0xff] %vm1153, %v1209
      %1288 = vst.msk [vmem:[#allocation2 + $0x70] sm:$0xff] %vm1153, %v1211
      %1289 = vst.msk [vmem:[#allocation2 + $0x78] sm:$0xff] %vm1153, %v1213
      %1290 = vst.msk [vmem:[#allocation2 + $0x80] sm:$0xff] %vm1153, %v1215
      %1291 = vst.msk [vmem:[#allocation2 + $0x88] sm:$0xff] %vm1153, %v1217
      %1292 = vst.msk [vmem:[#allocation2 + $0x90] sm:$0xff] %vm1153, %v1219
      %1293 = vst.msk [vmem:[#allocation2 + $0x98] sm:$0xff] %vm1153, %v1221
      %1294 = vst.msk [vmem:[#allocation2 + $0xa0] sm:$0xff] %vm1153, %v1223
      %1295 = vst.msk [vmem:[#allocation2 + $0xa8] sm:$0xff] %vm1153, %v1225
      %1296 = vst.msk [vmem:[#allocation2 + $0xb0] sm:$0xff] %vm1153, %v1227
      %1297 = vst.msk [vmem:[#allocation2 + $0xb8] sm:$0xff] %vm1153, %v1229
      %1298 = vst.msk [vmem:[#allocation2 + $0xc0] sm:$0xff] %vm1153, %v1231
      %1299 = vst.msk [vmem:[#allocation2 + $0xc8] sm:$0xff] %vm1153, %v1233
      %1300 = vst.msk [vmem:[#allocation2 + $0xd0] sm:$0xff] %vm1153, %v1235
      %1301 = vst.msk [vmem:[#allocation2 + $0xd8] sm:$0xff] %vm1153, %v1237
      %1302 = vst.msk [vmem:[#allocation2 + $0xe0] sm:$0xff] %vm1153, %v1239
      %1303 = vst.msk [vmem:[#allocation2 + $0xe8] sm:$0xff] %vm1153, %v1241
      %1304 = vst.msk [vmem:[#allocation2 + $0xf0] sm:$0xff] %vm1153, %v1243
      %1305 = vst.msk [vmem:[#allocation2 + $0xf8] sm:$0xff] %vm1153, %v1245
      %vm1306 = vcmask 97344
      %1307 = vst.msk [vmem:[#allocation2] sm:$0xff] %vm1306, 0.0
      %vm1308 = vcmask 96320
      %1309 = vst.msk [vmem:[#allocation2 + $0x8] sm:$0x7f] %vm1308, 0.0
      %1341 = vrot.lane.b32.xlu0 %v1085, 8
      %v1342 = vpop.permute.xlu0 %1341
      %1343 = vrot.lane.b32.xlu0 %v1086, 8
      %v1344 = vpop.permute.xlu0 %1343
      %1345 = vrot.lane.b32.xlu0 %v1087, 8
      %v1346 = vpop.permute.xlu0 %1345
      %1347 = vrot.lane.b32.xlu0 %v1088, 8
      %v1348 = vpop.permute.xlu0 %1347
      %1349 = vrot.lane.b32.xlu0 %v1089, 8
      %v1350 = vpop.permute.xlu0 %1349
      %1351 = vrot.lane.b32.xlu0 %v1090, 8
      %v1352 = vpop.permute.xlu0 %1351
      %1353 = vrot.lane.b32.xlu0 %v1091, 8
      %v1354 = vpop.permute.xlu0 %1353
      %1355 = vrot.lane.b32.xlu0 %v1092, 8
      %v1356 = vpop.permute.xlu0 %1355
      %1357 = vrot.lane.b32.xlu0 %v1093, 8
      %v1358 = vpop.permute.xlu0 %1357
      %1359 = vrot.lane.b32.xlu0 %v1094, 8
      %v1360 = vpop.permute.xlu0 %1359
      %1361 = vrot.lane.b32.xlu0 %v1095, 8
      %v1362 = vpop.permute.xlu0 %1361
      %1363 = vrot.lane.b32.xlu0 %v1096, 8
      %v1364 = vpop.permute.xlu0 %1363
      %1365 = vrot.lane.b32.xlu0 %v1097, 8
      %v1366 = vpop.permute.xlu0 %1365
      %1367 = vrot.lane.b32.xlu0 %v1098, 8
      %v1368 = vpop.permute.xlu0 %1367
      %1369 = vrot.lane.b32.xlu0 %v1099, 8
      %v1370 = vpop.permute.xlu0 %1369
      %1371 = vrot.lane.b32.xlu0 %v1100, 8
      %v1372 = vpop.permute.xlu0 %1371
      %1373 = vrot.lane.b32.xlu0 %v1101, 8
      %v1374 = vpop.permute.xlu0 %1373
      %1375 = vrot.lane.b32.xlu0 %v1102, 8
      %v1376 = vpop.permute.xlu0 %1375
      %1377 = vrot.lane.b32.xlu0 %v1103, 8
      %v1378 = vpop.permute.xlu0 %1377
      %1379 = vrot.lane.b32.xlu0 %v1104, 8
      %v1380 = vpop.permute.xlu0 %1379
      %1381 = vrot.lane.b32.xlu0 %v1105, 8
      %v1382 = vpop.permute.xlu0 %1381
      %1383 = vrot.lane.b32.xlu0 %v1106, 8
      %v1384 = vpop.permute.xlu0 %1383
      %1385 = vrot.lane.b32.xlu0 %v1107, 8
      %v1386 = vpop.permute.xlu0 %1385
      %1387 = vrot.lane.b32.xlu0 %v1108, 8
      %v1388 = vpop.permute.xlu0 %1387
      %1389 = vrot.lane.b32.xlu0 %v1109, 8
      %v1390 = vpop.permute.xlu0 %1389
      %1391 = vrot.lane.b32.xlu0 %v1110, 8
      %v1392 = vpop.permute.xlu0 %1391
      %1393 = vrot.lane.b32.xlu0 %v1111, 8
      %v1394 = vpop.permute.xlu0 %1393
      %1395 = vrot.lane.b32.xlu0 %v1112, 8
      %v1396 = vpop.permute.xlu0 %1395
      %1397 = vrot.lane.b32.xlu0 %v1113, 8
      %v1398 = vpop.permute.xlu0 %1397
      %1399 = vrot.lane.b32.xlu0 %v1114, 8
      %v1400 = vpop.permute.xlu0 %1399
      %1401 = vrot.lane.b32.xlu0 %v1115, 8
      %v1402 = vpop.permute.xlu0 %1401
      %1434 = vst.msk [vmem:[#allocation2 + $0xf] sm:$0xff] %vm1306, %v1342
      %1435 = vst.msk [vmem:[#allocation2 + $0x17] sm:$0xff] %vm1306, %v1344
      %1436 = vst.msk [vmem:[#allocation2 + $0x1f] sm:$0xff] %vm1306, %v1346
      %1437 = vst.msk [vmem:[#allocation2 + $0x27] sm:$0xff] %vm1306, %v1348
      %1438 = vst.msk [vmem:[#allocation2 + $0x2f] sm:$0xff] %vm1306, %v1350
      %1439 = vst.msk [vmem:[#allocation2 + $0x37] sm:$0xff] %vm1306, %v1352
      %1440 = vst.msk [vmem:[#allocation2 + $0x3f] sm:$0xff] %vm1306, %v1354
      %1441 = vst.msk [vmem:[#allocation2 + $0x47] sm:$0xff] %vm1306, %v1356
      %1442 = vst.msk [vmem:[#allocation2 + $0x4f] sm:$0xff] %vm1306, %v1358
      %1443 = vst.msk [vmem:[#allocation2 + $0x57] sm:$0xff] %vm1306, %v1360
      %1444 = vst.msk [vmem:[#allocation2 + $0x5f] sm:$0xff] %vm1306, %v1362
      %1445 = vst.msk [vmem:[#allocation2 + $0x67] sm:$0xff] %vm1306, %v1364
      %1446 = vst.msk [vmem:[#allocation2 + $0x6f] sm:$0xff] %vm1306, %v1366
      %1447 = vst.msk [vmem:[#allocation2 + $0x77] sm:$0xff] %vm1306, %v1368
      %1448 = vst.msk [vmem:[#allocation2 + $0x7f] sm:$0xff] %vm1306, %v1370
      %1449 = vst.msk [vmem:[#allocation2 + $0x87] sm:$0xff] %vm1306, %v1372
      %1450 = vst.msk [vmem:[#allocation2 + $0x8f] sm:$0xff] %vm1306, %v1374
      %1451 = vst.msk [vmem:[#allocation2 + $0x97] sm:$0xff] %vm1306, %v1376
      %1452 = vst.msk [vmem:[#allocation2 + $0x9f] sm:$0xff] %vm1306, %v1378
      %1453 = vst.msk [vmem:[#allocation2 + $0xa7] sm:$0xff] %vm1306, %v1380
      %1454 = vst.msk [vmem:[#allocation2 + $0xaf] sm:$0xff] %vm1306, %v1382
      %1455 = vst.msk [vmem:[#allocation2 + $0xb7] sm:$0xff] %vm1306, %v1384
      %1456 = vst.msk [vmem:[#allocation2 + $0xbf] sm:$0xff] %vm1306, %v1386
      %1457 = vst.msk [vmem:[#allocation2 + $0xc7] sm:$0xff] %vm1306, %v1388
      %1458 = vst.msk [vmem:[#allocation2 + $0xcf] sm:$0xff] %vm1306, %v1390
      %1459 = vst.msk [vmem:[#allocation2 + $0xd7] sm:$0xff] %vm1306, %v1392
      %1460 = vst.msk [vmem:[#allocation2 + $0xdf] sm:$0xff] %vm1306, %v1394
      %1461 = vst.msk [vmem:[#allocation2 + $0xe7] sm:$0xff] %vm1306, %v1396
      %1462 = vst.msk [vmem:[#allocation2 + $0xef] sm:$0xff] %vm1306, %v1398
      %1463 = vst.msk [vmem:[#allocation2 + $0xf7] sm:$0xff] %vm1306, %v1400
      %vm1464 = vcmask 90176
      %1465 = vst.msk [vmem:[#allocation2 + $0xff] sm:$0x1] %vm1464, %v1402
      %vm1466 = vcmask 122976
      %1467 = vst.msk [vmem:[#allocation2] sm:$0x1] %vm1466, 0.0
      %1500 = vrot.lane.b32.xlu0 %v957, 12
      %v1501 = vpop.permute.xlu0 %1500
      %1502 = vrot.lane.b32.xlu0 %v958, 12
      %v1503 = vpop.permute.xlu0 %1502
      %1504 = vrot.lane.b32.xlu0 %v959, 12
      %v1505 = vpop.permute.xlu0 %1504
      %1506 = vrot.lane.b32.xlu0 %v960, 12
      %v1507 = vpop.permute.xlu0 %1506
      %1508 = vrot.lane.b32.xlu0 %v961, 12
      %v1509 = vpop.permute.xlu0 %1508
      %1510 = vrot.lane.b32.xlu0 %v962, 12
      %v1511 = vpop.permute.xlu0 %1510
      %1512 = vrot.lane.b32.xlu0 %v963, 12
      %v1513 = vpop.permute.xlu0 %1512
      %1514 = vrot.lane.b32.xlu0 %v964, 12
      %v1515 = vpop.permute.xlu0 %1514
      %1516 = vrot.lane.b32.xlu0 %v965, 12
      %v1517 = vpop.permute.xlu0 %1516
      %1518 = vrot.lane.b32.xlu0 %v966, 12
      %v1519 = vpop.permute.xlu0 %1518
      %1520 = vrot.lane.b32.xlu0 %v967, 12
      %v1521 = vpop.permute.xlu0 %1520
      %1522 = vrot.lane.b32.xlu0 %v968, 12
      %v1523 = vpop.permute.xlu0 %1522
      %1524 = vrot.lane.b32.xlu0 %v969, 12
      %v1525 = vpop.permute.xlu0 %1524
      %1526 = vrot.lane.b32.xlu0 %v970, 12
      %v1527 = vpop.permute.xlu0 %1526
      %1528 = vrot.lane.b32.xlu0 %v971, 12
      %v1529 = vpop.permute.xlu0 %1528
      %1530 = vrot.lane.b32.xlu0 %v972, 12
      %v1531 = vpop.permute.xlu0 %1530
      %1532 = vrot.lane.b32.xlu0 %v973, 12
      %v1533 = vpop.permute.xlu0 %1532
      %1534 = vrot.lane.b32.xlu0 %v974, 12
      %v1535 = vpop.permute.xlu0 %1534
      %1536 = vrot.lane.b32.xlu0 %v975, 12
      %v1537 = vpop.permute.xlu0 %1536
      %1538 = vrot.lane.b32.xlu0 %v976, 12
      %v1539 = vpop.permute.xlu0 %1538
      %1540 = vrot.lane.b32.xlu0 %v977, 12
      %v1541 = vpop.permute.xlu0 %1540
      %1542 = vrot.lane.b32.xlu0 %v978, 12
      %v1543 = vpop.permute.xlu0 %1542
      %1544 = vrot.lane.b32.xlu0 %v979, 12
      %v1545 = vpop.permute.xlu0 %1544
      %1546 = vrot.lane.b32.xlu0 %v980, 12
      %v1547 = vpop.permute.xlu0 %1546
      %1548 = vrot.lane.b32.xlu0 %v981, 12
      %v1549 = vpop.permute.xlu0 %1548
      %1550 = vrot.lane.b32.xlu0 %v982, 12
      %v1551 = vpop.permute.xlu0 %1550
      %1552 = vrot.lane.b32.xlu0 %v983, 12
      %v1553 = vpop.permute.xlu0 %1552
      %1554 = vrot.lane.b32.xlu0 %v984, 12
      %v1555 = vpop.permute.xlu0 %1554
      %1556 = vrot.lane.b32.xlu0 %v985, 12
      %v1557 = vpop.permute.xlu0 %1556
      %1558 = vrot.lane.b32.xlu0 %v986, 12
      %v1559 = vpop.permute.xlu0 %1558
      %1560 = vrot.lane.b32.xlu0 %v987, 12
      %v1561 = vpop.permute.xlu0 %1560
      %1562 = vrot.lane.b32.xlu0 %v988, 12
      %v1563 = vpop.permute.xlu0 %1562
      %vm1596 = vcmask 130144
      %1597 = vst.msk [vmem:[#allocation2 + $0x1] sm:$0xff] %vm1596, %v1501
      %1598 = vst.msk [vmem:[#allocation2 + $0x9] sm:$0xff] %vm1596, %v1503
      %1599 = vst.msk [vmem:[#allocation2 + $0x11] sm:$0xff] %vm1596, %v1505
      %1600 = vst.msk [vmem:[#allocation2 + $0x19] sm:$0xff] %vm1596, %v1507
      %1601 = vst.msk [vmem:[#allocation2 + $0x21] sm:$0xff] %vm1596, %v1509
      %1602 = vst.msk [vmem:[#allocation2 + $0x29] sm:$0xff] %vm1596, %v1511
      %1603 = vst.msk [vmem:[#allocation2 + $0x31] sm:$0xff] %vm1596, %v1513
      %1604 = vst.msk [vmem:[#allocation2 + $0x39] sm:$0xff] %vm1596, %v1515
      %1605 = vst.msk [vmem:[#allocation2 + $0x41] sm:$0xff] %vm1596, %v1517
      %1606 = vst.msk [vmem:[#allocation2 + $0x49] sm:$0xff] %vm1596, %v1519
      %1607 = vst.msk [vmem:[#allocation2 + $0x51] sm:$0xff] %vm1596, %v1521
      %1608 = vst.msk [vmem:[#allocation2 + $0x59] sm:$0xff] %vm1596, %v1523
      %1609 = vst.msk [vmem:[#allocation2 + $0x61] sm:$0xff] %vm1596, %v1525
      %1610 = vst.msk [vmem:[#allocation2 + $0x69] sm:$0xff] %vm1596, %v1527
      %1611 = vst.msk [vmem:[#allocation2 + $0x71] sm:$0xff] %vm1596, %v1529
      %1612 = vst.msk [vmem:[#allocation2 + $0x79] sm:$0xff] %vm1596, %v1531
      %1613 = vst.msk [vmem:[#allocation2 + $0x81] sm:$0xff] %vm1596, %v1533
      %1614 = vst.msk [vmem:[#allocation2 + $0x89] sm:$0xff] %vm1596, %v1535
      %1615 = vst.msk [vmem:[#allocation2 + $0x91] sm:$0xff] %vm1596, %v1537
      %1616 = vst.msk [vmem:[#allocation2 + $0x99] sm:$0xff] %vm1596, %v1539
      %1617 = vst.msk [vmem:[#allocation2 + $0xa1] sm:$0xff] %vm1596, %v1541
      %1618 = vst.msk [vmem:[#allocation2 + $0xa9] sm:$0xff] %vm1596, %v1543
      %1619 = vst.msk [vmem:[#allocation2 + $0xb1] sm:$0xff] %vm1596, %v1545
      %1620 = vst.msk [vmem:[#allocation2 + $0xb9] sm:$0xff] %vm1596, %v1547
      %1621 = vst.msk [vmem:[#allocation2 + $0xc1] sm:$0xff] %vm1596, %v1549
      %1622 = vst.msk [vmem:[#allocation2 + $0xc9] sm:$0xff] %vm1596, %v1551
      %1623 = vst.msk [vmem:[#allocation2 + $0xd1] sm:$0xff] %vm1596, %v1553
      %1624 = vst.msk [vmem:[#allocation2 + $0xd9] sm:$0xff] %vm1596, %v1555
      %1625 = vst.msk [vmem:[#allocation2 + $0xe1] sm:$0xff] %vm1596, %v1557
      %1626 = vst.msk [vmem:[#allocation2 + $0xe9] sm:$0xff] %vm1596, %v1559
      %1627 = vst.msk [vmem:[#allocation2 + $0xf1] sm:$0xff] %vm1596, %v1561
      %vm1628 = vcmask 129120
      %1629 = vst.msk [vmem:[#allocation2 + $0xf9] sm:$0x7f] %vm1628, %v1563
      %1632 = vrot.lane.b32.xlu0 %v412, 16
      %v1633 = vpop.permute.xlu0 %1632
      %1634 = vrot.lane.b32.xlu0 %v413, 16
      %v1635 = vpop.permute.xlu0 %1634
      %1636 = vrot.lane.b32.xlu0 %v414, 16
      %v1637 = vpop.permute.xlu0 %1636
      %1638 = vrot.lane.b32.xlu0 %v415, 16
      %v1639 = vpop.permute.xlu0 %1638
      %1640 = vrot.lane.b32.xlu0 %v416, 16
      %v1641 = vpop.permute.xlu0 %1640
      %1642 = vrot.lane.b32.xlu0 %v417, 16
      %v1643 = vpop.permute.xlu0 %1642
      %1644 = vrot.lane.b32.xlu0 %v418, 16
      %v1645 = vpop.permute.xlu0 %1644
      %1646 = vrot.lane.b32.xlu0 %v419, 16
      %v1647 = vpop.permute.xlu0 %1646
      %1648 = vrot.lane.b32.xlu0 %v420, 16
      %v1649 = vpop.permute.xlu0 %1648
      %1650 = vrot.lane.b32.xlu0 %v421, 16
      %v1651 = vpop.permute.xlu0 %1650
      %1652 = vrot.lane.b32.xlu0 %v422, 16
      %v1653 = vpop.permute.xlu0 %1652
      %1654 = vrot.lane.b32.xlu0 %v423, 16
      %v1655 = vpop.permute.xlu0 %1654
      %1656 = vrot.lane.b32.xlu0 %v424, 16
      %v1657 = vpop.permute.xlu0 %1656
      %1658 = vrot.lane.b32.xlu0 %v425, 16
      %v1659 = vpop.permute.xlu0 %1658
      %1660 = vrot.lane.b32.xlu0 %v426, 16
      %v1661 = vpop.permute.xlu0 %1660
      %1662 = vrot.lane.b32.xlu0 %v427, 16
      %v1663 = vpop.permute.xlu0 %1662
      %1664 = vrot.lane.b32.xlu0 %v428, 16
      %v1665 = vpop.permute.xlu0 %1664
      %1666 = vrot.lane.b32.xlu0 %v429, 16
      %v1667 = vpop.permute.xlu0 %1666
      %1668 = vrot.lane.b32.xlu0 %v430, 16
      %v1669 = vpop.permute.xlu0 %1668
      %1670 = vrot.lane.b32.xlu0 %v431, 16
      %v1671 = vpop.permute.xlu0 %1670
      %1672 = vrot.lane.b32.xlu0 %v432, 16
      %v1673 = vpop.permute.xlu0 %1672
      %1674 = vrot.lane.b32.xlu0 %v433, 16
      %v1675 = vpop.permute.xlu0 %1674
      %1676 = vrot.lane.b32.xlu0 %v434, 16
      %v1677 = vpop.permute.xlu0 %1676
      %1678 = vrot.lane.b32.xlu0 %v435, 16
      %v1679 = vpop.permute.xlu0 %1678
      %1680 = vrot.lane.b32.xlu0 %v436, 16
      %v1681 = vpop.permute.xlu0 %1680
      %1682 = vrot.lane.b32.xlu0 %v437, 16
      %v1683 = vpop.permute.xlu0 %1682
      %1684 = vrot.lane.b32.xlu0 %v438, 16
      %v1685 = vpop.permute.xlu0 %1684
      %1686 = vrot.lane.b32.xlu0 %v439, 16
      %v1687 = vpop.permute.xlu0 %1686
      %1688 = vrot.lane.b32.xlu0 %v440, 16
      %v1689 = vpop.permute.xlu0 %1688
      %1690 = vrot.lane.b32.xlu0 %v441, 16
      %v1691 = vpop.permute.xlu0 %1690
      %1692 = vrot.lane.b32.xlu0 %v442, 16
      %v1693 = vpop.permute.xlu0 %1692
      %1694 = vrot.lane.b32.xlu0 %v443, 16
      %v1695 = vpop.permute.xlu0 %1694
      %vm1728 = vcmask 162944
      %1729 = vst.msk [vmem:[#allocation2] sm:$0xff] %vm1728, %v1633
      %1730 = vst.msk [vmem:[#allocation2 + $0x8] sm:$0xff] %vm1728, %v1635
      %1731 = vst.msk [vmem:[#allocation2 + $0x10] sm:$0xff] %vm1728, %v1637
      %1732 = vst.msk [vmem:[#allocation2 + $0x18] sm:$0xff] %vm1728, %v1639
      %1733 = vst.msk [vmem:[#allocation2 + $0x20] sm:$0xff] %vm1728, %v1641
      %1734 = vst.msk [vmem:[#allocation2 + $0x28] sm:$0xff] %vm1728, %v1643
      %1735 = vst.msk [vmem:[#allocation2 + $0x30] sm:$0xff] %vm1728, %v1645
      %1736 = vst.msk [vmem:[#allocation2 + $0x38] sm:$0xff] %vm1728, %v1647
      %1737 = vst.msk [vmem:[#allocation2 + $0x40] sm:$0xff] %vm1728, %v1649
      %1738 = vst.msk [vmem:[#allocation2 + $0x48] sm:$0xff] %vm1728, %v1651
      %1739 = vst.msk [vmem:[#allocation2 + $0x50] sm:$0xff] %vm1728, %v1653
      %1740 = vst.msk [vmem:[#allocation2 + $0x58] sm:$0xff] %vm1728, %v1655
      %1741 = vst.msk [vmem:[#allocation2 + $0x60] sm:$0xff] %vm1728, %v1657
      %1742 = vst.msk [vmem:[#allocation2 + $0x68] sm:$0xff] %vm1728, %v1659
      %1743 = vst.msk [vmem:[#allocation2 + $0x70] sm:$0xff] %vm1728, %v1661
      %1744 = vst.msk [vmem:[#allocation2 + $0x78] sm:$0xff] %vm1728, %v1663
      %1745 = vst.msk [vmem:[#allocation2 + $0x80] sm:$0xff] %vm1728, %v1665
      %1746 = vst.msk [vmem:[#allocation2 + $0x88] sm:$0xff] %vm1728, %v1667
      %1747 = vst.msk [vmem:[#allocation2 + $0x90] sm:$0xff] %vm1728, %v1669
      %1748 = vst.msk [vmem:[#allocation2 + $0x98] sm:$0xff] %vm1728, %v1671
      %1749 = vst.msk [vmem:[#allocation2 + $0xa0] sm:$0xff] %vm1728, %v1673
      %1750 = vst.msk [vmem:[#allocation2 + $0xa8] sm:$0xff] %vm1728, %v1675
      %1751 = vst.msk [vmem:[#allocation2 + $0xb0] sm:$0xff] %vm1728, %v1677
      %1752 = vst.msk [vmem:[#allocation2 + $0xb8] sm:$0xff] %vm1728, %v1679
      %1753 = vst.msk [vmem:[#allocation2 + $0xc0] sm:$0xff] %vm1728, %v1681
      %1754 = vst.msk [vmem:[#allocation2 + $0xc8] sm:$0xff] %vm1728, %v1683
      %1755 = vst.msk [vmem:[#allocation2 + $0xd0] sm:$0xff] %vm1728, %v1685
      %1756 = vst.msk [vmem:[#allocation2 + $0xd8] sm:$0xff] %vm1728, %v1687
      %1757 = vst.msk [vmem:[#allocation2 + $0xe0] sm:$0xff] %vm1728, %v1689
      %1758 = vst.msk [vmem:[#allocation2 + $0xe8] sm:$0xff] %vm1728, %v1691
      %1759 = vst.msk [vmem:[#allocation2 + $0xf0] sm:$0xff] %vm1728, %v1693
      %1760 = vst.msk [vmem:[#allocation2 + $0xf8] sm:$0xff] %vm1728, %v1695
      %vm1761 = vcmask 188576
      %1762 = vst.msk [vmem:[#allocation2 + $0xff] sm:$0x1] %vm1761, 0.0
      %1764 = vrot.lane.b32.xlu0 %v1085, 20
      %v1765 = vpop.permute.xlu0 %1764
      %1766 = vrot.lane.b32.xlu0 %v1086, 20
      %v1767 = vpop.permute.xlu0 %1766
      %1768 = vrot.lane.b32.xlu0 %v1087, 20
      %v1769 = vpop.permute.xlu0 %1768
      %1770 = vrot.lane.b32.xlu0 %v1088, 20
      %v1771 = vpop.permute.xlu0 %1770
      %1772 = vrot.lane.b32.xlu0 %v1089, 20
      %v1773 = vpop.permute.xlu0 %1772
      %1774 = vrot.lane.b32.xlu0 %v1090, 20
      %v1775 = vpop.permute.xlu0 %1774
      %1776 = vrot.lane.b32.xlu0 %v1091, 20
      %v1777 = vpop.permute.xlu0 %1776
      %1778 = vrot.lane.b32.xlu0 %v1092, 20
      %v1779 = vpop.permute.xlu0 %1778
      %1780 = vrot.lane.b32.xlu0 %v1093, 20
      %v1781 = vpop.permute.xlu0 %1780
      %1782 = vrot.lane.b32.xlu0 %v1094, 20
      %v1783 = vpop.permute.xlu0 %1782
      %1784 = vrot.lane.b32.xlu0 %v1095, 20
      %v1785 = vpop.permute.xlu0 %1784
      %1786 = vrot.lane.b32.xlu0 %v1096, 20
      %v1787 = vpop.permute.xlu0 %1786
      %1788 = vrot.lane.b32.xlu0 %v1097, 20
      %v1789 = vpop.permute.xlu0 %1788
      %1790 = vrot.lane.b32.xlu0 %v1098, 20
      %v1791 = vpop.permute.xlu0 %1790
      %1792 = vrot.lane.b32.xlu0 %v1099, 20
      %v1793 = vpop.permute.xlu0 %1792
      %1794 = vrot.lane.b32.xlu0 %v1100, 20
      %v1795 = vpop.permute.xlu0 %1794
      %1796 = vrot.lane.b32.xlu0 %v1101, 20
      %v1797 = vpop.permute.xlu0 %1796
      %1798 = vrot.lane.b32.xlu0 %v1102, 20
      %v1799 = vpop.permute.xlu0 %1798
      %1800 = vrot.lane.b32.xlu0 %v1103, 20
      %v1801 = vpop.permute.xlu0 %1800
      %1802 = vrot.lane.b32.xlu0 %v1104, 20
      %v1803 = vpop.permute.xlu0 %1802
      %1804 = vrot.lane.b32.xlu0 %v1105, 20
      %v1805 = vpop.permute.xlu0 %1804
      %1806 = vrot.lane.b32.xlu0 %v1106, 20
      %v1807 = vpop.permute.xlu0 %1806
      %1808 = vrot.lane.b32.xlu0 %v1107, 20
      %v1809 = vpop.permute.xlu0 %1808
      %1810 = vrot.lane.b32.xlu0 %v1108, 20
      %v1811 = vpop.permute.xlu0 %1810
      %1812 = vrot.lane.b32.xlu0 %v1109, 20
      %v1813 = vpop.permute.xlu0 %1812
      %1814 = vrot.lane.b32.xlu0 %v1110, 20
      %v1815 = vpop.permute.xlu0 %1814
      %1816 = vrot.lane.b32.xlu0 %v1111, 20
      %v1817 = vpop.permute.xlu0 %1816
      %1818 = vrot.lane.b32.xlu0 %v1112, 20
      %v1819 = vpop.permute.xlu0 %1818
      %1820 = vrot.lane.b32.xlu0 %v1113, 20
      %v1821 = vpop.permute.xlu0 %1820
      %1822 = vrot.lane.b32.xlu0 %v1114, 20
      %v1823 = vpop.permute.xlu0 %1822
      %1824 = vrot.lane.b32.xlu0 %v1115, 20
      %v1825 = vpop.permute.xlu0 %1824
      %1826 = vrot.lane.b32.xlu0 %v1116, 20
      %v1827 = vpop.permute.xlu0 %1826
      %vm1860 = vcmask 195745
      %1861 = vst.msk [vmem:[#allocation2 - $0x1] sm:$0xfe] %vm1860, %v1765
      %vm1862 = vcmask 195744
      %1863 = vst.msk [vmem:[#allocation2 + $0x7] sm:$0xff] %vm1862, %v1767
      %1864 = vst.msk [vmem:[#allocation2 + $0xf] sm:$0xff] %vm1862, %v1769
      %1865 = vst.msk [vmem:[#allocation2 + $0x17] sm:$0xff] %vm1862, %v1771
      %1866 = vst.msk [vmem:[#allocation2 + $0x1f] sm:$0xff] %vm1862, %v1773
      %1867 = vst.msk [vmem:[#allocation2 + $0x27] sm:$0xff] %vm1862, %v1775
      %1868 = vst.msk [vmem:[#allocation2 + $0x2f] sm:$0xff] %vm1862, %v1777
      %1869 = vst.msk [vmem:[#allocation2 + $0x37] sm:$0xff] %vm1862, %v1779
      %1870 = vst.msk [vmem:[#allocation2 + $0x3f] sm:$0xff] %vm1862, %v1781
      %1871 = vst.msk [vmem:[#allocation2 + $0x47] sm:$0xff] %vm1862, %v1783
      %1872 = vst.msk [vmem:[#allocation2 + $0x4f] sm:$0xff] %vm1862, %v1785
      %1873 = vst.msk [vmem:[#allocation2 + $0x57] sm:$0xff] %vm1862, %v1787
      %1874 = vst.msk [vmem:[#allocation2 + $0x5f] sm:$0xff] %vm1862, %v1789
      %1875 = vst.msk [vmem:[#allocation2 + $0x67] sm:$0xff] %vm1862, %v1791
      %1876 = vst.msk [vmem:[#allocation2 + $0x6f] sm:$0xff] %vm1862, %v1793
      %1877 = vst.msk [vmem:[#allocation2 + $0x77] sm:$0xff] %vm1862, %v1795
      %1878 = vst.msk [vmem:[#allocation2 + $0x7f] sm:$0xff] %vm1862, %v1797
      %1879 = vst.msk [vmem:[#allocation2 + $0x87] sm:$0xff] %vm1862, %v1799
      %1880 = vst.msk [vmem:[#allocation2 + $0x8f] sm:$0xff] %vm1862, %v1801
      %1881 = vst.msk [vmem:[#allocation2 + $0x97] sm:$0xff] %vm1862, %v1803
      %1882 = vst.msk [vmem:[#allocation2 + $0x9f] sm:$0xff] %vm1862, %v1805
      %1883 = vst.msk [vmem:[#allocation2 + $0xa7] sm:$0xff] %vm1862, %v1807
      %1884 = vst.msk [vmem:[#allocation2 + $0xaf] sm:$0xff] %vm1862, %v1809
      %1885 = vst.msk [vmem:[#allocation2 + $0xb7] sm:$0xff] %vm1862, %v1811
      %1886 = vst.msk [vmem:[#allocation2 + $0xbf] sm:$0xff] %vm1862, %v1813
      %1887 = vst.msk [vmem:[#allocation2 + $0xc7] sm:$0xff] %vm1862, %v1815
      %1888 = vst.msk [vmem:[#allocation2 + $0xcf] sm:$0xff] %vm1862, %v1817
      %1889 = vst.msk [vmem:[#allocation2 + $0xd7] sm:$0xff] %vm1862, %v1819
      %1890 = vst.msk [vmem:[#allocation2 + $0xdf] sm:$0xff] %vm1862, %v1821
      %1891 = vst.msk [vmem:[#allocation2 + $0xe7] sm:$0xff] %vm1862, %v1823
      %1892 = vst.msk [vmem:[#allocation2 + $0xef] sm:$0xff] %vm1862, %v1825
      %1893 = vst.msk [vmem:[#allocation2 + $0xf7] sm:$0xff] %vm1862, %v1827
      %vm1894 = vcmask 228544
      %1895 = vst.msk [vmem:[#allocation2 + $0xf1] sm:$0xff] %vm1894, 0.0
      %vm1896 = vcmask 227520
      %1897 = vst.msk [vmem:[#allocation2 + $0xf9] sm:$0x7f] %vm1896, 0.0
      %1898 = vrot.lane.b32.xlu0 %v958, 24
      %v1899 = vpop.permute.xlu0 %1898
      %1900 = vrot.lane.b32.xlu0 %v959, 24
      %v1901 = vpop.permute.xlu0 %1900
      %1902 = vrot.lane.b32.xlu0 %v960, 24
      %v1903 = vpop.permute.xlu0 %1902
      %1904 = vrot.lane.b32.xlu0 %v961, 24
      %v1905 = vpop.permute.xlu0 %1904
      %1906 = vrot.lane.b32.xlu0 %v962, 24
      %v1907 = vpop.permute.xlu0 %1906
      %1908 = vrot.lane.b32.xlu0 %v963, 24
      %v1909 = vpop.permute.xlu0 %1908
      %1910 = vrot.lane.b32.xlu0 %v964, 24
      %v1911 = vpop.permute.xlu0 %1910
      %1912 = vrot.lane.b32.xlu0 %v965, 24
      %v1913 = vpop.permute.xlu0 %1912
      %1914 = vrot.lane.b32.xlu0 %v966, 24
      %v1915 = vpop.permute.xlu0 %1914
      %1916 = vrot.lane.b32.xlu0 %v967, 24
      %v1917 = vpop.permute.xlu0 %1916
      %1918 = vrot.lane.b32.xlu0 %v968, 24
      %v1919 = vpop.permute.xlu0 %1918
      %1920 = vrot.lane.b32.xlu0 %v969, 24
      %v1921 = vpop.permute.xlu0 %1920
      %1922 = vrot.lane.b32.xlu0 %v970, 24
      %v1923 = vpop.permute.xlu0 %1922
      %1924 = vrot.lane.b32.xlu0 %v971, 24
      %v1925 = vpop.permute.xlu0 %1924
      %1926 = vrot.lane.b32.xlu0 %v972, 24
      %v1927 = vpop.permute.xlu0 %1926
      %1928 = vrot.lane.b32.xlu0 %v973, 24
      %v1929 = vpop.permute.xlu0 %1928
      %1930 = vrot.lane.b32.xlu0 %v974, 24
      %v1931 = vpop.permute.xlu0 %1930
      %1932 = vrot.lane.b32.xlu0 %v975, 24
      %v1933 = vpop.permute.xlu0 %1932
      %1934 = vrot.lane.b32.xlu0 %v976, 24
      %v1935 = vpop.permute.xlu0 %1934
      %1936 = vrot.lane.b32.xlu0 %v977, 24
      %v1937 = vpop.permute.xlu0 %1936
      %1938 = vrot.lane.b32.xlu0 %v978, 24
      %v1939 = vpop.permute.xlu0 %1938
      %1940 = vrot.lane.b32.xlu0 %v979, 24
      %v1941 = vpop.permute.xlu0 %1940
      %1942 = vrot.lane.b32.xlu0 %v980, 24
      %v1943 = vpop.permute.xlu0 %1942
      %1944 = vrot.lane.b32.xlu0 %v981, 24
      %v1945 = vpop.permute.xlu0 %1944
      %1946 = vrot.lane.b32.xlu0 %v982, 24
      %v1947 = vpop.permute.xlu0 %1946
      %1948 = vrot.lane.b32.xlu0 %v983, 24
      %v1949 = vpop.permute.xlu0 %1948
      %1950 = vrot.lane.b32.xlu0 %v984, 24
      %v1951 = vpop.permute.xlu0 %1950
      %1952 = vrot.lane.b32.xlu0 %v985, 24
      %v1953 = vpop.permute.xlu0 %1952
      %1954 = vrot.lane.b32.xlu0 %v986, 24
      %v1955 = vpop.permute.xlu0 %1954
      %1956 = vrot.lane.b32.xlu0 %v987, 24
      %v1957 = vpop.permute.xlu0 %1956
      %1958 = vrot.lane.b32.xlu0 %v988, 24
      %v1959 = vpop.permute.xlu0 %1958
      %vm1991 = vcmask 228551
      %1992 = vst.msk [vmem:[#allocation2 - $0x7] sm:$0x80] %vm1991, %v1899
      %1993 = vst.msk [vmem:[#allocation2 + $0x1] sm:$0xff] %vm1894, %v1901
      %1994 = vst.msk [vmem:[#allocation2 + $0x9] sm:$0xff] %vm1894, %v1903
      %1995 = vst.msk [vmem:[#allocation2 + $0x11] sm:$0xff] %vm1894, %v1905
      %1996 = vst.msk [vmem:[#allocation2 + $0x19] sm:$0xff] %vm1894, %v1907
      %1997 = vst.msk [vmem:[#allocation2 + $0x21] sm:$0xff] %vm1894, %v1909
      %1998 = vst.msk [vmem:[#allocation2 + $0x29] sm:$0xff] %vm1894, %v1911
      %1999 = vst.msk [vmem:[#allocation2 + $0x31] sm:$0xff] %vm1894, %v1913
      %2000 = vst.msk [vmem:[#allocation2 + $0x39] sm:$0xff] %vm1894, %v1915
      %2001 = vst.msk [vmem:[#allocation2 + $0x41] sm:$0xff] %vm1894, %v1917
      %2002 = vst.msk [vmem:[#allocation2 + $0x49] sm:$0xff] %vm1894, %v1919
      %2003 = vst.msk [vmem:[#allocation2 + $0x51] sm:$0xff] %vm1894, %v1921
      %2004 = vst.msk [vmem:[#allocation2 + $0x59] sm:$0xff] %vm1894, %v1923
      %2005 = vst.msk [vmem:[#allocation2 + $0x61] sm:$0xff] %vm1894, %v1925
      %2006 = vst.msk [vmem:[#allocation2 + $0x69] sm:$0xff] %vm1894, %v1927
      %2007 = vst.msk [vmem:[#allocation2 + $0x71] sm:$0xff] %vm1894, %v1929
      %2008 = vst.msk [vmem:[#allocation2 + $0x79] sm:$0xff] %vm1894, %v1931
      %2009 = vst.msk [vmem:[#allocation2 + $0x81] sm:$0xff] %vm1894, %v1933
      %2010 = vst.msk [vmem:[#allocation2 + $0x89] sm:$0xff] %vm1894, %v1935
      %2011 = vst.msk [vmem:[#allocation2 + $0x91] sm:$0xff] %vm1894, %v1937
      %2012 = vst.msk [vmem:[#allocation2 + $0x99] sm:$0xff] %vm1894, %v1939
      %2013 = vst.msk [vmem:[#allocation2 + $0xa1] sm:$0xff] %vm1894, %v1941
      %2014 = vst.msk [vmem:[#allocation2 + $0xa9] sm:$0xff] %vm1894, %v1943
      %2015 = vst.msk [vmem:[#allocation2 + $0xb1] sm:$0xff] %vm1894, %v1945
      %2016 = vst.msk [vmem:[#allocation2 + $0xb9] sm:$0xff] %vm1894, %v1947
      %2017 = vst.msk [vmem:[#allocation2 + $0xc1] sm:$0xff] %vm1894, %v1949
      %2018 = vst.msk [vmem:[#allocation2 + $0xc9] sm:$0xff] %vm1894, %v1951
      %2019 = vst.msk [vmem:[#allocation2 + $0xd1] sm:$0xff] %vm1894, %v1953
      %2020 = vst.msk [vmem:[#allocation2 + $0xd9] sm:$0xff] %vm1894, %v1955
      %2021 = vst.msk [vmem:[#allocation2 + $0xe1] sm:$0xff] %vm1894, %v1957
      %2022 = vst.msk [vmem:[#allocation2 + $0xe9] sm:$0xff] %vm1894, %v1959
      %vm2023 = vcmask 261344
      %2024 = vst.msk [vmem:[#allocation2 + $0xf0] sm:$0xff] %vm2023, 0.0
      %2025 = vst.msk [vmem:[#allocation2 + $0xf8] sm:$0xff] %vm2023, 0.0
      %2026 = vrot.lane.b32.xlu0 %v414, 28
      %v2027 = vpop.permute.xlu0 %2026
      %2028 = vrot.lane.b32.xlu0 %v415, 28
      %v2029 = vpop.permute.xlu0 %2028
      %2030 = vrot.lane.b32.xlu0 %v416, 28
      %v2031 = vpop.permute.xlu0 %2030
      %2032 = vrot.lane.b32.xlu0 %v417, 28
      %v2033 = vpop.permute.xlu0 %2032
      %2034 = vrot.lane.b32.xlu0 %v418, 28
      %v2035 = vpop.permute.xlu0 %2034
      %2036 = vrot.lane.b32.xlu0 %v419, 28
      %v2037 = vpop.permute.xlu0 %2036
      %2038 = vrot.lane.b32.xlu0 %v420, 28
      %v2039 = vpop.permute.xlu0 %2038
      %2040 = vrot.lane.b32.xlu0 %v421, 28
      %v2041 = vpop.permute.xlu0 %2040
      %2042 = vrot.lane.b32.xlu0 %v422, 28
      %v2043 = vpop.permute.xlu0 %2042
      %2044 = vrot.lane.b32.xlu0 %v423, 28
      %v2045 = vpop.permute.xlu0 %2044
      %2046 = vrot.lane.b32.xlu0 %v424, 28
      %v2047 = vpop.permute.xlu0 %2046
      %2048 = vrot.lane.b32.xlu0 %v425, 28
      %v2049 = vpop.permute.xlu0 %2048
      %2050 = vrot.lane.b32.xlu0 %v426, 28
      %v2051 = vpop.permute.xlu0 %2050
      %2052 = vrot.lane.b32.xlu0 %v427, 28
      %v2053 = vpop.permute.xlu0 %2052
      %2054 = vrot.lane.b32.xlu0 %v428, 28
      %v2055 = vpop.permute.xlu0 %2054
      %2056 = vrot.lane.b32.xlu0 %v429, 28
      %v2057 = vpop.permute.xlu0 %2056
      %2058 = vrot.lane.b32.xlu0 %v430, 28
      %v2059 = vpop.permute.xlu0 %2058
      %2060 = vrot.lane.b32.xlu0 %v431, 28
      %v2061 = vpop.permute.xlu0 %2060
      %2062 = vrot.lane.b32.xlu0 %v432, 28
      %v2063 = vpop.permute.xlu0 %2062
      %2064 = vrot.lane.b32.xlu0 %v433, 28
      %v2065 = vpop.permute.xlu0 %2064
      %2066 = vrot.lane.b32.xlu0 %v434, 28
      %v2067 = vpop.permute.xlu0 %2066
      %2068 = vrot.lane.b32.xlu0 %v435, 28
      %v2069 = vpop.permute.xlu0 %2068
      %2070 = vrot.lane.b32.xlu0 %v436, 28
      %v2071 = vpop.permute.xlu0 %2070
      %2072 = vrot.lane.b32.xlu0 %v437, 28
      %v2073 = vpop.permute.xlu0 %2072
      %2074 = vrot.lane.b32.xlu0 %v438, 28
      %v2075 = vpop.permute.xlu0 %2074
      %2076 = vrot.lane.b32.xlu0 %v439, 28
      %v2077 = vpop.permute.xlu0 %2076
      %2078 = vrot.lane.b32.xlu0 %v440, 28
      %v2079 = vpop.permute.xlu0 %2078
      %2080 = vrot.lane.b32.xlu0 %v441, 28
      %v2081 = vpop.permute.xlu0 %2080
      %2082 = vrot.lane.b32.xlu0 %v442, 28
      %v2083 = vpop.permute.xlu0 %2082
      %2084 = vrot.lane.b32.xlu0 %v443, 28
      %v2085 = vpop.permute.xlu0 %2084
      %2116 = vst.msk [vmem:[#allocation2] sm:$0xff] %vm2023, %v2027
      %2117 = vst.msk [vmem:[#allocation2 + $0x8] sm:$0xff] %vm2023, %v2029
      %2118 = vst.msk [vmem:[#allocation2 + $0x10] sm:$0xff] %vm2023, %v2031
      %2119 = vst.msk [vmem:[#allocation2 + $0x18] sm:$0xff] %vm2023, %v2033
      %2120 = vst.msk [vmem:[#allocation2 + $0x20] sm:$0xff] %vm2023, %v2035
      %2121 = vst.msk [vmem:[#allocation2 + $0x28] sm:$0xff] %vm2023, %v2037
      %2122 = vst.msk [vmem:[#allocation2 + $0x30] sm:$0xff] %vm2023, %v2039
      %2123 = vst.msk [vmem:[#allocation2 + $0x38] sm:$0xff] %vm2023, %v2041
      %2124 = vst.msk [vmem:[#allocation2 + $0x40] sm:$0xff] %vm2023, %v2043
      %2125 = vst.msk [vmem:[#allocation2 + $0x48] sm:$0xff] %vm2023, %v2045
      %2126 = vst.msk [vmem:[#allocation2 + $0x50] sm:$0xff] %vm2023, %v2047
      %2127 = vst.msk [vmem:[#allocation2 + $0x58] sm:$0xff] %vm2023, %v2049
      %2128 = vst.msk [vmem:[#allocation2 + $0x60] sm:$0xff] %vm2023, %v2051
      %2129 = vst.msk [vmem:[#allocation2 + $0x68] sm:$0xff] %vm2023, %v2053
      %2130 = vst.msk [vmem:[#allocation2 + $0x70] sm:$0xff] %vm2023, %v2055
      %2131 = vst.msk [vmem:[#allocation2 + $0x78] sm:$0xff] %vm2023, %v2057
      %2132 = vst.msk [vmem:[#allocation2 + $0x80] sm:$0xff] %vm2023, %v2059
      %2133 = vst.msk [vmem:[#allocation2 + $0x88] sm:$0xff] %vm2023, %v2061
      %2134 = vst.msk [vmem:[#allocation2 + $0x90] sm:$0xff] %vm2023, %v2063
      %2135 = vst.msk [vmem:[#allocation2 + $0x98] sm:$0xff] %vm2023, %v2065
      %2136 = vst.msk [vmem:[#allocation2 + $0xa0] sm:$0xff] %vm2023, %v2067
      %2137 = vst.msk [vmem:[#allocation2 + $0xa8] sm:$0xff] %vm2023, %v2069
      %2138 = vst.msk [vmem:[#allocation2 + $0xb0] sm:$0xff] %vm2023, %v2071
      %2139 = vst.msk [vmem:[#allocation2 + $0xb8] sm:$0xff] %vm2023, %v2073
      %2140 = vst.msk [vmem:[#allocation2 + $0xc0] sm:$0xff] %vm2023, %v2075
      %2141 = vst.msk [vmem:[#allocation2 + $0xc8] sm:$0xff] %vm2023, %v2077
      %2142 = vst.msk [vmem:[#allocation2 + $0xd0] sm:$0xff] %vm2023, %v2079
      %2143 = vst.msk [vmem:[#allocation2 + $0xd8] sm:$0xff] %vm2023, %v2081
      %2144 = vst.msk [vmem:[#allocation2 + $0xe0] sm:$0xff] %vm2023, %v2083
      %2145 = vst.msk [vmem:[#allocation2 + $0xe8] sm:$0xff] %vm2023, %v2085
      %vm2146 = vcmask 294144
      %2147 = vst.msk [vmem:[#allocation2 + $0xef] sm:$0xff] %vm2146, 0.0
      %2148 = vst.msk [vmem:[#allocation2 + $0xf7] sm:$0xff] %vm2146, 0.0
      %vm2149 = vcmask 286976
      %2150 = vst.msk [vmem:[#allocation2 + $0xff] sm:$0x1] %vm2149, 0.0
      %2151 = vrot.lane.b32.xlu0 %v1087, 32
      %v2152 = vpop.permute.xlu0 %2151
      %2153 = vrot.lane.b32.xlu0 %v1088, 32
      %v2154 = vpop.permute.xlu0 %2153
      %2155 = vrot.lane.b32.xlu0 %v1089, 32
      %v2156 = vpop.permute.xlu0 %2155
      %2157 = vrot.lane.b32.xlu0 %v1090, 32
      %v2158 = vpop.permute.xlu0 %2157
      %2159 = vrot.lane.b32.xlu0 %v1091, 32
      %v2160 = vpop.permute.xlu0 %2159
      %2161 = vrot.lane.b32.xlu0 %v1092, 32
      %v2162 = vpop.permute.xlu0 %2161
      %2163 = vrot.lane.b32.xlu0 %v1093, 32
      %v2164 = vpop.permute.xlu0 %2163
      %2165 = vrot.lane.b32.xlu0 %v1094, 32
      %v2166 = vpop.permute.xlu0 %2165
      %2167 = vrot.lane.b32.xlu0 %v1095, 32
      %v2168 = vpop.permute.xlu0 %2167
      %2169 = vrot.lane.b32.xlu0 %v1096, 32
      %v2170 = vpop.permute.xlu0 %2169
      %2171 = vrot.lane.b32.xlu0 %v1097, 32
      %v2172 = vpop.permute.xlu0 %2171
      %2173 = vrot.lane.b32.xlu0 %v1098, 32
      %v2174 = vpop.permute.xlu0 %2173
      %2175 = vrot.lane.b32.xlu0 %v1099, 32
      %v2176 = vpop.permute.xlu0 %2175
      %2177 = vrot.lane.b32.xlu0 %v1100, 32
      %v2178 = vpop.permute.xlu0 %2177
      %2179 = vrot.lane.b32.xlu0 %v1101, 32
      %v2180 = vpop.permute.xlu0 %2179
      %2181 = vrot.lane.b32.xlu0 %v1102, 32
      %v2182 = vpop.permute.xlu0 %2181
      %2183 = vrot.lane.b32.xlu0 %v1103, 32
      %v2184 = vpop.permute.xlu0 %2183
      %2185 = vrot.lane.b32.xlu0 %v1104, 32
      %v2186 = vpop.permute.xlu0 %2185
      %2187 = vrot.lane.b32.xlu0 %v1105, 32
      %v2188 = vpop.permute.xlu0 %2187
      %2189 = vrot.lane.b32.xlu0 %v1106, 32
      %v2190 = vpop.permute.xlu0 %2189
      %2191 = vrot.lane.b32.xlu0 %v1107, 32
      %v2192 = vpop.permute.xlu0 %2191
      %2193 = vrot.lane.b32.xlu0 %v1108, 32
      %v2194 = vpop.permute.xlu0 %2193
      %2195 = vrot.lane.b32.xlu0 %v1109, 32
      %v2196 = vpop.permute.xlu0 %2195
      %2197 = vrot.lane.b32.xlu0 %v1110, 32
      %v2198 = vpop.permute.xlu0 %2197
      %2199 = vrot.lane.b32.xlu0 %v1111, 32
      %v2200 = vpop.permute.xlu0 %2199
      %2201 = vrot.lane.b32.xlu0 %v1112, 32
      %v2202 = vpop.permute.xlu0 %2201
      %2203 = vrot.lane.b32.xlu0 %v1113, 32
      %v2204 = vpop.permute.xlu0 %2203
      %2205 = vrot.lane.b32.xlu0 %v1114, 32
      %v2206 = vpop.permute.xlu0 %2205
      %2207 = vrot.lane.b32.xlu0 %v1115, 32
      %v2208 = vpop.permute.xlu0 %2207
      %2209 = vrot.lane.b32.xlu0 %v1116, 32
      %v2210 = vpop.permute.xlu0 %2209
      %vm2241 = vcmask 294145
      %2242 = vst.msk [vmem:[#allocation2 - $0x1] sm:$0xfe] %vm2241, %v2152
      %2243 = vst.msk [vmem:[#allocation2 + $0x7] sm:$0xff] %vm2146, %v2154
      %2244 = vst.msk [vmem:[#allocation2 + $0xf] sm:$0xff] %vm2146, %v2156
      %2245 = vst.msk [vmem:[#allocation2 + $0x17] sm:$0xff] %vm2146, %v2158
      %2246 = vst.msk [vmem:[#allocation2 + $0x1f] sm:$0xff] %vm2146, %v2160
      %2247 = vst.msk [vmem:[#allocation2 + $0x27] sm:$0xff] %vm2146, %v2162
      %2248 = vst.msk [vmem:[#allocation2 + $0x2f] sm:$0xff] %vm2146, %v2164
      %2249 = vst.msk [vmem:[#allocation2 + $0x37] sm:$0xff] %vm2146, %v2166
      %2250 = vst.msk [vmem:[#allocation2 + $0x3f] sm:$0xff] %vm2146, %v2168
      %2251 = vst.msk [vmem:[#allocation2 + $0x47] sm:$0xff] %vm2146, %v2170
      %2252 = vst.msk [vmem:[#allocation2 + $0x4f] sm:$0xff] %vm2146, %v2172
      %2253 = vst.msk [vmem:[#allocation2 + $0x57] sm:$0xff] %vm2146, %v2174
      %2254 = vst.msk [vmem:[#allocation2 + $0x5f] sm:$0xff] %vm2146, %v2176
      %2255 = vst.msk [vmem:[#allocation2 + $0x67] sm:$0xff] %vm2146, %v2178
      %2256 = vst.msk [vmem:[#allocation2 + $0x6f] sm:$0xff] %vm2146, %v2180
      %2257 = vst.msk [vmem:[#allocation2 + $0x77] sm:$0xff] %vm2146, %v2182
      %2258 = vst.msk [vmem:[#allocation2 + $0x7f] sm:$0xff] %vm2146, %v2184
      %2259 = vst.msk [vmem:[#allocation2 + $0x87] sm:$0xff] %vm2146, %v2186
      %2260 = vst.msk [vmem:[#allocation2 + $0x8f] sm:$0xff] %vm2146, %v2188
      %2261 = vst.msk [vmem:[#allocation2 + $0x97] sm:$0xff] %vm2146, %v2190
      %2262 = vst.msk [vmem:[#allocation2 + $0x9f] sm:$0xff] %vm2146, %v2192
      %2263 = vst.msk [vmem:[#allocation2 + $0xa7] sm:$0xff] %vm2146, %v2194
      %2264 = vst.msk [vmem:[#allocation2 + $0xaf] sm:$0xff] %vm2146, %v2196
      %2265 = vst.msk [vmem:[#allocation2 + $0xb7] sm:$0xff] %vm2146, %v2198
      %2266 = vst.msk [vmem:[#allocation2 + $0xbf] sm:$0xff] %vm2146, %v2200
      %2267 = vst.msk [vmem:[#allocation2 + $0xc7] sm:$0xff] %vm2146, %v2202
      %2268 = vst.msk [vmem:[#allocation2 + $0xcf] sm:$0xff] %vm2146, %v2204
      %2269 = vst.msk [vmem:[#allocation2 + $0xd7] sm:$0xff] %vm2146, %v2206
      %2270 = vst.msk [vmem:[#allocation2 + $0xdf] sm:$0xff] %vm2146, %v2208
      %2271 = vst.msk [vmem:[#allocation2 + $0xe7] sm:$0xff] %vm2146, %v2210
      %v2272 = vld [vmem:[#allocation2] sm:$0xff]
      %v2273 = vld [vmem:[#allocation2 + $0x8] sm:$0xff]
      %v2274 = vld [vmem:[#allocation2 + $0x10] sm:$0xff]
      %v2275 = vld [vmem:[#allocation2 + $0x18] sm:$0xff]
      %v2276 = vld [vmem:[#allocation2 + $0x20] sm:$0xff]
      %v2277 = vld [vmem:[#allocation2 + $0x28] sm:$0xff]
      %v2278 = vld [vmem:[#allocation2 + $0x30] sm:$0xff]
      %v2279 = vld [vmem:[#allocation2 + $0x38] sm:$0xff]
      %v2280 = vld [vmem:[#allocation2 + $0x40] sm:$0xff]
      %v2281 = vld [vmem:[#allocation2 + $0x48] sm:$0xff]
      %v2282 = vld [vmem:[#allocation2 + $0x50] sm:$0xff]
      %v2283 = vld [vmem:[#allocation2 + $0x58] sm:$0xff]
      %v2284 = vld [vmem:[#allocation2 + $0x60] sm:$0xff]
      %v2285 = vld [vmem:[#allocation2 + $0x68] sm:$0xff]
      %v2286 = vld [vmem:[#allocation2 + $0x70] sm:$0xff]
      %v2287 = vld [vmem:[#allocation2 + $0x78] sm:$0xff]
      %v2288 = vld [vmem:[#allocation2 + $0x80] sm:$0xff]
      %v2289 = vld [vmem:[#allocation2 + $0x88] sm:$0xff]
      %v2290 = vld [vmem:[#allocation2 + $0x90] sm:$0xff]
      %v2291 = vld [vmem:[#allocation2 + $0x98] sm:$0xff]
      %v2292 = vld [vmem:[#allocation2 + $0xa0] sm:$0xff]
      %v2293 = vld [vmem:[#allocation2 + $0xa8] sm:$0xff]
      %v2294 = vld [vmem:[#allocation2 + $0xb0] sm:$0xff]
      %v2295 = vld [vmem:[#allocation2 + $0xb8] sm:$0xff]
      %v2296 = vld [vmem:[#allocation2 + $0xc0] sm:$0xff]
      %v2297 = vld [vmem:[#allocation2 + $0xc8] sm:$0xff]
      %v2298 = vld [vmem:[#allocation2 + $0xd0] sm:$0xff]
      %v2299 = vld [vmem:[#allocation2 + $0xd8] sm:$0xff]
      %v2300 = vld [vmem:[#allocation2 + $0xe0] sm:$0xff]
      %v2301 = vld [vmem:[#allocation2 + $0xe8] sm:$0xff]
      %v2302 = vld [vmem:[#allocation2 + $0xf0] sm:$0xff]
      %v2303 = vld [vmem:[#allocation2 + $0xf8] sm:$0xff]
      %v2304 = vpack.c.bf16 %v2273, %v2272
      %v2305 = vpack.c.bf16 %v2275, %v2274
      %v2306 = vpack.c.bf16 %v2277, %v2276
      %v2307 = vpack.c.bf16 %v2279, %v2278
      %v2308 = vpack.c.bf16 %v2281, %v2280
      %v2309 = vpack.c.bf16 %v2283, %v2282
      %v2310 = vpack.c.bf16 %v2285, %v2284
      %v2311 = vpack.c.bf16 %v2287, %v2286
      %v2312 = vpack.c.bf16 %v2289, %v2288
      %v2313 = vpack.c.bf16 %v2291, %v2290
      %v2314 = vpack.c.bf16 %v2293, %v2292
      %v2315 = vpack.c.bf16 %v2295, %v2294
      %v2316 = vpack.c.bf16 %v2297, %v2296
      %v2317 = vpack.c.bf16 %v2299, %v2298
      %v2318 = vpack.c.bf16 %v2301, %v2300
      %v2319 = vpack.c.bf16 %v2303, %v2302
      %v2320 = vld [vmem:[%s4] sm:$0x1]
      %v2322 = vlaneseq
      %v2323 = vshrl.u32 %v2322, 7
      %v2324 = vsub.s32 0, %v2323
      %v2325 = vrot.slane %v2320, %v2324
      %v2332 = vunpack.c.l.b16 %v331
      %v2333 = vunpack.c.l.b16 %v332
      %v2334 = vunpack.c.l.b16 %v333
      %v2335 = vunpack.c.l.b16 %v334
      %v2336 = vunpack.c.l.b16 %v335
      %v2337 = vpack.c.b16 %v2333, %v2332
      %v2338 = vpack.c.b16 %v2335, %v2334
      %v2339 = vpack.c.b16 %v2336, %v2336
      %vm2342 = vcmask 293888
      %v2344 = vsel %vm2342, %v2304, 0
      %v2347 = vsel %vm2342, %v2305, 0
      %v2350 = vsel %vm2342, %v2306, 0
      %v2353 = vsel %vm2342, %v2307, 0
      %v2356 = vsel %vm2342, %v2308, 0
      %v2359 = vsel %vm2342, %v2309, 0
      %v2362 = vsel %vm2342, %v2310, 0
      %v2365 = vsel %vm2342, %v2311, 0
      %v2368 = vsel %vm2342, %v2312, 0
      %v2371 = vsel %vm2342, %v2313, 0
      %v2374 = vsel %vm2342, %v2314, 0
      %v2377 = vsel %vm2342, %v2315, 0
      %v2380 = vsel %vm2342, %v2316, 0
      %v2383 = vsel %vm2342, %v2317, 0
      %v2386 = vsel %vm2342, %v2318, 0
      %v2389 = vsel %vm2342, %v2319, 0
      %vm2391 = vcmask 1041408
      %v2393 = vsel %vm2391, %v2339, 0
      %2395 = vmatprep.subr.bf16.mxu0 0
      %2396 = vmatpush1.bf16.msra.mxu0 %v2337
      %2397 = vmatprep.subr.bf16.mxu0 0
      %2398 = vmatpush1.bf16.msra.mxu0 %v2338
      %2399 = vmatprep.subr.bf16.mxu0 0
      %2400 = vmatpush1.bf16.msra.mxu0 %v2393
      %2401 = vmatprep.subr.bf16.mxu0 0
      %2402 = vmatpush1.bf16.msra.mxu0 0
      %2403 = vmatprep.subr.bf16.mxu0 0
      %2404 = vmatpush1.bf16.msra.mxu0 0
      %2405 = vmatprep.subr.bf16.mxu0 0
      %2406 = vmatpush1.bf16.msra.mxu0 0
      %2407 = vmatprep.subr.bf16.mxu0 0
      %2408 = vmatpush1.bf16.msra.mxu0 0
      %2409 = vmatprep.subr.bf16.mxu0 0
      %2410 = vmatpush1.bf16.msra.mxu0 0
      %2411 = vmatprep.subr.bf16.mxu0 0
      %2412 = vmatpush1.bf16.msra.mxu0 0
      %2413 = vmatprep.subr.bf16.mxu0 0
      %2414 = vmatpush1.bf16.msra.mxu0 0
      %2415 = vmatprep.subr.bf16.mxu0 0
      %2416 = vmatpush1.bf16.msra.mxu0 0
      %2417 = vmatprep.subr.bf16.mxu0 0
      %2418 = vmatpush1.bf16.msra.mxu0 0
      %2419 = vmatprep.subr.bf16.mxu0 0
      %2420 = vmatpush1.bf16.msra.mxu0 0
      %2421 = vmatprep.subr.bf16.mxu0 0
      %2422 = vmatpush1.bf16.msra.mxu0 0
      %2423 = vmatprep.subr.bf16.mxu0 0
      %2424 = vmatpush1.bf16.msra.mxu0 0
      %2425 = vmatprep.subr.bf16.mxu0 0
      %2426 = vmatpush1.bf16.msra.mxu0 0
      %2427 = vmatprep.mubr.bf16.mxu0 0
      %2428 = vmatmul.mubr.bf16.gmra.mrb[0].mxu0 %v2344
      %v2429 = vpop.f32.mrb[0].mxu0
      %v2430 = vadd.f32 %v2325, %v2429
      %v2431 = vpop.f32.mrb[0].mxu0
      %v2432 = vpop.f32.mrb[0].mxu0
      %v2433 = vadd.f32 %v2325, %v2432
      %v2434 = vpop.f32.mrb[0].mxu0
      %2435 = vmatprep.mubr.bf16.mxu0 0
      %2436 = vmatmul.mubr.bf16.gmra.mrb[0].mxu0 %v2347
      %v2437 = vpop.f32.mrb[0].mxu0
      %v2438 = vadd.f32 %v2325, %v2437
      %v2439 = vpop.f32.mrb[0].mxu0
      %v2440 = vpop.f32.mrb[0].mxu0
      %v2441 = vadd.f32 %v2325, %v2440
      %v2442 = vpop.f32.mrb[0].mxu0
      %2443 = vmatprep.mubr.bf16.mxu0 0
      %2444 = vmatmul.mubr.bf16.gmra.mrb[0].mxu0 %v2350
      %v2445 = vpop.f32.mrb[0].mxu0
      %v2446 = vadd.f32 %v2325, %v2445
      %v2447 = vpop.f32.mrb[0].mxu0
      %v2448 = vpop.f32.mrb[0].mxu0
      %v2449 = vadd.f32 %v2325, %v2448
      %v2450 = vpop.f32.mrb[0].mxu0
      %2451 = vmatprep.mubr.bf16.mxu0 0
      %2452 = vmatmul.mubr.bf16.gmra.mrb[0].mxu0 %v2353
      %v2453 = vpop.f32.mrb[0].mxu0
      %v2454 = vadd.f32 %v2325, %v2453
      %v2455 = vpop.f32.mrb[0].mxu0
      %v2456 = vpop.f32.mrb[0].mxu0
      %v2457 = vadd.f32 %v2325, %v2456
      %v2458 = vpop.f32.mrb[0].mxu0
      %2459 = vmatprep.mubr.bf16.mxu0 0
      %2460 = vmatmul.mubr.bf16.gmra.mrb[0].mxu0 %v2356
      %v2461 = vpop.f32.mrb[0].mxu0
      %v2462 = vadd.f32 %v2325, %v2461
      %v2463 = vpop.f32.mrb[0].mxu0
      %v2464 = vpop.f32.mrb[0].mxu0
      %v2465 = vadd.f32 %v2325, %v2464
      %v2466 = vpop.f32.mrb[0].mxu0
      %2467 = vmatprep.mubr.bf16.mxu0 0
      %2468 = vmatmul.mubr.bf16.gmra.mrb[0].mxu0 %v2359
      %v2469 = vpop.f32.mrb[0].mxu0
      %v2470 = vadd.f32 %v2325, %v2469
      %v2471 = vpop.f32.mrb[0].mxu0
      %v2472 = vpop.f32.mrb[0].mxu0
      %v2473 = vadd.f32 %v2325, %v2472
      %v2474 = vpop.f32.mrb[0].mxu0
      %2475 = vmatprep.mubr.bf16.mxu0 0
      %2476 = vmatmul.mubr.bf16.gmra.mrb[0].mxu0 %v2362
      %v2477 = vpop.f32.mrb[0].mxu0
      %v2478 = vadd.f32 %v2325, %v2477
      %v2479 = vpop.f32.mrb[0].mxu0
      %v2480 = vpop.f32.mrb[0].mxu0
      %v2481 = vadd.f32 %v2325, %v2480
      %v2482 = vpop.f32.mrb[0].mxu0
      %2483 = vmatprep.mubr.bf16.mxu0 0
      %2484 = vmatmul.mubr.bf16.gmra.mrb[0].mxu0 %v2365
      %v2485 = vpop.f32.mrb[0].mxu0
      %v2486 = vadd.f32 %v2325, %v2485
      %v2487 = vpop.f32.mrb[0].mxu0
      %v2488 = vpop.f32.mrb[0].mxu0
      %v2489 = vadd.f32 %v2325, %v2488
      %v2490 = vpop.f32.mrb[0].mxu0
      %2491 = vmatprep.mubr.bf16.mxu0 0
      %2492 = vmatmul.mubr.bf16.gmra.mrb[0].mxu0 %v2368
      %v2493 = vpop.f32.mrb[0].mxu0
      %v2494 = vadd.f32 %v2325, %v2493
      %v2495 = vpop.f32.mrb[0].mxu0
      %v2496 = vpop.f32.mrb[0].mxu0
      %v2497 = vadd.f32 %v2325, %v2496
      %v2498 = vpop.f32.mrb[0].mxu0
      %2499 = vmatprep.mubr.bf16.mxu0 0
      %2500 = vmatmul.mubr.bf16.gmra.mrb[0].mxu0 %v2371
      %v2501 = vpop.f32.mrb[0].mxu0
      %v2502 = vadd.f32 %v2325, %v2501
      %v2503 = vpop.f32.mrb[0].mxu0
      %v2504 = vpop.f32.mrb[0].mxu0
      %v2505 = vadd.f32 %v2325, %v2504
      %v2506 = vpop.f32.mrb[0].mxu0
      %2507 = vmatprep.mubr.bf16.mxu0 0
      %2508 = vmatmul.mubr.bf16.gmra.mrb[0].mxu0 %v2374
      %v2509 = vpop.f32.mrb[0].mxu0
      %v2510 = vadd.f32 %v2325, %v2509
      %v2511 = vpop.f32.mrb[0].mxu0
      %v2512 = vpop.f32.mrb[0].mxu0
      %v2513 = vadd.f32 %v2325, %v2512
      %v2514 = vpop.f32.mrb[0].mxu0
      %2515 = vmatprep.mubr.bf16.mxu0 0
      %2516 = vmatmul.mubr.bf16.gmra.mrb[0].mxu0 %v2377
      %v2517 = vpop.f32.mrb[0].mxu0
      %v2518 = vadd.f32 %v2325, %v2517
      %v2519 = vpop.f32.mrb[0].mxu0
      %v2520 = vpop.f32.mrb[0].mxu0
      %v2521 = vadd.f32 %v2325, %v2520
      %v2522 = vpop.f32.mrb[0].mxu0
      %2523 = vmatprep.mubr.bf16.mxu0 0
      %2524 = vmatmul.mubr.bf16.gmra.mrb[0].mxu0 %v2380
      %v2525 = vpop.f32.mrb[0].mxu0
      %v2526 = vadd.f32 %v2325, %v2525
      %v2527 = vpop.f32.mrb[0].mxu0
      %v2528 = vpop.f32.mrb[0].mxu0
      %v2529 = vadd.f32 %v2325, %v2528
      %v2530 = vpop.f32.mrb[0].mxu0
      %2531 = vmatprep.mubr.bf16.mxu0 0
      %2532 = vmatmul.mubr.bf16.gmra.mrb[0].mxu0 %v2383
      %v2533 = vpop.f32.mrb[0].mxu0
      %v2534 = vadd.f32 %v2325, %v2533
      %v2535 = vpop.f32.mrb[0].mxu0
      %v2536 = vpop.f32.mrb[0].mxu0
      %v2537 = vadd.f32 %v2325, %v2536
      %v2538 = vpop.f32.mrb[0].mxu0
      %2539 = vmatprep.mubr.bf16.mxu0 0
      %2540 = vmatmul.mubr.bf16.gmra.mrb[0].mxu0 %v2386
      %v2541 = vpop.f32.mrb[0].mxu0
      %v2542 = vadd.f32 %v2325, %v2541
      %v2543 = vpop.f32.mrb[0].mxu0
      %v2544 = vpop.f32.mrb[0].mxu0
      %v2545 = vadd.f32 %v2325, %v2544
      %v2546 = vpop.f32.mrb[0].mxu0
      %2547 = vmatprep.mubr.bf16.mxu0 0
      %2548 = vmatmul.mubr.bf16.gmra.mrb[0].mxu0 %v2389
      %v2549 = vpop.f32.mrb[0].mxu0
      %v2550 = vadd.f32 %v2325, %v2549
      %v2551 = vpop.f32.mrb[0].mxu0
      %v2552 = vpop.f32.mrb[0].mxu0
      %v2553 = vadd.f32 %v2325, %v2552
      %v2554 = vpop.f32.mrb[0].mxu0
      %2555 = vdwg.mxu0
      %2556 = vst [vmem:[%s289] sm:$0xff] %v2430
      %2557 = vst [vmem:[%s289 + $0x8] sm:$0xff] %v2433
      %2558 = vst [vmem:[%s289 + $0x10] sm:$0xff] %v2438
      %2559 = vst [vmem:[%s289 + $0x18] sm:$0xff] %v2441
      %2560 = vst [vmem:[%s289 + $0x20] sm:$0xff] %v2446
      %2561 = vst [vmem:[%s289 + $0x28] sm:$0xff] %v2449
      %2562 = vst [vmem:[%s289 + $0x30] sm:$0xff] %v2454
      %2563 = vst [vmem:[%s289 + $0x38] sm:$0xff] %v2457
      %2564 = vst [vmem:[%s289 + $0x40] sm:$0xff] %v2462
      %2565 = vst [vmem:[%s289 + $0x48] sm:$0xff] %v2465
      %2566 = vst [vmem:[%s289 + $0x50] sm:$0xff] %v2470
      %2567 = vst [vmem:[%s289 + $0x58] sm:$0xff] %v2473
      %2568 = vst [vmem:[%s289 + $0x60] sm:$0xff] %v2478
      %2569 = vst [vmem:[%s289 + $0x68] sm:$0xff] %v2481
      %2570 = vst [vmem:[%s289 + $0x70] sm:$0xff] %v2486
      %2571 = vst [vmem:[%s289 + $0x78] sm:$0xff] %v2489
      %2572 = vst [vmem:[%s289 + $0x80] sm:$0xff] %v2494
      %2573 = vst [vmem:[%s289 + $0x88] sm:$0xff] %v2497
      %2574 = vst [vmem:[%s289 + $0x90] sm:$0xff] %v2502
      %2575 = vst [vmem:[%s289 + $0x98] sm:$0xff] %v2505
      %2576 = vst [vmem:[%s289 + $0xa0] sm:$0xff] %v2510
      %2577 = vst [vmem:[%s289 + $0xa8] sm:$0xff] %v2513
      %2578 = vst [vmem:[%s289 + $0xb0] sm:$0xff] %v2518
      %2579 = vst [vmem:[%s289 + $0xb8] sm:$0xff] %v2521
      %2580 = vst [vmem:[%s289 + $0xc0] sm:$0xff] %v2526
      %2581 = vst [vmem:[%s289 + $0xc8] sm:$0xff] %v2529
      %2582 = vst [vmem:[%s289 + $0xd0] sm:$0xff] %v2534
      %2583 = vst [vmem:[%s289 + $0xd8] sm:$0xff] %v2537
      %2584 = vst [vmem:[%s289 + $0xe0] sm:$0xff] %v2542
      %2585 = vst [vmem:[%s289 + $0xe8] sm:$0xff] %v2545
      %2586 = vst [vmem:[%s289 + $0xf0] sm:$0xff] %v2550
      %2587 = vst [vmem:[%s289 + $0xf8] sm:$0xff] %v2553
      %v2588 = vadd.f32 %v2430, %v2433
      %v2589 = vadd.f32 %v2588, %v2438
      %v2590 = vadd.f32 %v2589, %v2441
      %v2591 = vadd.f32 %v2590, %v2446
      %v2592 = vadd.f32 %v2591, %v2449
      %v2593 = vadd.f32 %v2592, %v2454
      %v2594 = vadd.f32 %v2593, %v2457
      %v2595 = vadd.f32 %v2594, %v2462
      %v2596 = vadd.f32 %v2595, %v2465
      %v2597 = vadd.f32 %v2596, %v2470
      %v2598 = vadd.f32 %v2597, %v2473
      %v2599 = vadd.f32 %v2598, %v2478
      %v2600 = vadd.f32 %v2599, %v2481
      %v2601 = vadd.f32 %v2600, %v2486
      %v2602 = vadd.f32 %v2601, %v2489
      %v2603 = vadd.f32 %v2602, %v2494
      %v2604 = vadd.f32 %v2603, %v2497
      %v2605 = vadd.f32 %v2604, %v2502
      %v2606 = vadd.f32 %v2605, %v2505
      %v2607 = vadd.f32 %v2606, %v2510
      %v2608 = vadd.f32 %v2607, %v2513
      %v2609 = vadd.f32 %v2608, %v2518
      %v2610 = vadd.f32 %v2609, %v2521
      %v2611 = vadd.f32 %v2610, %v2526
      %v2612 = vadd.f32 %v2611, %v2529
      %v2613 = vadd.f32 %v2612, %v2534
      %v2614 = vadd.f32 %v2613, %v2537
      %v2615 = vadd.f32 %v2614, %v2542
      %v2616 = vadd.f32 %v2615, %v2545
      %v2617 = vadd.f32 %v2616, %v2550
      %v2618 = vadd.f32 %v2617, %v2553
      %v2619 = vrot.slane %v2618, 4
      %v2620 = vadd.f32 %v2618, %v2619
      %v2621 = vrot.slane %v2620, 2
      %v2622 = vadd.f32 %v2620, %v2621
      %v2623 = vrot.slane %v2622, 1
      %v2624 = vadd.f32 %v2622, %v2623
      %v2625 = vmul.f32 %v2624, 0.00390625
      %2626 = vst [vmem:[%s292] sm:$0x1] %v2624
      %v2627 = vsub.f32 %v2430, %v2625
      %v2628 = vsub.f32 %v2433, %v2625
      %v2629 = vsub.f32 %v2438, %v2625
      %v2630 = vsub.f32 %v2441, %v2625
      %v2631 = vsub.f32 %v2446, %v2625
      %v2632 = vsub.f32 %v2449, %v2625
      %v2633 = vsub.f32 %v2454, %v2625
      %v2634 = vsub.f32 %v2457, %v2625
      %v2635 = vsub.f32 %v2462, %v2625
      %v2636 = vsub.f32 %v2465, %v2625
      %v2637 = vsub.f32 %v2470, %v2625
      %v2638 = vsub.f32 %v2473, %v2625
      %v2639 = vsub.f32 %v2478, %v2625
      %v2640 = vsub.f32 %v2481, %v2625
      %v2641 = vsub.f32 %v2486, %v2625
      %v2642 = vsub.f32 %v2489, %v2625
      %v2643 = vsub.f32 %v2494, %v2625
      %v2644 = vsub.f32 %v2497, %v2625
      %v2645 = vsub.f32 %v2502, %v2625
      %v2646 = vsub.f32 %v2505, %v2625
      %v2647 = vsub.f32 %v2510, %v2625
      %v2648 = vsub.f32 %v2513, %v2625
      %v2649 = vsub.f32 %v2518, %v2625
      %v2650 = vsub.f32 %v2521, %v2625
      %v2651 = vsub.f32 %v2526, %v2625
      %v2652 = vsub.f32 %v2529, %v2625
      %v2653 = vsub.f32 %v2534, %v2625
      %v2654 = vsub.f32 %v2537, %v2625
      %v2655 = vsub.f32 %v2542, %v2625
      %v2656 = vsub.f32 %v2545, %v2625
      %v2657 = vsub.f32 %v2550, %v2625
      %v2658 = vsub.f32 %v2553, %v2625
      %v2659 = vmul.f32 %v2627, %v2627
      %v2660 = vmul.f32 %v2628, %v2628
      %v2661 = vmul.f32 %v2629, %v2629
      %v2662 = vmul.f32 %v2630, %v2630
      %v2663 = vmul.f32 %v2631, %v2631
      %v2664 = vmul.f32 %v2632, %v2632
      %v2665 = vmul.f32 %v2633, %v2633
      %v2666 = vmul.f32 %v2634, %v2634
      %v2667 = vmul.f32 %v2635, %v2635
      %v2668 = vmul.f32 %v2636, %v2636
      %v2669 = vmul.f32 %v2637, %v2637
      %v2670 = vmul.f32 %v2638, %v2638
      %v2671 = vmul.f32 %v2639, %v2639
      %v2672 = vmul.f32 %v2640, %v2640
      %v2673 = vmul.f32 %v2641, %v2641
      %v2674 = vmul.f32 %v2642, %v2642
      %v2675 = vmul.f32 %v2643, %v2643
      %v2676 = vmul.f32 %v2644, %v2644
      %v2677 = vmul.f32 %v2645, %v2645
      %v2678 = vmul.f32 %v2646, %v2646
      %v2679 = vmul.f32 %v2647, %v2647
      %v2680 = vmul.f32 %v2648, %v2648
      %v2681 = vmul.f32 %v2649, %v2649
      %v2682 = vmul.f32 %v2650, %v2650
      %v2683 = vmul.f32 %v2651, %v2651
      %v2684 = vmul.f32 %v2652, %v2652
      %v2685 = vmul.f32 %v2653, %v2653
      %v2686 = vmul.f32 %v2654, %v2654
      %v2687 = vmul.f32 %v2655, %v2655
      %v2688 = vmul.f32 %v2656, %v2656
      %v2689 = vmul.f32 %v2657, %v2657
      %v2690 = vmul.f32 %v2658, %v2658
      %v2691 = vadd.f32 %v2659, %v2660
      %v2692 = vadd.f32 %v2691, %v2661
      %v2693 = vadd.f32 %v2692, %v2662
      %v2694 = vadd.f32 %v2693, %v2663
      %v2695 = vadd.f32 %v2694, %v2664
      %v2696 = vadd.f32 %v2695, %v2665
      %v2697 = vadd.f32 %v2696, %v2666
      %v2698 = vadd.f32 %v2697, %v2667
      %v2699 = vadd.f32 %v2698, %v2668
      %v2700 = vadd.f32 %v2699, %v2669
      %v2701 = vadd.f32 %v2700, %v2670
      %v2702 = vadd.f32 %v2701, %v2671
      %v2703 = vadd.f32 %v2702, %v2672
      %v2704 = vadd.f32 %v2703, %v2673
      %v2705 = vadd.f32 %v2704, %v2674
      %v2706 = vadd.f32 %v2705, %v2675
      %v2707 = vadd.f32 %v2706, %v2676
      %v2708 = vadd.f32 %v2707, %v2677
      %v2709 = vadd.f32 %v2708, %v2678
      %v2710 = vadd.f32 %v2709, %v2679
      %v2711 = vadd.f32 %v2710, %v2680
      %v2712 = vadd.f32 %v2711, %v2681
      %v2713 = vadd.f32 %v2712, %v2682
      %v2714 = vadd.f32 %v2713, %v2683
      %v2715 = vadd.f32 %v2714, %v2684
      %v2716 = vadd.f32 %v2715, %v2685
      %v2717 = vadd.f32 %v2716, %v2686
      %v2718 = vadd.f32 %v2717, %v2687
      %v2719 = vadd.f32 %v2718, %v2688
      %v2720 = vadd.f32 %v2719, %v2689
      %v2721 = vadd.f32 %v2720, %v2690
      %v2722 = vrot.slane %v2721, 4
      %v2723 = vadd.f32 %v2721, %v2722
      %v2724 = vrot.slane %v2723, 2
      %v2725 = vadd.f32 %v2723, %v2724
      %v2726 = vrot.slane %v2725, 1
      %v2727 = vadd.f32 %v2725, %v2726
      %2728 = vst [vmem:[%s295] sm:$0x1] %v2727
      %p2729 = scmp.lt.s32.totalorder %s19, 1
      %s2730 = scalar_select %p2729, %s19, 1
      %s2731 = smul.addr %s2730, 32
      %s2732 = smul.addr %s2731, 8
      %s2733 = scalar_lea.vmem %s5, %s2732
      %p2734 = scmp.lt.s32.totalorder %s19, 1
      %s2735 = scalar_select %p2734, %s19, 1
      %s2736 = scalar_lea.vmem %s6, %s2735
      %p2737 = scmp.lt.s32.totalorder %s19, 1
      %s2738 = scalar_select %p2737, %s19, 1
      %s2739 = scalar_lea.vmem %s7, %s2738
      // Predicated region
      $region41: #{basic_block_curve_forward.2} parent=39 // pred_check
        %p2740 = pneg %p147
      $region42: #{basic_block_curve_forward.2} parent=39 // pred_check_branch
        %2742 = sbr.rel (%p2740) target = $region44
      $region43: #{basic_block_curve_forward.2} parent=39 // pred_region
        _
      $region44: #{basic_block_curve_forward.2} parent=39 // pred_fallthru
        _
      // Predicated region
      $region45: #{basic_block_curve_forward.2} parent=39 // pred_check
        %p2743 = pneg %p173
      $region46: #{basic_block_curve_forward.2} parent=39 // pred_check_branch
        %2745 = sbr.rel (%p2743) target = $region48
      $region47: #{basic_block_curve_forward.2} parent=39 // pred_region
        _
      $region48: #{basic_block_curve_forward.2} parent=39 // pred_fallthru
        _
      // Predicated region
      $region49: #{basic_block_curve_forward.2} parent=39 // pred_check
        %p2746 = pneg %p199
      $region50: #{basic_block_curve_forward.2} parent=39 // pred_check_branch
        %2748 = sbr.rel (%p2746) target = $region52
      $region51: #{basic_block_curve_forward.2} parent=39 // pred_region
        _
      $region52: #{basic_block_curve_forward.2} parent=39 // pred_fallthru
        _
    $region40: #{basic_block_curve_forward.2} parent=5 // pred_fallthru
      _
    %p2749 = scmp.le.s32.totalorder 2, %s14
    // Predicated region
    $region53: #{basic_block_curve_forward.2} parent=5 // pred_check
      %p2750 = pneg %p2749
    $region54: #{basic_block_curve_forward.2} parent=5 // pred_check_branch
      %2752 = sbr.rel (%p2750) target = $region56
    $region55: #{basic_block_curve_forward.2} parent=5 // pred_region
      %s2753 = ssub.s32 %s14, 2
      // Predicated region
      $region57: #{basic_block_curve_forward.2} parent=55 // pred_check
        %p2754 = pneg %p153
      $region58: #{basic_block_curve_forward.2} parent=55 // pred_check_branch
        %2756 = sbr.rel (%p2754) target = $region60
      $region59: #{basic_block_curve_forward.2} parent=55 // pred_region
        %p2757 = scmp.lt.s32.totalorder %s20, 1
        %s2758 = scalar_select %p2757, %s20, 1
        %s2759 = smul.addr %s2758, 32
        %s2760 = smul.addr %s2759, 8
        %s2761 = scalar_lea.vmem %s5, %s2760
      $region60: #{basic_block_curve_forward.2} parent=55 // pred_fallthru
        _
      // Predicated region
      $region61: #{basic_block_curve_forward.2} parent=55 // pred_check
        %p2762 = pneg %p179
      $region62: #{basic_block_curve_forward.2} parent=55 // pred_check_branch
        %2764 = sbr.rel (%p2762) target = $region64
      $region63: #{basic_block_curve_forward.2} parent=55 // pred_region
        %p2765 = scmp.lt.s32.totalorder %s20, 1
        %s2766 = scalar_select %p2765, %s20, 1
        %s2767 = scalar_lea.vmem %s6, %s2766
      $region64: #{basic_block_curve_forward.2} parent=55 // pred_fallthru
        _
      // Predicated region
      $region65: #{basic_block_curve_forward.2} parent=55 // pred_check
        %p2768 = pneg %p205
      $region66: #{basic_block_curve_forward.2} parent=55 // pred_check_branch
        %2770 = sbr.rel (%p2768) target = $region68
      $region67: #{basic_block_curve_forward.2} parent=55 // pred_region
        %p2771 = scmp.lt.s32.totalorder %s20, 1
        %s2772 = scalar_select %p2771, %s20, 1
        %s2773 = scalar_lea.vmem %s7, %s2772
      $region68: #{basic_block_curve_forward.2} parent=55 // pred_fallthru
        _
    $region56: #{basic_block_curve_forward.2} parent=5 // pred_fallthru
      _
  $region6: #{basic_block_curve_forward.2} parent=0 // loop_footer
    %s18 = sadd.s32 1, %s14
  $region7: #{basic_block_curve_forward.2} parent=0 // loop_footer_branch
    %13 = sbr.rel target = $region3
  $region8: #{basic_block_curve_forward.2} parent=0 // loop_exit
    _

// kernel: basic_block_curve_forward.3
$region0: #{basic_block_curve_forward.3}
  #allocation0 [shape = 'u32[]', space=smem, size = 0x4, offset = 0x4, fixed_abs, tag = 'smem constant byte address 0x4 - core index']
  #allocation1 [shape = 'u32[144,128]{1,0:T(1,128)}', space=vmem, size = 0x12000, scoped, tag = 'internal scratch']
  #allocation2 [shape = 'f32[256,36]{1,0:T(8,128)}', space=vmem, size = 0x20000, scoped, tag = 'scratch operand']
  %s0 = inlined_call_operand.vmem [shape: f32[2,256,128], index: 0, kind: input, shape index: {}]
  %s1 = inlined_call_operand.vmem [shape: f32[2,256,4], index: 1, kind: input, shape index: {}]
  %s2 = inlined_call_operand.vmem [shape: f32[1,4], index: 2, kind: input, shape index: {}]
  %s3 = inlined_call_operand.vmem [shape: f32[1,4], index: 3, kind: input, shape index: {}]
  %s4 = inlined_call_operand.vmem [shape: bf16[36,128], index: 4, kind: input, shape index: {}]
  %s5 = inlined_call_operand.vmem [shape: f32[1,128], index: 5, kind: input, shape index: {}]
  %s6 = inlined_call_operand.vmem [shape: f32[2,256,128], index: 6, kind: output, shape index: {}]
  %s7 = sld [smem:[#allocation0]]
  $region57: #{basic_block_curve_forward.3} parent=0
    _
  %s9 = ssub.s32 1, %s7
  %s10 = scalar_select 0, %s9, %s7
  loop: start=0, step=1, limit=4
  $region2: #{basic_block_curve_forward.3} parent=0 // loop_pre_header
    _
  $region3: #{basic_block_curve_forward.3} parent=0 // loop_header
    %s12 = sphi 0, %s16
    %p13 = scmp.ge.s32.totalorder %s12, 4
    %s22 = sphi 0, %s24
    %s25 = sphi 0, %s22
    %s26 = sphi 0, %s25
    %s42 = sphi 0, %s26
    %s48 = sphi 0, %s50
    %s51 = sphi 0, %s48
    %s52 = sphi 0, %s51
    %s68 = sphi 0, %s52
    %s72 = sphi 0, %s72
    %s74 = sphi 0, %s72
    %s75 = sphi 0, %s74
    %s89 = sphi 0, %s75
    %s93 = sphi 0, %s93
    %s95 = sphi 0, %s93
    %s96 = sphi 0, %s95
    %s110 = sphi 0, %s96
    %s114 = sphi 0, %s114
    %s116 = sphi 0, %s114
    %s117 = sphi 0, %s116
    %s131 = sphi 0, %s117
    %s135 = sphi 0, %s135
    %s137 = sphi 0, %s135
    %s138 = sphi 0, %s137
    %s152 = sphi 0, %s138
    %s158 = sphi 0, %s160
    %s161 = sphi 0, %s158
    %s162 = sphi 0, %s161
    %s178 = sphi 0, %s162
  $region4: #{basic_block_curve_forward.3} parent=0 // loop_header_branch
    %15 = sbr.rel (%p13) target = $region8
  $region5: #{basic_block_curve_forward.3} parent=0 // loop_body
    %s17 = ssub.s32 %s12, 1
    %s18 = ssub.s32 %s12, 2
    %s19 = sadd.s32 %s12, 1
    %s20 = ssub.s32 %s12, %s19
    %p21 = scmp.eq.s32.totalorder %s20, 0
    %s23 = sadd.s32 %s22, 1
    %s24 = scalar_select %p21, %s22, %s23
    %p27 = pneg %p21
    %p28 = scmp.eq.s32.totalorder %s12, 1
    %p29 = por %p27, %p28
    %p30 = scmp.ne.s32.totalorder %s22, %s25
    %p31 = scmp.eq.s32.totalorder %s12, 0
    %p32 = por %p30, %p31
    %p33 = scmp.ne.s32.totalorder %s22, %s25
    %p34 = scmp.eq.s32.totalorder %s17, 1
    %p35 = por %p33, %p34
    %p36 = scmp.ne.s32.totalorder %s25, %s26
    %p37 = scmp.eq.s32.totalorder %s17, 0
    %p38 = por %p36, %p37
    %p39 = scmp.ne.s32.totalorder %s25, %s26
    %p40 = scmp.eq.s32.totalorder %s18, 1
    %p41 = por %p39, %p40
    %p43 = scmp.ne.s32.totalorder %s26, %s42
    %p44 = scmp.eq.s32.totalorder %s18, 0
    %p45 = por %p43, %p44
    %s46 = ssub.s32 %s12, %s19
    %p47 = scmp.eq.s32.totalorder %s46, 0
    %s49 = sadd.s32 %s48, 1
    %s50 = scalar_select %p47, %s48, %s49
    %p53 = pneg %p47
    %p54 = scmp.eq.s32.totalorder %s12, 1
    %p55 = por %p53, %p54
    %p56 = scmp.ne.s32.totalorder %s48, %s51
    %p57 = scmp.eq.s32.totalorder %s12, 0
    %p58 = por %p56, %p57
    %p59 = scmp.ne.s32.totalorder %s48, %s51
    %p60 = scmp.eq.s32.totalorder %s17, 1
    %p61 = por %p59, %p60
    %p62 = scmp.ne.s32.totalorder %s51, %s52
    %p63 = scmp.eq.s32.totalorder %s17, 0
    %p64 = por %p62, %p63
    %p65 = scmp.ne.s32.totalorder %s51, %s52
    %p66 = scmp.eq.s32.totalorder %s18, 1
    %p67 = por %p65, %p66
    %p69 = scmp.ne.s32.totalorder %s52, %s68
    %p70 = scmp.eq.s32.totalorder %s18, 0
    %p71 = por %p69, %p70
    %s73 = sadd.s32 %s72, 1
    %p76 = scmp.eq.s32.totalorder %s12, 1
    %p77 = scmp.ne.s32.totalorder %s72, %s74
    %p78 = scmp.eq.s32.totalorder %s12, 0
    %p79 = por %p77, %p78
    %p80 = scmp.ne.s32.totalorder %s72, %s74
    %p81 = scmp.eq.s32.totalorder %s17, 1
    %p82 = por %p80, %p81
    %p83 = scmp.ne.s32.totalorder %s74, %s75
    %p84 = scmp.eq.s32.totalorder %s17, 0
    %p85 = por %p83, %p84
    %p86 = scmp.ne.s32.totalorder %s74, %s75
    %p87 = scmp.eq.s32.totalorder %s18, 1
    %p88 = por %p86, %p87
    %p90 = scmp.ne.s32.totalorder %s75, %s89
    %p91 = scmp.eq.s32.totalorder %s18, 0
    %p92 = por %p90, %p91
    %s94 = sadd.s32 %s93, 1
    %p97 = scmp.eq.s32.totalorder %s12, 1
    %p98 = scmp.ne.s32.totalorder %s93, %s95
    %p99 = scmp.eq.s32.totalorder %s12, 0
    %p100 = por %p98, %p99
    %p101 = scmp.ne.s32.totalorder %s93, %s95
    %p102 = scmp.eq.s32.totalorder %s17, 1
    %p103 = por %p101, %p102
    %p104 = scmp.ne.s32.totalorder %s95, %s96
    %p105 = scmp.eq.s32.totalorder %s17, 0
    %p106 = por %p104, %p105
    %p107 = scmp.ne.s32.totalorder %s95, %s96
    %p108 = scmp.eq.s32.totalorder %s18, 1
    %p109 = por %p107, %p108
    %p111 = scmp.ne.s32.totalorder %s96, %s110
    %p112 = scmp.eq.s32.totalorder %s18, 0
    %p113 = por %p111, %p112
    %s115 = sadd.s32 %s114, 1
    %p118 = scmp.eq.s32.totalorder %s12, 1
    %p119 = scmp.ne.s32.totalorder %s114, %s116
    %p120 = scmp.eq.s32.totalorder %s12, 0
    %p121 = por %p119, %p120
    %p122 = scmp.ne.s32.totalorder %s114, %s116
    %p123 = scmp.eq.s32.totalorder %s17, 1
    %p124 = por %p122, %p123
    %p125 = scmp.ne.s32.totalorder %s116, %s117
    %p126 = scmp.eq.s32.totalorder %s17, 0
    %p127 = por %p125, %p126
    %p128 = scmp.ne.s32.totalorder %s116, %s117
    %p129 = scmp.eq.s32.totalorder %s18, 1
    %p130 = por %p128, %p129
    %p132 = scmp.ne.s32.totalorder %s117, %s131
    %p133 = scmp.eq.s32.totalorder %s18, 0
    %p134 = por %p132, %p133
    %s136 = sadd.s32 %s135, 1
    %p139 = scmp.eq.s32.totalorder %s12, 1
    %p140 = scmp.ne.s32.totalorder %s135, %s137
    %p141 = scmp.eq.s32.totalorder %s12, 0
    %p142 = por %p140, %p141
    %p143 = scmp.ne.s32.totalorder %s135, %s137
    %p144 = scmp.eq.s32.totalorder %s17, 1
    %p145 = por %p143, %p144
    %p146 = scmp.ne.s32.totalorder %s137, %s138
    %p147 = scmp.eq.s32.totalorder %s17, 0
    %p148 = por %p146, %p147
    %p149 = scmp.ne.s32.totalorder %s137, %s138
    %p150 = scmp.eq.s32.totalorder %s18, 1
    %p151 = por %p149, %p150
    %p153 = scmp.ne.s32.totalorder %s138, %s152
    %p154 = scmp.eq.s32.totalorder %s18, 0
    %p155 = por %p153, %p154
    %s156 = ssub.s32 %s12, %s19
    %p157 = scmp.eq.s32.totalorder %s156, 0
    %s159 = sadd.s32 %s158, 1
    %s160 = scalar_select %p157, %s158, %s159
    %p163 = pneg %p157
    %p164 = scmp.eq.s32.totalorder %s12, 1
    %p165 = por %p163, %p164
    %p166 = scmp.ne.s32.totalorder %s158, %s161
    %p167 = scmp.eq.s32.totalorder %s12, 0
    %p168 = por %p166, %p167
    %p169 = scmp.ne.s32.totalorder %s158, %s161
    %p170 = scmp.eq.s32.totalorder %s17, 1
    %p171 = por %p169, %p170
    %p172 = scmp.ne.s32.totalorder %s161, %s162
    %p173 = scmp.eq.s32.totalorder %s17, 0
    %p174 = por %p172, %p173
    %p175 = scmp.ne.s32.totalorder %s161, %s162
    %p176 = scmp.eq.s32.totalorder %s18, 1
    %p177 = por %p175, %p176
    %p179 = scmp.ne.s32.totalorder %s162, %s178
    %p180 = scmp.eq.s32.totalorder %s18, 0
    %p181 = por %p179, %p180
    %p182 = scmp.le.s32.totalorder 1, %s12
    %p183 = scmp.lt.s32.totalorder %s12, 3
    %p184 = pnand %p182, %p183
    %p185 = pneg %p184
    // Predicated region
    $region9: #{basic_block_curve_forward.3} parent=5 // pred_check
      _
    $region10: #{basic_block_curve_forward.3} parent=5 // pred_check_branch
      %187 = sbr.rel (%p184) target = $region12
    $region11: #{basic_block_curve_forward.3} parent=5 // pred_region
      %s188 = ssub.s32 %s12, 1
      // Predicated region
      $region13: #{basic_block_curve_forward.3} parent=11 // pred_check
        %p189 = pneg %p85
      $region14: #{basic_block_curve_forward.3} parent=11 // pred_check_branch
        %191 = sbr.rel (%p189) target = $region16
      $region15: #{basic_block_curve_forward.3} parent=11 // pred_region
        _
      $region16: #{basic_block_curve_forward.3} parent=11 // pred_fallthru
        _
      // Predicated region
      $region17: #{basic_block_curve_forward.3} parent=11 // pred_check
        %p192 = pneg %p106
      $region18: #{basic_block_curve_forward.3} parent=11 // pred_check_branch
        %194 = sbr.rel (%p192) target = $region20
      $region19: #{basic_block_curve_forward.3} parent=11 // pred_region
        _
      $region20: #{basic_block_curve_forward.3} parent=11 // pred_fallthru
        _
      // Predicated region
      $region21: #{basic_block_curve_forward.3} parent=11 // pred_check
        %p195 = pneg %p127
      $region22: #{basic_block_curve_forward.3} parent=11 // pred_check_branch
        %197 = sbr.rel (%p195) target = $region24
      $region23: #{basic_block_curve_forward.3} parent=11 // pred_region
        _
      $region24: #{basic_block_curve_forward.3} parent=11 // pred_fallthru
        _
      // Predicated region
      $region25: #{basic_block_curve_forward.3} parent=11 // pred_check
        %p198 = pneg %p148
      $region26: #{basic_block_curve_forward.3} parent=11 // pred_check_branch
        %200 = sbr.rel (%p198) target = $region28
      $region27: #{basic_block_curve_forward.3} parent=11 // pred_region
        _
      $region28: #{basic_block_curve_forward.3} parent=11 // pred_fallthru
        _
    $region12: #{basic_block_curve_forward.3} parent=5 // pred_fallthru
      _
    %p201 = scmp.lt.s32.totalorder %s12, 2
    // Predicated region
    $region29: #{basic_block_curve_forward.3} parent=5 // pred_check
      %p202 = pneg %p201
    $region30: #{basic_block_curve_forward.3} parent=5 // pred_check_branch
      %204 = sbr.rel (%p202) target = $region32
    $region31: #{basic_block_curve_forward.3} parent=5 // pred_region
      // Predicated region
      $region33: #{basic_block_curve_forward.3} parent=31 // pred_check
        %p205 = pneg %p32
      $region34: #{basic_block_curve_forward.3} parent=31 // pred_check_branch
        %207 = sbr.rel (%p205) target = $region36
      $region35: #{basic_block_curve_forward.3} parent=31 // pred_region
        %p208 = scmp.lt.s32.totalorder %s12, 1
        %s209 = scalar_select %p208, %s12, 1
        %s210 = smul.addr %s209, 32
        %s211 = smul.addr %s210, 8
        %s212 = scalar_lea.vmem %s0, %s211
      $region36: #{basic_block_curve_forward.3} parent=31 // pred_fallthru
        _
      // Predicated region
      $region37: #{basic_block_curve_forward.3} parent=31 // pred_check
        %p213 = pneg %p58
      $region38: #{basic_block_curve_forward.3} parent=31 // pred_check_branch
        %215 = sbr.rel (%p213) target = $region40
      $region39: #{basic_block_curve_forward.3} parent=31 // pred_region
        %p216 = scmp.lt.s32.totalorder %s12, 1
        %s217 = scalar_select %p216, %s12, 1
        %s218 = smul.addr %s217, 32
        %s219 = smul.addr %s218, 8
        %s220 = scalar_lea.vmem %s1, %s219
      $region40: #{basic_block_curve_forward.3} parent=31 // pred_fallthru
        _
    $region32: #{basic_block_curve_forward.3} parent=5 // pred_fallthru
      _
    %p221 = scmp.le.s32.totalorder 1, %s12
    %p222 = scmp.lt.s32.totalorder %s12, 3
    %p223 = pnand %p221, %p222
    %p224 = pneg %p223
    // Predicated region
    $region41: #{basic_block_curve_forward.3} parent=5 // pred_check
      _
    $region42: #{basic_block_curve_forward.3} parent=5 // pred_check_branch
      %226 = sbr.rel (%p223) target = $region44
    $region43: #{basic_block_curve_forward.3} parent=5 // pred_region
      %s227 = ssub.s32 %s12, 1
      %p228 = scmp.lt.s32.totalorder %s17, 1
      %s229 = scalar_select %p228, %s17, 1
      %s230 = smul.addr %s229, 32
      %s231 = smul.addr %s230, 8
      %s232 = scalar_lea.vmem %s0, %s231
      %p233 = pneg %p38
      %p234 = pneg %p35
      %p235 = scmp.lt.s32.totalorder %s17, 1
      %s236 = scalar_select %p235, %s17, 1
      %s237 = smul.addr %s236, 32
      %s238 = smul.addr %s237, 8
      %s239 = scalar_lea.vmem %s1, %s238
      %p240 = pneg %p64
      %p241 = pneg %p61
      %p242 = pneg %p85
      %p243 = pneg %p82
      %p244 = pneg %p106
      %p245 = pneg %p103
      %p246 = pneg %p127
      %p247 = pneg %p124
      %p248 = pneg %p148
      %p249 = pneg %p145
      %p250 = pneg %p174
      %p251 = pneg %p171
      %p252 = scmp.lt.s32.totalorder %s17, 1
      %s253 = scalar_select %p252, %s17, 1
      %s254 = smul.addr %s253, 32
      %s255 = smul.addr %s254, 8
      %s256 = scalar_lea.vmem %s6, %s255
      %p257 = scmp.lt.s32.totalorder %s17, 1
      %s258 = scalar_select %p257, %s17, 1
      %s259 = smul.addr %s258, 32
      %s260 = smul.addr %s259, 8
      %s261 = scalar_lea.vmem %s0, %s260
      %p262 = scmp.lt.s32.totalorder %s17, 1
      %s263 = scalar_select %p262, %s17, 1
      %s264 = smul.addr %s263, 32
      %s265 = smul.addr %s264, 8
      %s266 = scalar_lea.vmem %s1, %s265
      %p267 = scmp.lt.s32.totalorder %s17, 1
      %s268 = scalar_select %p267, %s17, 1
      %s269 = smul.addr %s268, 32
      %s270 = smul.addr %s269, 8
      %s271 = scalar_lea.vmem %s6, %s270
      %v273 = vld [vmem:[%s261] sm:$0xff]
      %v274 = vld [vmem:[%s261 + $0x8] sm:$0xff]
      %v275 = vld [vmem:[%s261 + $0x10] sm:$0xff]
      %v276 = vld [vmem:[%s261 + $0x18] sm:$0xff]
      %v277 = vld [vmem:[%s261 + $0x20] sm:$0xff]
      %v278 = vld [vmem:[%s261 + $0x28] sm:$0xff]
      %v279 = vld [vmem:[%s261 + $0x30] sm:$0xff]
      %v280 = vld [vmem:[%s261 + $0x38] sm:$0xff]
      %v281 = vld [vmem:[%s261 + $0x40] sm:$0xff]
      %v282 = vld [vmem:[%s261 + $0x48] sm:$0xff]
      %v283 = vld [vmem:[%s261 + $0x50] sm:$0xff]
      %v284 = vld [vmem:[%s261 + $0x58] sm:$0xff]
      %v285 = vld [vmem:[%s261 + $0x60] sm:$0xff]
      %v286 = vld [vmem:[%s261 + $0x68] sm:$0xff]
      %v287 = vld [vmem:[%s261 + $0x70] sm:$0xff]
      %v288 = vld [vmem:[%s261 + $0x78] sm:$0xff]
      %v289 = vld [vmem:[%s261 + $0x80] sm:$0xff]
      %v290 = vld [vmem:[%s261 + $0x88] sm:$0xff]
      %v291 = vld [vmem:[%s261 + $0x90] sm:$0xff]
      %v292 = vld [vmem:[%s261 + $0x98] sm:$0xff]
      %v293 = vld [vmem:[%s261 + $0xa0] sm:$0xff]
      %v294 = vld [vmem:[%s261 + $0xa8] sm:$0xff]
      %v295 = vld [vmem:[%s261 + $0xb0] sm:$0xff]
      %v296 = vld [vmem:[%s261 + $0xb8] sm:$0xff]
      %v297 = vld [vmem:[%s261 + $0xc0] sm:$0xff]
      %v298 = vld [vmem:[%s261 + $0xc8] sm:$0xff]
      %v299 = vld [vmem:[%s261 + $0xd0] sm:$0xff]
      %v300 = vld [vmem:[%s261 + $0xd8] sm:$0xff]
      %v301 = vld [vmem:[%s261 + $0xe0] sm:$0xff]
      %v302 = vld [vmem:[%s261 + $0xe8] sm:$0xff]
      %v303 = vld [vmem:[%s261 + $0xf0] sm:$0xff]
      %v304 = vld [vmem:[%s261 + $0xf8] sm:$0xff]
      %v305 = vld [vmem:[%s2] sm:$0x1]
      %v306 = vld [vmem:[%s3] sm:$0x1]
      %v307 = vld [vmem:[%s4] sm:$0xf]
      %v308 = vld [vmem:[%s4 + $0x4] sm:$0xf]
      %v309 = vld [vmem:[%s4 + $0x8] sm:$0xf]
      %v310 = vld [vmem:[%s4 + $0xc] sm:$0xf]
      %v311 = vld [vmem:[%s4 + $0x10] sm:$0x3]
      %v313 = vlaneseq
      %v314 = vshrl.u32 %v313, 7
      %v315 = vsub.s32 0, %v314
      %v316 = vrot.slane %v305, %v315
      %v318 = vmul.f32 %v273, %v316
      %v319 = vmul.f32 %v274, %v316
      %v320 = vmul.f32 %v275, %v316
      %v321 = vmul.f32 %v276, %v316
      %v322 = vmul.f32 %v277, %v316
      %v323 = vmul.f32 %v278, %v316
      %v324 = vmul.f32 %v279, %v316
      %v325 = vmul.f32 %v280, %v316
      %v326 = vmul.f32 %v281, %v316
      %v327 = vmul.f32 %v282, %v316
      %v328 = vmul.f32 %v283, %v316
      %v329 = vmul.f32 %v284, %v316
      %v330 = vmul.f32 %v285, %v316
      %v331 = vmul.f32 %v286, %v316
      %v332 = vmul.f32 %v287, %v316
      %v333 = vmul.f32 %v288, %v316
      %v334 = vmul.f32 %v289, %v316
      %v335 = vmul.f32 %v290, %v316
      %v336 = vmul.f32 %v291, %v316
      %v337 = vmul.f32 %v292, %v316
      %v338 = vmul.f32 %v293, %v316
      %v339 = vmul.f32 %v294, %v316
      %v340 = vmul.f32 %v295, %v316
      %v341 = vmul.f32 %v296, %v316
      %v342 = vmul.f32 %v297, %v316
      %v343 = vmul.f32 %v298, %v316
      %v344 = vmul.f32 %v299, %v316
      %v345 = vmul.f32 %v300, %v316
      %v346 = vmul.f32 %v301, %v316
      %v347 = vmul.f32 %v302, %v316
      %v348 = vmul.f32 %v303, %v316
      %v349 = vmul.f32 %v304, %v316
      %v351 = vlaneseq
      %v352 = vshrl.u32 %v351, 7
      %v353 = vsub.s32 0, %v352
      %v354 = vrot.slane %v306, %v353
      %v356 = vadd.f32 %v318, %v354
      %v357 = vadd.f32 %v319, %v354
      %v358 = vadd.f32 %v320, %v354
      %v359 = vadd.f32 %v321, %v354
      %v360 = vadd.f32 %v322, %v354
      %v361 = vadd.f32 %v323, %v354
      %v362 = vadd.f32 %v324, %v354
      %v363 = vadd.f32 %v325, %v354
      %v364 = vadd.f32 %v326, %v354
      %v365 = vadd.f32 %v327, %v354
      %v366 = vadd.f32 %v328, %v354
      %v367 = vadd.f32 %v329, %v354
      %v368 = vadd.f32 %v330, %v354
      %v369 = vadd.f32 %v331, %v354
      %v370 = vadd.f32 %v332, %v354
      %v371 = vadd.f32 %v333, %v354
      %v372 = vadd.f32 %v334, %v354
      %v373 = vadd.f32 %v335, %v354
      %v374 = vadd.f32 %v336, %v354
      %v375 = vadd.f32 %v337, %v354
      %v376 = vadd.f32 %v338, %v354
      %v377 = vadd.f32 %v339, %v354
      %v378 = vadd.f32 %v340, %v354
      %v379 = vadd.f32 %v341, %v354
      %v380 = vadd.f32 %v342, %v354
      %v381 = vadd.f32 %v343, %v354
      %v382 = vadd.f32 %v344, %v354
      %v383 = vadd.f32 %v345, %v354
      %v384 = vadd.f32 %v346, %v354
      %v385 = vadd.f32 %v347, %v354
      %v386 = vadd.f32 %v348, %v354
      %v387 = vadd.f32 %v349, %v354
      %v388 = vmax.f32 %v356, 0.0
      %v389 = vmax.f32 %v357, 0.0
      %v390 = vmax.f32 %v358, 0.0
      %v391 = vmax.f32 %v359, 0.0
      %v392 = vmax.f32 %v360, 0.0
      %v393 = vmax.f32 %v361, 0.0
      %v394 = vmax.f32 %v362, 0.0
      %v395 = vmax.f32 %v363, 0.0
      %v396 = vmax.f32 %v364, 0.0
      %v397 = vmax.f32 %v365, 0.0
      %v398 = vmax.f32 %v366, 0.0
      %v399 = vmax.f32 %v367, 0.0
      %v400 = vmax.f32 %v368, 0.0
      %v401 = vmax.f32 %v369, 0.0
      %v402 = vmax.f32 %v370, 0.0
      %v403 = vmax.f32 %v371, 0.0
      %v404 = vmax.f32 %v372, 0.0
      %v405 = vmax.f32 %v373, 0.0
      %v406 = vmax.f32 %v374, 0.0
      %v407 = vmax.f32 %v375, 0.0
      %v408 = vmax.f32 %v376, 0.0
      %v409 = vmax.f32 %v377, 0.0
      %v410 = vmax.f32 %v378, 0.0
      %v411 = vmax.f32 %v379, 0.0
      %v412 = vmax.f32 %v380, 0.0
      %v413 = vmax.f32 %v381, 0.0
      %v414 = vmax.f32 %v382, 0.0
      %v415 = vmax.f32 %v383, 0.0
      %v416 = vmax.f32 %v384, 0.0
      %v417 = vmax.f32 %v385, 0.0
      %v418 = vmax.f32 %v386, 0.0
      %v419 = vmax.f32 %v387, 0.0
      %v420 = vlaneseq
      %v421 = vshrl.u32 %v420, 7
      %v422 = vadd.s32 %v421, 8
      %v423 = vadd.s32 %v421, 16
      %v424 = vadd.s32 %v421, 24
      %v425 = vadd.s32 %v421, 32
      %v426 = vadd.s32 %v421, 40
      %v427 = vadd.s32 %v421, 48
      %v428 = vadd.s32 %v421, 56
      %v429 = vadd.s32 %v421, 64
      %v430 = vadd.s32 %v421, 72
      %v431 = vadd.s32 %v421, 80
      %v432 = vadd.s32 %v421, 88
      %v433 = vadd.s32 %v421, 96
      %v434 = vadd.s32 %v421, 104
      %v435 = vadd.s32 %v421, 112
      %v436 = vadd.s32 %v421, 120
      %v437 = vadd.s32 %v421, 128
      %v438 = vadd.s32 %v421, 136
      %v439 = vadd.s32 %v421, 144
      %v440 = vadd.s32 %v421, 152
      %v441 = vadd.s32 %v421, 160
      %v442 = vadd.s32 %v421, 168
      %v443 = vadd.s32 %v421, 176
      %v444 = vadd.s32 %v421, 184
      %v445 = vadd.s32 %v421, 192
      %v446 = vadd.s32 %v421, 200
      %v447 = vadd.s32 %v421, 208
      %v448 = vadd.s32 %v421, 216
      %v449 = vadd.s32 %v421, 224
      %v450 = vadd.s32 %v421, 232
      %v451 = vadd.s32 %v421, 240
      %v452 = vadd.s32 %v421, 248
      %vm453 = vcmp.lt.s32.totalorder %v421, 0
      %v454 = vsub.s32 0, %v421
      %v455 = vsel %vm453, %v454, %v421
      %v456 = vshrl.u32 %v455, 4
      %v457 = vand.u32 %v455, 15
      %v458 = vsub.s32 0, %v457
      %v459 = vsel %vm453, %v458, %v457
      %vm460 = vcmp.lt.s32.totalorder %v422, 0
      %v461 = vsub.s32 0, %v422
      %v462 = vsel %vm460, %v461, %v422
      %v463 = vshrl.u32 %v462, 4
      %v464 = vand.u32 %v462, 15
      %v465 = vsub.s32 0, %v464
      %v466 = vsel %vm460, %v465, %v464
      %vm467 = vcmp.lt.s32.totalorder %v423, 0
      %v468 = vsub.s32 0, %v423
      %v469 = vsel %vm467, %v468, %v423
      %v470 = vshrl.u32 %v469, 4
      %v471 = vand.u32 %v469, 15
      %v472 = vsub.s32 0, %v471
      %v473 = vsel %vm467, %v472, %v471
      %vm474 = vcmp.lt.s32.totalorder %v424, 0
      %v475 = vsub.s32 0, %v424
      %v476 = vsel %vm474, %v475, %v424
      %v477 = vshrl.u32 %v476, 4
      %v478 = vand.u32 %v476, 15
      %v479 = vsub.s32 0, %v478
      %v480 = vsel %vm474, %v479, %v478
      %vm481 = vcmp.lt.s32.totalorder %v425, 0
      %v482 = vsub.s32 0, %v425
      %v483 = vsel %vm481, %v482, %v425
      %v484 = vshrl.u32 %v483, 4
      %v485 = vand.u32 %v483, 15
      %v486 = vsub.s32 0, %v485
      %v487 = vsel %vm481, %v486, %v485
      %vm488 = vcmp.lt.s32.totalorder %v426, 0
      %v489 = vsub.s32 0, %v426
      %v490 = vsel %vm488, %v489, %v426
      %v491 = vshrl.u32 %v490, 4
      %v492 = vand.u32 %v490, 15
      %v493 = vsub.s32 0, %v492
      %v494 = vsel %vm488, %v493, %v492
      %vm495 = vcmp.lt.s32.totalorder %v427, 0
      %v496 = vsub.s32 0, %v427
      %v497 = vsel %vm495, %v496, %v427
      %v498 = vshrl.u32 %v497, 4
      %v499 = vand.u32 %v497, 15
      %v500 = vsub.s32 0, %v499
      %v501 = vsel %vm495, %v500, %v499
      %vm502 = vcmp.lt.s32.totalorder %v428, 0
      %v503 = vsub.s32 0, %v428
      %v504 = vsel %vm502, %v503, %v428
      %v505 = vshrl.u32 %v504, 4
      %v506 = vand.u32 %v504, 15
      %v507 = vsub.s32 0, %v506
      %v508 = vsel %vm502, %v507, %v506
      %vm509 = vcmp.lt.s32.totalorder %v429, 0
      %v510 = vsub.s32 0, %v429
      %v511 = vsel %vm509, %v510, %v429
      %v512 = vshrl.u32 %v511, 4
      %v513 = vand.u32 %v511, 15
      %v514 = vsub.s32 0, %v513
      %v515 = vsel %vm509, %v514, %v513
      %vm516 = vcmp.lt.s32.totalorder %v430, 0
      %v517 = vsub.s32 0, %v430
      %v518 = vsel %vm516, %v517, %v430
      %v519 = vshrl.u32 %v518, 4
      %v520 = vand.u32 %v518, 15
      %v521 = vsub.s32 0, %v520
      %v522 = vsel %vm516, %v521, %v520
      %vm523 = vcmp.lt.s32.totalorder %v431, 0
      %v524 = vsub.s32 0, %v431
      %v525 = vsel %vm523, %v524, %v431
      %v526 = vshrl.u32 %v525, 4
      %v527 = vand.u32 %v525, 15
      %v528 = vsub.s32 0, %v527
      %v529 = vsel %vm523, %v528, %v527
      %vm530 = vcmp.lt.s32.totalorder %v432, 0
      %v531 = vsub.s32 0, %v432
      %v532 = vsel %vm530, %v531, %v432
      %v533 = vshrl.u32 %v532, 4
      %v534 = vand.u32 %v532, 15
      %v535 = vsub.s32 0, %v534
      %v536 = vsel %vm530, %v535, %v534
      %vm537 = vcmp.lt.s32.totalorder %v433, 0
      %v538 = vsub.s32 0, %v433
      %v539 = vsel %vm537, %v538, %v433
      %v540 = vshrl.u32 %v539, 4
      %v541 = vand.u32 %v539, 15
      %v542 = vsub.s32 0, %v541
      %v543 = vsel %vm537, %v542, %v541
      %vm544 = vcmp.lt.s32.totalorder %v434, 0
      %v545 = vsub.s32 0, %v434
      %v546 = vsel %vm544, %v545, %v434
      %v547 = vshrl.u32 %v546, 4
      %v548 = vand.u32 %v546, 15
      %v549 = vsub.s32 0, %v548
      %v550 = vsel %vm544, %v549, %v548
      %vm551 = vcmp.lt.s32.totalorder %v435, 0
      %v552 = vsub.s32 0, %v435
      %v553 = vsel %vm551, %v552, %v435
      %v554 = vshrl.u32 %v553, 4
      %v555 = vand.u32 %v553, 15
      %v556 = vsub.s32 0, %v555
      %v557 = vsel %vm551, %v556, %v555
      %vm558 = vcmp.lt.s32.totalorder %v436, 0
      %v559 = vsub.s32 0, %v436
      %v560 = vsel %vm558, %v559, %v436
      %v561 = vshrl.u32 %v560, 4
      %v562 = vand.u32 %v560, 15
      %v563 = vsub.s32 0, %v562
      %v564 = vsel %vm558, %v563, %v562
      %vm565 = vcmp.lt.s32.totalorder %v437, 0
      %v566 = vsub.s32 0, %v437
      %v567 = vsel %vm565, %v566, %v437
      %v568 = vshrl.u32 %v567, 4
      %v569 = vand.u32 %v567, 15
      %v570 = vsub.s32 0, %v569
      %v571 = vsel %vm565, %v570, %v569
      %vm572 = vcmp.lt.s32.totalorder %v438, 0
      %v573 = vsub.s32 0, %v438
      %v574 = vsel %vm572, %v573, %v438
      %v575 = vshrl.u32 %v574, 4
      %v576 = vand.u32 %v574, 15
      %v577 = vsub.s32 0, %v576
      %v578 = vsel %vm572, %v577, %v576
      %vm579 = vcmp.lt.s32.totalorder %v439, 0
      %v580 = vsub.s32 0, %v439
      %v581 = vsel %vm579, %v580, %v439
      %v582 = vshrl.u32 %v581, 4
      %v583 = vand.u32 %v581, 15
      %v584 = vsub.s32 0, %v583
      %v585 = vsel %vm579, %v584, %v583
      %vm586 = vcmp.lt.s32.totalorder %v440, 0
      %v587 = vsub.s32 0, %v440
      %v588 = vsel %vm586, %v587, %v440
      %v589 = vshrl.u32 %v588, 4
      %v590 = vand.u32 %v588, 15
      %v591 = vsub.s32 0, %v590
      %v592 = vsel %vm586, %v591, %v590
      %vm593 = vcmp.lt.s32.totalorder %v441, 0
      %v594 = vsub.s32 0, %v441
      %v595 = vsel %vm593, %v594, %v441
      %v596 = vshrl.u32 %v595, 4
      %v597 = vand.u32 %v595, 15
      %v598 = vsub.s32 0, %v597
      %v599 = vsel %vm593, %v598, %v597
      %vm600 = vcmp.lt.s32.totalorder %v442, 0
      %v601 = vsub.s32 0, %v442
      %v602 = vsel %vm600, %v601, %v442
      %v603 = vshrl.u32 %v602, 4
      %v604 = vand.u32 %v602, 15
      %v605 = vsub.s32 0, %v604
      %v606 = vsel %vm600, %v605, %v604
      %vm607 = vcmp.lt.s32.totalorder %v443, 0
      %v608 = vsub.s32 0, %v443
      %v609 = vsel %vm607, %v608, %v443
      %v610 = vshrl.u32 %v609, 4
      %v611 = vand.u32 %v609, 15
      %v612 = vsub.s32 0, %v611
      %v613 = vsel %vm607, %v612, %v611
      %vm614 = vcmp.lt.s32.totalorder %v444, 0
      %v615 = vsub.s32 0, %v444
      %v616 = vsel %vm614, %v615, %v444
      %v617 = vshrl.u32 %v616, 4
      %v618 = vand.u32 %v616, 15
      %v619 = vsub.s32 0, %v618
      %v620 = vsel %vm614, %v619, %v618
      %vm621 = vcmp.lt.s32.totalorder %v445, 0
      %v622 = vsub.s32 0, %v445
      %v623 = vsel %vm621, %v622, %v445
      %v624 = vshrl.u32 %v623, 4
      %v625 = vand.u32 %v623, 15
      %v626 = vsub.s32 0, %v625
      %v627 = vsel %vm621, %v626, %v625
      %vm628 = vcmp.lt.s32.totalorder %v446, 0
      %v629 = vsub.s32 0, %v446
      %v630 = vsel %vm628, %v629, %v446
      %v631 = vshrl.u32 %v630, 4
      %v632 = vand.u32 %v630, 15
      %v633 = vsub.s32 0, %v632
      %v634 = vsel %vm628, %v633, %v632
      %vm635 = vcmp.lt.s32.totalorder %v447, 0
      %v636 = vsub.s32 0, %v447
      %v637 = vsel %vm635, %v636, %v447
      %v638 = vshrl.u32 %v637, 4
      %v639 = vand.u32 %v637, 15
      %v640 = vsub.s32 0, %v639
      %v641 = vsel %vm635, %v640, %v639
      %vm642 = vcmp.lt.s32.totalorder %v448, 0
      %v643 = vsub.s32 0, %v448
      %v644 = vsel %vm642, %v643, %v448
      %v645 = vshrl.u32 %v644, 4
      %v646 = vand.u32 %v644, 15
      %v647 = vsub.s32 0, %v646
      %v648 = vsel %vm642, %v647, %v646
      %vm649 = vcmp.lt.s32.totalorder %v449, 0
      %v650 = vsub.s32 0, %v449
      %v651 = vsel %vm649, %v650, %v449
      %v652 = vshrl.u32 %v651, 4
      %v653 = vand.u32 %v651, 15
      %v654 = vsub.s32 0, %v653
      %v655 = vsel %vm649, %v654, %v653
      %vm656 = vcmp.lt.s32.totalorder %v450, 0
      %v657 = vsub.s32 0, %v450
      %v658 = vsel %vm656, %v657, %v450
      %v659 = vshrl.u32 %v658, 4
      %v660 = vand.u32 %v658, 15
      %v661 = vsub.s32 0, %v660
      %v662 = vsel %vm656, %v661, %v660
      %vm663 = vcmp.lt.s32.totalorder %v451, 0
      %v664 = vsub.s32 0, %v451
      %v665 = vsel %vm663, %v664, %v451
      %v666 = vshrl.u32 %v665, 4
      %v667 = vand.u32 %v665, 15
      %v668 = vsub.s32 0, %v667
      %v669 = vsel %vm663, %v668, %v667
      %vm670 = vcmp.lt.s32.totalorder %v452, 0
      %v671 = vsub.s32 0, %v452
      %v672 = vsel %vm670, %v671, %v452
      %v673 = vshrl.u32 %v672, 4
      %v674 = vand.u32 %v672, 15
      %v675 = vsub.s32 0, %v674
      %v676 = vsel %vm670, %v675, %v674
      %vm677 = vcmp.ne.s32.totalorder %v459, 0
      %vm678 = vcmp.ne.s32.totalorder %v466, 0
      %vm679 = vcmp.ne.s32.totalorder %v473, 0
      %vm680 = vcmp.ne.s32.totalorder %v480, 0
      %vm681 = vcmp.ne.s32.totalorder %v487, 0
      %vm682 = vcmp.ne.s32.totalorder %v494, 0
      %vm683 = vcmp.ne.s32.totalorder %v501, 0
      %vm684 = vcmp.ne.s32.totalorder %v508, 0
      %vm685 = vcmp.ne.s32.totalorder %v515, 0
      %vm686 = vcmp.ne.s32.totalorder %v522, 0
      %vm687 = vcmp.ne.s32.totalorder %v529, 0
      %vm688 = vcmp.ne.s32.totalorder %v536, 0
      %vm689 = vcmp.ne.s32.totalorder %v543, 0
      %vm690 = vcmp.ne.s32.totalorder %v550, 0
      %vm691 = vcmp.ne.s32.totalorder %v557, 0
      %vm692 = vcmp.ne.s32.totalorder %v564, 0
      %vm693 = vcmp.ne.s32.totalorder %v571, 0
      %vm694 = vcmp.ne.s32.totalorder %v578, 0
      %vm695 = vcmp.ne.s32.totalorder %v585, 0
      %vm696 = vcmp.ne.s32.totalorder %v592, 0
      %vm697 = vcmp.ne.s32.totalorder %v599, 0
      %vm698 = vcmp.ne.s32.totalorder %v606, 0
      %vm699 = vcmp.ne.s32.totalorder %v613, 0
      %vm700 = vcmp.ne.s32.totalorder %v620, 0
      %vm701 = vcmp.ne.s32.totalorder %v627, 0
      %vm702 = vcmp.ne.s32.totalorder %v634, 0
      %vm703 = vcmp.ne.s32.totalorder %v641, 0
      %vm704 = vcmp.ne.s32.totalorder %v648, 0
      %vm705 = vcmp.ne.s32.totalorder %v655, 0
      %vm706 = vcmp.ne.s32.totalorder %v662, 0
      %vm707 = vcmp.ne.s32.totalorder %v669, 0
      %vm708 = vcmp.ne.s32.totalorder %v676, 0
      %vm709 = vcmp.lt.s32.totalorder %v459, 0
      %vm710 = vcmp.lt.s32.totalorder %v466, 0
      %vm711 = vcmp.lt.s32.totalorder %v473, 0
      %vm712 = vcmp.lt.s32.totalorder %v480, 0
      %vm713 = vcmp.lt.s32.totalorder %v487, 0
      %vm714 = vcmp.lt.s32.totalorder %v494, 0
      %vm715 = vcmp.lt.s32.totalorder %v501, 0
      %vm716 = vcmp.lt.s32.totalorder %v508, 0
      %vm717 = vcmp.lt.s32.totalorder %v515, 0
      %vm718 = vcmp.lt.s32.totalorder %v522, 0
      %vm719 = vcmp.lt.s32.totalorder %v529, 0
      %vm720 = vcmp.lt.s32.totalorder %v536, 0
      %vm721 = vcmp.lt.s32.totalorder %v543, 0
      %vm722 = vcmp.lt.s32.totalorder %v550, 0
      %vm723 = vcmp.lt.s32.totalorder %v557, 0
      %vm724 = vcmp.lt.s32.totalorder %v564, 0
      %vm725 = vcmp.lt.s32.totalorder %v571, 0
      %vm726 = vcmp.lt.s32.totalorder %v578, 0
      %vm727 = vcmp.lt.s32.totalorder %v585, 0
      %vm728 = vcmp.lt.s32.totalorder %v592, 0
      %vm729 = vcmp.lt.s32.totalorder %v599, 0
      %vm730 = vcmp.lt.s32.totalorder %v606, 0
      %vm731 = vcmp.lt.s32.totalorder %v613, 0
      %vm732 = vcmp.lt.s32.totalorder %v620, 0
      %vm733 = vcmp.lt.s32.totalorder %v627, 0
      %vm734 = vcmp.lt.s32.totalorder %v634, 0
      %vm735 = vcmp.lt.s32.totalorder %v641, 0
      %vm736 = vcmp.lt.s32.totalorder %v648, 0
      %vm737 = vcmp.lt.s32.totalorder %v655, 0
      %vm738 = vcmp.lt.s32.totalorder %v662, 0
      %vm739 = vcmp.lt.s32.totalorder %v669, 0
      %vm740 = vcmp.lt.s32.totalorder %v676, 0
      %vm741 = vmand %vm709, %vm677
      %vm742 = vmand %vm710, %vm678
      %vm743 = vmand %vm711, %vm679
      %vm744 = vmand %vm712, %vm680
      %vm745 = vmand %vm713, %vm681
      %vm746 = vmand %vm714, %vm682
      %vm747 = vmand %vm715, %vm683
      %vm748 = vmand %vm716, %vm684
      %vm749 = vmand %vm717, %vm685
      %vm750 = vmand %vm718, %vm686
      %vm751 = vmand %vm719, %vm687
      %vm752 = vmand %vm720, %vm688
      %vm753 = vmand %vm721, %vm689
      %vm754 = vmand %vm722, %vm690
      %vm755 = vmand %vm723, %vm691
      %vm756 = vmand %vm724, %vm692
      %vm757 = vmand %vm725, %vm693
      %vm758 = vmand %vm726, %vm694
      %vm759 = vmand %vm727, %vm695
      %vm760 = vmand %vm728, %vm696
      %vm761 = vmand %vm729, %vm697
      %vm762 = vmand %vm730, %vm698
      %vm763 = vmand %vm731, %vm699
      %vm764 = vmand %vm732, %vm700
      %vm765 = vmand %vm733, %vm701
      %vm766 = vmand %vm734, %vm702
      %vm767 = vmand %vm735, %vm703
      %vm768 = vmand %vm736, %vm704
      %vm769 = vmand %vm737, %vm705
      %vm770 = vmand %vm738, %vm706
      %vm771 = vmand %vm739, %vm707
      %vm772 = vmand %vm740, %vm708
      %v773 = vadd.s32 %v459, 16
      %v774 = vadd.s32 %v466, 16
      %v775 = vadd.s32 %v473, 16
      %v776 = vadd.s32 %v480, 16
      %v777 = vadd.s32 %v487, 16
      %v778 = vadd.s32 %v494, 16
      %v779 = vadd.s32 %v501, 16
      %v780 = vadd.s32 %v508, 16
      %v781 = vadd.s32 %v515, 16
      %v782 = vadd.s32 %v522, 16
      %v783 = vadd.s32 %v529, 16
      %v784 = vadd.s32 %v536, 16
      %v785 = vadd.s32 %v543, 16
      %v786 = vadd.s32 %v550, 16
      %v787 = vadd.s32 %v557, 16
      %v788 = vadd.s32 %v564, 16
      %v789 = vadd.s32 %v571, 16
      %v790 = vadd.s32 %v578, 16
      %v791 = vadd.s32 %v585, 16
      %v792 = vadd.s32 %v592, 16
      %v793 = vadd.s32 %v599, 16
      %v794 = vadd.s32 %v606, 16
      %v795 = vadd.s32 %v613, 16
      %v796 = vadd.s32 %v620, 16
      %v797 = vadd.s32 %v627, 16
      %v798 = vadd.s32 %v634, 16
      %v799 = vadd.s32 %v641, 16
      %v800 = vadd.s32 %v648, 16
      %v801 = vadd.s32 %v655, 16
      %v802 = vadd.s32 %v662, 16
      %v803 = vadd.s32 %v669, 16
      %v804 = vadd.s32 %v676, 16
      %v805 = vsel %vm741, %v773, %v459
      %v806 = vsel %vm742, %v774, %v466
      %v807 = vsel %vm743, %v775, %v473
      %v808 = vsel %vm744, %v776, %v480
      %v809 = vsel %vm745, %v777, %v487
      %v810 = vsel %vm746, %v778, %v494
      %v811 = vsel %vm747, %v779, %v501
      %v812 = vsel %vm748, %v780, %v508
      %v813 = vsel %vm749, %v781, %v515
      %v814 = vsel %vm750, %v782, %v522
      %v815 = vsel %vm751, %v783, %v529
      %v816 = vsel %vm752, %v784, %v536
      %v817 = vsel %vm753, %v785, %v543
      %v818 = vsel %vm754, %v786, %v550
      %v819 = vsel %vm755, %v787, %v557
      %v820 = vsel %vm756, %v788, %v564
      %v821 = vsel %vm757, %v789, %v571
      %v822 = vsel %vm758, %v790, %v578
      %v823 = vsel %vm759, %v791, %v585
      %v824 = vsel %vm760, %v792, %v592
      %v825 = vsel %vm761, %v793, %v599
      %v826 = vsel %vm762, %v794, %v606
      %v827 = vsel %vm763, %v795, %v613
      %v828 = vsel %vm764, %v796, %v620
      %v829 = vsel %vm765, %v797, %v627
      %v830 = vsel %vm766, %v798, %v634
      %v831 = vsel %vm767, %v799, %v641
      %v832 = vsel %vm768, %v800, %v648
      %v833 = vsel %vm769, %v801, %v655
      %v834 = vsel %vm770, %v802, %v662
      %v835 = vsel %vm771, %v803, %v669
      %v836 = vsel %vm772, %v804, %v676
      %vm837 = vcmp.eq.s32.totalorder %v805, 15
      %vm838 = vcmp.eq.s32.totalorder %v806, 15
      %vm839 = vcmp.eq.s32.totalorder %v807, 15
      %vm840 = vcmp.eq.s32.totalorder %v808, 15
      %vm841 = vcmp.eq.s32.totalorder %v809, 15
      %vm842 = vcmp.eq.s32.totalorder %v810, 15
      %vm843 = vcmp.eq.s32.totalorder %v811, 15
      %vm844 = vcmp.eq.s32.totalorder %v812, 15
      %vm845 = vcmp.eq.s32.totalorder %v813, 15
      %vm846 = vcmp.eq.s32.totalorder %v814, 15
      %vm847 = vcmp.eq.s32.totalorder %v815, 15
      %vm848 = vcmp.eq.s32.totalorder %v816, 15
      %vm849 = vcmp.eq.s32.totalorder %v817, 15
      %vm850 = vcmp.eq.s32.totalorder %v818, 15
      %vm851 = vcmp.eq.s32.totalorder %v819, 15
      %vm852 = vcmp.eq.s32.totalorder %v820, 15
      %vm853 = vcmp.eq.s32.totalorder %v821, 15
      %vm854 = vcmp.eq.s32.totalorder %v822, 15
      %vm855 = vcmp.eq.s32.totalorder %v823, 15
      %vm856 = vcmp.eq.s32.totalorder %v824, 15
      %vm857 = vcmp.eq.s32.totalorder %v825, 15
      %vm858 = vcmp.eq.s32.totalorder %v826, 15
      %vm859 = vcmp.eq.s32.totalorder %v827, 15
      %vm860 = vcmp.eq.s32.totalorder %v828, 15
      %vm861 = vcmp.eq.s32.totalorder %v829, 15
      %vm862 = vcmp.eq.s32.totalorder %v830, 15
      %vm863 = vcmp.eq.s32.totalorder %v831, 15
      %vm864 = vcmp.eq.s32.totalorder %v832, 15
      %vm865 = vcmp.eq.s32.totalorder %v833, 15
      %vm866 = vcmp.eq.s32.totalorder %v834, 15
      %vm867 = vcmp.eq.s32.totalorder %v835, 15
      %vm868 = vcmp.eq.s32.totalorder %v836, 15
      %v869 = vsel %vm837, 1, 0
      %v870 = vsel %vm838, 1, 0
      %v871 = vsel %vm839, 1, 0
      %v872 = vsel %vm840, 1, 0
      %v873 = vsel %vm841, 1, 0
      %v874 = vsel %vm842, 1, 0
      %v875 = vsel %vm843, 1, 0
      %v876 = vsel %vm844, 1, 0
      %v877 = vsel %vm845, 1, 0
      %v878 = vsel %vm846, 1, 0
      %v879 = vsel %vm847, 1, 0
      %v880 = vsel %vm848, 1, 0
      %v881 = vsel %vm849, 1, 0
      %v882 = vsel %vm850, 1, 0
      %v883 = vsel %vm851, 1, 0
      %v884 = vsel %vm852, 1, 0
      %v885 = vsel %vm853, 1, 0
      %v886 = vsel %vm854, 1, 0
      %v887 = vsel %vm855, 1, 0
      %v888 = vsel %vm856, 1, 0
      %v889 = vsel %vm857, 1, 0
      %v890 = vsel %vm858, 1, 0
      %v891 = vsel %vm859, 1, 0
      %v892 = vsel %vm860, 1, 0
      %v893 = vsel %vm861, 1, 0
      %v894 = vsel %vm862, 1, 0
      %v895 = vsel %vm863, 1, 0
      %v896 = vsel %vm864, 1, 0
      %v897 = vsel %vm865, 1, 0
      %v898 = vsel %vm866, 1, 0
      %v899 = vsel %vm867, 1, 0
      %v900 = vsel %vm868, 1, 0
      %vm901 = vcmp.eq.s32.totalorder %v869, 1
      %vm902 = vcmp.eq.s32.totalorder %v870, 1
      %vm903 = vcmp.eq.s32.totalorder %v871, 1
      %vm904 = vcmp.eq.s32.totalorder %v872, 1
      %vm905 = vcmp.eq.s32.totalorder %v873, 1
      %vm906 = vcmp.eq.s32.totalorder %v874, 1
      %vm907 = vcmp.eq.s32.totalorder %v875, 1
      %vm908 = vcmp.eq.s32.totalorder %v876, 1
      %vm909 = vcmp.eq.s32.totalorder %v877, 1
      %vm910 = vcmp.eq.s32.totalorder %v878, 1
      %vm911 = vcmp.eq.s32.totalorder %v879, 1
      %vm912 = vcmp.eq.s32.totalorder %v880, 1
      %vm913 = vcmp.eq.s32.totalorder %v881, 1
      %vm914 = vcmp.eq.s32.totalorder %v882, 1
      %vm915 = vcmp.eq.s32.totalorder %v883, 1
      %vm916 = vcmp.eq.s32.totalorder %v884, 1
      %vm917 = vcmp.eq.s32.totalorder %v885, 1
      %vm918 = vcmp.eq.s32.totalorder %v886, 1
      %vm919 = vcmp.eq.s32.totalorder %v887, 1
      %vm920 = vcmp.eq.s32.totalorder %v888, 1
      %vm921 = vcmp.eq.s32.totalorder %v889, 1
      %vm922 = vcmp.eq.s32.totalorder %v890, 1
      %vm923 = vcmp.eq.s32.totalorder %v891, 1
      %vm924 = vcmp.eq.s32.totalorder %v892, 1
      %vm925 = vcmp.eq.s32.totalorder %v893, 1
      %vm926 = vcmp.eq.s32.totalorder %v894, 1
      %vm927 = vcmp.eq.s32.totalorder %v895, 1
      %vm928 = vcmp.eq.s32.totalorder %v896, 1
      %vm929 = vcmp.eq.s32.totalorder %v897, 1
      %vm930 = vcmp.eq.s32.totalorder %v898, 1
      %vm931 = vcmp.eq.s32.totalorder %v899, 1
      %vm932 = vcmp.eq.s32.totalorder %v900, 1
      %v933 = vsel %vm901, 0.0, %v388
      %v934 = vsel %vm902, 0.0, %v389
      %v935 = vsel %vm903, 0.0, %v390
      %v936 = vsel %vm904, 0.0, %v391
      %v937 = vsel %vm905, 0.0, %v392
      %v938 = vsel %vm906, 0.0, %v393
      %v939 = vsel %vm907, 0.0, %v394
      %v940 = vsel %vm908, 0.0, %v395
      %v941 = vsel %vm909, 0.0, %v396
      %v942 = vsel %vm910, 0.0, %v397
      %v943 = vsel %vm911, 0.0, %v398
      %v944 = vsel %vm912, 0.0, %v399
      %v945 = vsel %vm913, 0.0, %v400
      %v946 = vsel %vm914, 0.0, %v401
      %v947 = vsel %vm915, 0.0, %v402
      %v948 = vsel %vm916, 0.0, %v403
      %v949 = vsel %vm917, 0.0, %v404
      %v950 = vsel %vm918, 0.0, %v405
      %v951 = vsel %vm919, 0.0, %v406
      %v952 = vsel %vm920, 0.0, %v407
      %v953 = vsel %vm921, 0.0, %v408
      %v954 = vsel %vm922, 0.0, %v409
      %v955 = vsel %vm923, 0.0, %v410
      %v956 = vsel %vm924, 0.0, %v411
      %v957 = vsel %vm925, 0.0, %v412
      %v958 = vsel %vm926, 0.0, %v413
      %v959 = vsel %vm927, 0.0, %v414
      %v960 = vsel %vm928, 0.0, %v415
      %v961 = vsel %vm929, 0.0, %v416
      %v962 = vsel %vm930, 0.0, %v417
      %v963 = vsel %vm931, 0.0, %v418
      %v964 = vsel %vm932, 0.0, %v419
      %vm965 = vcmp.eq.s32.totalorder %v805, 0
      %vm966 = vcmp.eq.s32.totalorder %v806, 0
      %vm967 = vcmp.eq.s32.totalorder %v807, 0
      %vm968 = vcmp.eq.s32.totalorder %v808, 0
      %vm969 = vcmp.eq.s32.totalorder %v809, 0
      %vm970 = vcmp.eq.s32.totalorder %v810, 0
      %vm971 = vcmp.eq.s32.totalorder %v811, 0
      %vm972 = vcmp.eq.s32.totalorder %v812, 0
      %vm973 = vcmp.eq.s32.totalorder %v813, 0
      %vm974 = vcmp.eq.s32.totalorder %v814, 0
      %vm975 = vcmp.eq.s32.totalorder %v815, 0
      %vm976 = vcmp.eq.s32.totalorder %v816, 0
      %vm977 = vcmp.eq.s32.totalorder %v817, 0
      %vm978 = vcmp.eq.s32.totalorder %v818, 0
      %vm979 = vcmp.eq.s32.totalorder %v819, 0
      %vm980 = vcmp.eq.s32.totalorder %v820, 0
      %vm981 = vcmp.eq.s32.totalorder %v821, 0
      %vm982 = vcmp.eq.s32.totalorder %v822, 0
      %vm983 = vcmp.eq.s32.totalorder %v823, 0
      %vm984 = vcmp.eq.s32.totalorder %v824, 0
      %vm985 = vcmp.eq.s32.totalorder %v825, 0
      %vm986 = vcmp.eq.s32.totalorder %v826, 0
      %vm987 = vcmp.eq.s32.totalorder %v827, 0
      %vm988 = vcmp.eq.s32.totalorder %v828, 0
      %vm989 = vcmp.eq.s32.totalorder %v829, 0
      %vm990 = vcmp.eq.s32.totalorder %v830, 0
      %vm991 = vcmp.eq.s32.totalorder %v831, 0
      %vm992 = vcmp.eq.s32.totalorder %v832, 0
      %vm993 = vcmp.eq.s32.totalorder %v833, 0
      %vm994 = vcmp.eq.s32.totalorder %v834, 0
      %vm995 = vcmp.eq.s32.totalorder %v835, 0
      %vm996 = vcmp.eq.s32.totalorder %v836, 0
      %v997 = vsel %vm965, 1, 0
      %v998 = vsel %vm966, 1, 0
      %v999 = vsel %vm967, 1, 0
      %v1000 = vsel %vm968, 1, 0
      %v1001 = vsel %vm969, 1, 0
      %v1002 = vsel %vm970, 1, 0
      %v1003 = vsel %vm971, 1, 0
      %v1004 = vsel %vm972, 1, 0
      %v1005 = vsel %vm973, 1, 0
      %v1006 = vsel %vm974, 1, 0
      %v1007 = vsel %vm975, 1, 0
      %v1008 = vsel %vm976, 1, 0
      %v1009 = vsel %vm977, 1, 0
      %v1010 = vsel %vm978, 1, 0
      %v1011 = vsel %vm979, 1, 0
      %v1012 = vsel %vm980, 1, 0
      %v1013 = vsel %vm981, 1, 0
      %v1014 = vsel %vm982, 1, 0
      %v1015 = vsel %vm983, 1, 0
      %v1016 = vsel %vm984, 1, 0
      %v1017 = vsel %vm985, 1, 0
      %v1018 = vsel %vm986, 1, 0
      %v1019 = vsel %vm987, 1, 0
      %v1020 = vsel %vm988, 1, 0
      %v1021 = vsel %vm989, 1, 0
      %v1022 = vsel %vm990, 1, 0
      %v1023 = vsel %vm991, 1, 0
      %v1024 = vsel %vm992, 1, 0
      %v1025 = vsel %vm993, 1, 0
      %v1026 = vsel %vm994, 1, 0
      %v1027 = vsel %vm995, 1, 0
      %v1028 = vsel %vm996, 1, 0
      %vm1029 = vcmp.eq.s32.totalorder %v997, 1
      %vm1030 = vcmp.eq.s32.totalorder %v998, 1
      %vm1031 = vcmp.eq.s32.totalorder %v999, 1
      %vm1032 = vcmp.eq.s32.totalorder %v1000, 1
      %vm1033 = vcmp.eq.s32.totalorder %v1001, 1
      %vm1034 = vcmp.eq.s32.totalorder %v1002, 1
      %vm1035 = vcmp.eq.s32.totalorder %v1003, 1
      %vm1036 = vcmp.eq.s32.totalorder %v1004, 1
      %vm1037 = vcmp.eq.s32.totalorder %v1005, 1
      %vm1038 = vcmp.eq.s32.totalorder %v1006, 1
      %vm1039 = vcmp.eq.s32.totalorder %v1007, 1
      %vm1040 = vcmp.eq.s32.totalorder %v1008, 1
      %vm1041 = vcmp.eq.s32.totalorder %v1009, 1
      %vm1042 = vcmp.eq.s32.totalorder %v1010, 1
      %vm1043 = vcmp.eq.s32.totalorder %v1011, 1
      %vm1044 = vcmp.eq.s32.totalorder %v1012, 1
      %vm1045 = vcmp.eq.s32.totalorder %v1013, 1
      %vm1046 = vcmp.eq.s32.totalorder %v1014, 1
      %vm1047 = vcmp.eq.s32.totalorder %v1015, 1
      %vm1048 = vcmp.eq.s32.totalorder %v1016, 1
      %vm1049 = vcmp.eq.s32.totalorder %v1017, 1
      %vm1050 = vcmp.eq.s32.totalorder %v1018, 1
      %vm1051 = vcmp.eq.s32.totalorder %v1019, 1
      %vm1052 = vcmp.eq.s32.totalorder %v1020, 1
      %vm1053 = vcmp.eq.s32.totalorder %v1021, 1
      %vm1054 = vcmp.eq.s32.totalorder %v1022, 1
      %vm1055 = vcmp.eq.s32.totalorder %v1023, 1
      %vm1056 = vcmp.eq.s32.totalorder %v1024, 1
      %vm1057 = vcmp.eq.s32.totalorder %v1025, 1
      %vm1058 = vcmp.eq.s32.totalorder %v1026, 1
      %vm1059 = vcmp.eq.s32.totalorder %v1027, 1
      %vm1060 = vcmp.eq.s32.totalorder %v1028, 1
      %v1061 = vsel %vm1029, 0.0, %v388
      %v1062 = vsel %vm1030, 0.0, %v389
      %v1063 = vsel %vm1031, 0.0, %v390
      %v1064 = vsel %vm1032, 0.0, %v391
      %v1065 = vsel %vm1033, 0.0, %v392
      %v1066 = vsel %vm1034, 0.0, %v393
      %v1067 = vsel %vm1035, 0.0, %v394
      %v1068 = vsel %vm1036, 0.0, %v395
      %v1069 = vsel %vm1037, 0.0, %v396
      %v1070 = vsel %vm1038, 0.0, %v397
      %v1071 = vsel %vm1039, 0.0, %v398
      %v1072 = vsel %vm1040, 0.0, %v399
      %v1073 = vsel %vm1041, 0.0, %v400
      %v1074 = vsel %vm1042, 0.0, %v401
      %v1075 = vsel %vm1043, 0.0, %v402
      %v1076 = vsel %vm1044, 0.0, %v403
      %v1077 = vsel %vm1045, 0.0, %v404
      %v1078 = vsel %vm1046, 0.0, %v405
      %v1079 = vsel %vm1047, 0.0, %v406
      %v1080 = vsel %vm1048, 0.0, %v407
      %v1081 = vsel %vm1049, 0.0, %v408
      %v1082 = vsel %vm1050, 0.0, %v409
      %v1083 = vsel %vm1051, 0.0, %v410
      %v1084 = vsel %vm1052, 0.0, %v411
      %v1085 = vsel %vm1053, 0.0, %v412
      %v1086 = vsel %vm1054, 0.0, %v413
      %v1087 = vsel %vm1055, 0.0, %v414
      %v1088 = vsel %vm1056, 0.0, %v415
      %v1089 = vsel %vm1057, 0.0, %v416
      %v1090 = vsel %vm1058, 0.0, %v417
      %v1091 = vsel %vm1059, 0.0, %v418
      %v1092 = vsel %vm1060, 0.0, %v419
      %vm1093 = vcmask 31744
      %1094 = vst.msk [vmem:[#allocation2] sm:$0xff] %vm1093, 0.0
      %1095 = vst.msk [vmem:[#allocation2 + $0x8] sm:$0xff] %vm1093, 0.0
      %vm1096 = vcmask 24576
      %1097 = vst.msk [vmem:[#allocation2 + $0x10] sm:$0x1] %vm1096, 0.0
      %1098 = vst.msk [vmem:[#allocation2 + $0x11] sm:$0xff] %vm1093, %v933
      %1099 = vst.msk [vmem:[#allocation2 + $0x19] sm:$0xff] %vm1093, %v934
      %1100 = vst.msk [vmem:[#allocation2 + $0x21] sm:$0xff] %vm1093, %v935
      %1101 = vst.msk [vmem:[#allocation2 + $0x29] sm:$0xff] %vm1093, %v936
      %1102 = vst.msk [vmem:[#allocation2 + $0x31] sm:$0xff] %vm1093, %v937
      %1103 = vst.msk [vmem:[#allocation2 + $0x39] sm:$0xff] %vm1093, %v938
      %1104 = vst.msk [vmem:[#allocation2 + $0x41] sm:$0xff] %vm1093, %v939
      %1105 = vst.msk [vmem:[#allocation2 + $0x49] sm:$0xff] %vm1093, %v940
      %1106 = vst.msk [vmem:[#allocation2 + $0x51] sm:$0xff] %vm1093, %v941
      %1107 = vst.msk [vmem:[#allocation2 + $0x59] sm:$0xff] %vm1093, %v942
      %1108 = vst.msk [vmem:[#allocation2 + $0x61] sm:$0xff] %vm1093, %v943
      %1109 = vst.msk [vmem:[#allocation2 + $0x69] sm:$0xff] %vm1093, %v944
      %1110 = vst.msk [vmem:[#allocation2 + $0x71] sm:$0xff] %vm1093, %v945
      %1111 = vst.msk [vmem:[#allocation2 + $0x79] sm:$0xff] %vm1093, %v946
      %1112 = vst.msk [vmem:[#allocation2 + $0x81] sm:$0xff] %vm1093, %v947
      %1113 = vst.msk [vmem:[#allocation2 + $0x89] sm:$0xff] %vm1093, %v948
      %1114 = vst.msk [vmem:[#allocation2 + $0x91] sm:$0xff] %vm1093, %v949
      %1115 = vst.msk [vmem:[#allocation2 + $0x99] sm:$0xff] %vm1093, %v950
      %1116 = vst.msk [vmem:[#allocation2 + $0xa1] sm:$0xff] %vm1093, %v951
      %1117 = vst.msk [vmem:[#allocation2 + $0xa9] sm:$0xff] %vm1093, %v952
      %1118 = vst.msk [vmem:[#allocation2 + $0xb1] sm:$0xff] %vm1093, %v953
      %1119 = vst.msk [vmem:[#allocation2 + $0xb9] sm:$0xff] %vm1093, %v954
      %1120 = vst.msk [vmem:[#allocation2 + $0xc1] sm:$0xff] %vm1093, %v955
      %1121 = vst.msk [vmem:[#allocation2 + $0xc9] sm:$0xff] %vm1093, %v956
      %1122 = vst.msk [vmem:[#allocation2 + $0xd1] sm:$0xff] %vm1093, %v957
      %1123 = vst.msk [vmem:[#allocation2 + $0xd9] sm:$0xff] %vm1093, %v958
      %1124 = vst.msk [vmem:[#allocation2 + $0xe1] sm:$0xff] %vm1093, %v959
      %1125 = vst.msk [vmem:[#allocation2 + $0xe9] sm:$0xff] %vm1093, %v960
      %1126 = vst.msk [vmem:[#allocation2 + $0xf1] sm:$0xff] %vm1093, %v961
      %vm1127 = vcmask 30720
      %1128 = vst.msk [vmem:[#allocation2 + $0xf9] sm:$0x7f] %vm1127, %v962
      %vm1129 = vcmask 64544
      %1130 = vst.msk [vmem:[#allocation2] sm:$0xff] %vm1129, 0.0
      %1131 = vst.msk [vmem:[#allocation2 + $0x8] sm:$0xff] %vm1129, 0.0
      %1162 = vrot.lane.b32.xlu0 %v388, 4
      %v1163 = vpop.permute.xlu0 %1162
      %1164 = vrot.lane.b32.xlu0 %v389, 4
      %v1165 = vpop.permute.xlu0 %1164
      %1166 = vrot.lane.b32.xlu0 %v390, 4
      %v1167 = vpop.permute.xlu0 %1166
      %1168 = vrot.lane.b32.xlu0 %v391, 4
      %v1169 = vpop.permute.xlu0 %1168
      %1170 = vrot.lane.b32.xlu0 %v392, 4
      %v1171 = vpop.permute.xlu0 %1170
      %1172 = vrot.lane.b32.xlu0 %v393, 4
      %v1173 = vpop.permute.xlu0 %1172
      %1174 = vrot.lane.b32.xlu0 %v394, 4
      %v1175 = vpop.permute.xlu0 %1174
      %1176 = vrot.lane.b32.xlu0 %v395, 4
      %v1177 = vpop.permute.xlu0 %1176
      %1178 = vrot.lane.b32.xlu0 %v396, 4
      %v1179 = vpop.permute.xlu0 %1178
      %1180 = vrot.lane.b32.xlu0 %v397, 4
      %v1181 = vpop.permute.xlu0 %1180
      %1182 = vrot.lane.b32.xlu0 %v398, 4
      %v1183 = vpop.permute.xlu0 %1182
      %1184 = vrot.lane.b32.xlu0 %v399, 4
      %v1185 = vpop.permute.xlu0 %1184
      %1186 = vrot.lane.b32.xlu0 %v400, 4
      %v1187 = vpop.permute.xlu0 %1186
      %1188 = vrot.lane.b32.xlu0 %v401, 4
      %v1189 = vpop.permute.xlu0 %1188
      %1190 = vrot.lane.b32.xlu0 %v402, 4
      %v1191 = vpop.permute.xlu0 %1190
      %1192 = vrot.lane.b32.xlu0 %v403, 4
      %v1193 = vpop.permute.xlu0 %1192
      %1194 = vrot.lane.b32.xlu0 %v404, 4
      %v1195 = vpop.permute.xlu0 %1194
      %1196 = vrot.lane.b32.xlu0 %v405, 4
      %v1197 = vpop.permute.xlu0 %1196
      %1198 = vrot.lane.b32.xlu0 %v406, 4
      %v1199 = vpop.permute.xlu0 %1198
      %1200 = vrot.lane.b32.xlu0 %v407, 4
      %v1201 = vpop.permute.xlu0 %1200
      %1202 = vrot.lane.b32.xlu0 %v408, 4
      %v1203 = vpop.permute.xlu0 %1202
      %1204 = vrot.lane.b32.xlu0 %v409, 4
      %v1205 = vpop.permute.xlu0 %1204
      %1206 = vrot.lane.b32.xlu0 %v410, 4
      %v1207 = vpop.permute.xlu0 %1206
      %1208 = vrot.lane.b32.xlu0 %v411, 4
      %v1209 = vpop.permute.xlu0 %1208
      %1210 = vrot.lane.b32.xlu0 %v412, 4
      %v1211 = vpop.permute.xlu0 %1210
      %1212 = vrot.lane.b32.xlu0 %v413, 4
      %v1213 = vpop.permute.xlu0 %1212
      %1214 = vrot.lane.b32.xlu0 %v414, 4
      %v1215 = vpop.permute.xlu0 %1214
      %1216 = vrot.lane.b32.xlu0 %v415, 4
      %v1217 = vpop.permute.xlu0 %1216
      %1218 = vrot.lane.b32.xlu0 %v416, 4
      %v1219 = vpop.permute.xlu0 %1218
      %1220 = vrot.lane.b32.xlu0 %v417, 4
      %v1221 = vpop.permute.xlu0 %1220
      %1252 = vst.msk [vmem:[#allocation2 + $0x10] sm:$0xff] %vm1129, %v1163
      %1253 = vst.msk [vmem:[#allocation2 + $0x18] sm:$0xff] %vm1129, %v1165
      %1254 = vst.msk [vmem:[#allocation2 + $0x20] sm:$0xff] %vm1129, %v1167
      %1255 = vst.msk [vmem:[#allocation2 + $0x28] sm:$0xff] %vm1129, %v1169
      %1256 = vst.msk [vmem:[#allocation2 + $0x30] sm:$0xff] %vm1129, %v1171
      %1257 = vst.msk [vmem:[#allocation2 + $0x38] sm:$0xff] %vm1129, %v1173
      %1258 = vst.msk [vmem:[#allocation2 + $0x40] sm:$0xff] %vm1129, %v1175
      %1259 = vst.msk [vmem:[#allocation2 + $0x48] sm:$0xff] %vm1129, %v1177
      %1260 = vst.msk [vmem:[#allocation2 + $0x50] sm:$0xff] %vm1129, %v1179
      %1261 = vst.msk [vmem:[#allocation2 + $0x58] sm:$0xff] %vm1129, %v1181
      %1262 = vst.msk [vmem:[#allocation2 + $0x60] sm:$0xff] %vm1129, %v1183
      %1263 = vst.msk [vmem:[#allocation2 + $0x68] sm:$0xff] %vm1129, %v1185
      %1264 = vst.msk [vmem:[#allocation2 + $0x70] sm:$0xff] %vm1129, %v1187
      %1265 = vst.msk [vmem:[#allocation2 + $0x78] sm:$0xff] %vm1129, %v1189
      %1266 = vst.msk [vmem:[#allocation2 + $0x80] sm:$0xff] %vm1129, %v1191
      %1267 = vst.msk [vmem:[#allocation2 + $0x88] sm:$0xff] %vm1129, %v1193
      %1268 = vst.msk [vmem:[#allocation2 + $0x90] sm:$0xff] %vm1129, %v1195
      %1269 = vst.msk [vmem:[#allocation2 + $0x98] sm:$0xff] %vm1129, %v1197
      %1270 = vst.msk [vmem:[#allocation2 + $0xa0] sm:$0xff] %vm1129, %v1199
      %1271 = vst.msk [vmem:[#allocation2 + $0xa8] sm:$0xff] %vm1129, %v1201
      %1272 = vst.msk [vmem:[#allocation2 + $0xb0] sm:$0xff] %vm1129, %v1203
      %1273 = vst.msk [vmem:[#allocation2 + $0xb8] sm:$0xff] %vm1129, %v1205
      %1274 = vst.msk [vmem:[#allocation2 + $0xc0] sm:$0xff] %vm1129, %v1207
      %1275 = vst.msk [vmem:[#allocation2 + $0xc8] sm:$0xff] %vm1129, %v1209
      %1276 = vst.msk [vmem:[#allocation2 + $0xd0] sm:$0xff] %vm1129, %v1211
      %1277 = vst.msk [vmem:[#allocation2 + $0xd8] sm:$0xff] %vm1129, %v1213
      %1278 = vst.msk [vmem:[#allocation2 + $0xe0] sm:$0xff] %vm1129, %v1215
      %1279 = vst.msk [vmem:[#allocation2 + $0xe8] sm:$0xff] %vm1129, %v1217
      %1280 = vst.msk [vmem:[#allocation2 + $0xf0] sm:$0xff] %vm1129, %v1219
      %1281 = vst.msk [vmem:[#allocation2 + $0xf8] sm:$0xff] %vm1129, %v1221
      %vm1282 = vcmask 97344
      %1283 = vst.msk [vmem:[#allocation2] sm:$0xff] %vm1282, 0.0
      %vm1284 = vcmask 96320
      %1285 = vst.msk [vmem:[#allocation2 + $0x8] sm:$0x7f] %vm1284, 0.0
      %1317 = vrot.lane.b32.xlu0 %v1061, 8
      %v1318 = vpop.permute.xlu0 %1317
      %1319 = vrot.lane.b32.xlu0 %v1062, 8
      %v1320 = vpop.permute.xlu0 %1319
      %1321 = vrot.lane.b32.xlu0 %v1063, 8
      %v1322 = vpop.permute.xlu0 %1321
      %1323 = vrot.lane.b32.xlu0 %v1064, 8
      %v1324 = vpop.permute.xlu0 %1323
      %1325 = vrot.lane.b32.xlu0 %v1065, 8
      %v1326 = vpop.permute.xlu0 %1325
      %1327 = vrot.lane.b32.xlu0 %v1066, 8
      %v1328 = vpop.permute.xlu0 %1327
      %1329 = vrot.lane.b32.xlu0 %v1067, 8
      %v1330 = vpop.permute.xlu0 %1329
      %1331 = vrot.lane.b32.xlu0 %v1068, 8
      %v1332 = vpop.permute.xlu0 %1331
      %1333 = vrot.lane.b32.xlu0 %v1069, 8
      %v1334 = vpop.permute.xlu0 %1333
      %1335 = vrot.lane.b32.xlu0 %v1070, 8
      %v1336 = vpop.permute.xlu0 %1335
      %1337 = vrot.lane.b32.xlu0 %v1071, 8
      %v1338 = vpop.permute.xlu0 %1337
      %1339 = vrot.lane.b32.xlu0 %v1072, 8
      %v1340 = vpop.permute.xlu0 %1339
      %1341 = vrot.lane.b32.xlu0 %v1073, 8
      %v1342 = vpop.permute.xlu0 %1341
      %1343 = vrot.lane.b32.xlu0 %v1074, 8
      %v1344 = vpop.permute.xlu0 %1343
      %1345 = vrot.lane.b32.xlu0 %v1075, 8
      %v1346 = vpop.permute.xlu0 %1345
      %1347 = vrot.lane.b32.xlu0 %v1076, 8
      %v1348 = vpop.permute.xlu0 %1347
      %1349 = vrot.lane.b32.xlu0 %v1077, 8
      %v1350 = vpop.permute.xlu0 %1349
      %1351 = vrot.lane.b32.xlu0 %v1078, 8
      %v1352 = vpop.permute.xlu0 %1351
      %1353 = vrot.lane.b32.xlu0 %v1079, 8
      %v1354 = vpop.permute.xlu0 %1353
      %1355 = vrot.lane.b32.xlu0 %v1080, 8
      %v1356 = vpop.permute.xlu0 %1355
      %1357 = vrot.lane.b32.xlu0 %v1081, 8
      %v1358 = vpop.permute.xlu0 %1357
      %1359 = vrot.lane.b32.xlu0 %v1082, 8
      %v1360 = vpop.permute.xlu0 %1359
      %1361 = vrot.lane.b32.xlu0 %v1083, 8
      %v1362 = vpop.permute.xlu0 %1361
      %1363 = vrot.lane.b32.xlu0 %v1084, 8
      %v1364 = vpop.permute.xlu0 %1363
      %1365 = vrot.lane.b32.xlu0 %v1085, 8
      %v1366 = vpop.permute.xlu0 %1365
      %1367 = vrot.lane.b32.xlu0 %v1086, 8
      %v1368 = vpop.permute.xlu0 %1367
      %1369 = vrot.lane.b32.xlu0 %v1087, 8
      %v1370 = vpop.permute.xlu0 %1369
      %1371 = vrot.lane.b32.xlu0 %v1088, 8
      %v1372 = vpop.permute.xlu0 %1371
      %1373 = vrot.lane.b32.xlu0 %v1089, 8
      %v1374 = vpop.permute.xlu0 %1373
      %1375 = vrot.lane.b32.xlu0 %v1090, 8
      %v1376 = vpop.permute.xlu0 %1375
      %1377 = vrot.lane.b32.xlu0 %v1091, 8
      %v1378 = vpop.permute.xlu0 %1377
      %1410 = vst.msk [vmem:[#allocation2 + $0xf] sm:$0xff] %vm1282, %v1318
      %1411 = vst.msk [vmem:[#allocation2 + $0x17] sm:$0xff] %vm1282, %v1320
      %1412 = vst.msk [vmem:[#allocation2 + $0x1f] sm:$0xff] %vm1282, %v1322
      %1413 = vst.msk [vmem:[#allocation2 + $0x27] sm:$0xff] %vm1282, %v1324
      %1414 = vst.msk [vmem:[#allocation2 + $0x2f] sm:$0xff] %vm1282, %v1326
      %1415 = vst.msk [vmem:[#allocation2 + $0x37] sm:$0xff] %vm1282, %v1328
      %1416 = vst.msk [vmem:[#allocation2 + $0x3f] sm:$0xff] %vm1282, %v1330
      %1417 = vst.msk [vmem:[#allocation2 + $0x47] sm:$0xff] %vm1282, %v1332
      %1418 = vst.msk [vmem:[#allocation2 + $0x4f] sm:$0xff] %vm1282, %v1334
      %1419 = vst.msk [vmem:[#allocation2 + $0x57] sm:$0xff] %vm1282, %v1336
      %1420 = vst.msk [vmem:[#allocation2 + $0x5f] sm:$0xff] %vm1282, %v1338
      %1421 = vst.msk [vmem:[#allocation2 + $0x67] sm:$0xff] %vm1282, %v1340
      %1422 = vst.msk [vmem:[#allocation2 + $0x6f] sm:$0xff] %vm1282, %v1342
      %1423 = vst.msk [vmem:[#allocation2 + $0x77] sm:$0xff] %vm1282, %v1344
      %1424 = vst.msk [vmem:[#allocation2 + $0x7f] sm:$0xff] %vm1282, %v1346
      %1425 = vst.msk [vmem:[#allocation2 + $0x87] sm:$0xff] %vm1282, %v1348
      %1426 = vst.msk [vmem:[#allocation2 + $0x8f] sm:$0xff] %vm1282, %v1350
      %1427 = vst.msk [vmem:[#allocation2 + $0x97] sm:$0xff] %vm1282, %v1352
      %1428 = vst.msk [vmem:[#allocation2 + $0x9f] sm:$0xff] %vm1282, %v1354
      %1429 = vst.msk [vmem:[#allocation2 + $0xa7] sm:$0xff] %vm1282, %v1356
      %1430 = vst.msk [vmem:[#allocation2 + $0xaf] sm:$0xff] %vm1282, %v1358
      %1431 = vst.msk [vmem:[#allocation2 + $0xb7] sm:$0xff] %vm1282, %v1360
      %1432 = vst.msk [vmem:[#allocation2 + $0xbf] sm:$0xff] %vm1282, %v1362
      %1433 = vst.msk [vmem:[#allocation2 + $0xc7] sm:$0xff] %vm1282, %v1364
      %1434 = vst.msk [vmem:[#allocation2 + $0xcf] sm:$0xff] %vm1282, %v1366
      %1435 = vst.msk [vmem:[#allocation2 + $0xd7] sm:$0xff] %vm1282, %v1368
      %1436 = vst.msk [vmem:[#allocation2 + $0xdf] sm:$0xff] %vm1282, %v1370
      %1437 = vst.msk [vmem:[#allocation2 + $0xe7] sm:$0xff] %vm1282, %v1372
      %1438 = vst.msk [vmem:[#allocation2 + $0xef] sm:$0xff] %vm1282, %v1374
      %1439 = vst.msk [vmem:[#allocation2 + $0xf7] sm:$0xff] %vm1282, %v1376
      %vm1440 = vcmask 90176
      %1441 = vst.msk [vmem:[#allocation2 + $0xff] sm:$0x1] %vm1440, %v1378
      %vm1442 = vcmask 122976
      %1443 = vst.msk [vmem:[#allocation2] sm:$0x1] %vm1442, 0.0
      %1476 = vrot.lane.b32.xlu0 %v933, 12
      %v1477 = vpop.permute.xlu0 %1476
      %1478 = vrot.lane.b32.xlu0 %v934, 12
      %v1479 = vpop.permute.xlu0 %1478
      %1480 = vrot.lane.b32.xlu0 %v935, 12
      %v1481 = vpop.permute.xlu0 %1480
      %1482 = vrot.lane.b32.xlu0 %v936, 12
      %v1483 = vpop.permute.xlu0 %1482
      %1484 = vrot.lane.b32.xlu0 %v937, 12
      %v1485 = vpop.permute.xlu0 %1484
      %1486 = vrot.lane.b32.xlu0 %v938, 12
      %v1487 = vpop.permute.xlu0 %1486
      %1488 = vrot.lane.b32.xlu0 %v939, 12
      %v1489 = vpop.permute.xlu0 %1488
      %1490 = vrot.lane.b32.xlu0 %v940, 12
      %v1491 = vpop.permute.xlu0 %1490
      %1492 = vrot.lane.b32.xlu0 %v941, 12
      %v1493 = vpop.permute.xlu0 %1492
      %1494 = vrot.lane.b32.xlu0 %v942, 12
      %v1495 = vpop.permute.xlu0 %1494
      %1496 = vrot.lane.b32.xlu0 %v943, 12
      %v1497 = vpop.permute.xlu0 %1496
      %1498 = vrot.lane.b32.xlu0 %v944, 12
      %v1499 = vpop.permute.xlu0 %1498
      %1500 = vrot.lane.b32.xlu0 %v945, 12
      %v1501 = vpop.permute.xlu0 %1500
      %1502 = vrot.lane.b32.xlu0 %v946, 12
      %v1503 = vpop.permute.xlu0 %1502
      %1504 = vrot.lane.b32.xlu0 %v947, 12
      %v1505 = vpop.permute.xlu0 %1504
      %1506 = vrot.lane.b32.xlu0 %v948, 12
      %v1507 = vpop.permute.xlu0 %1506
      %1508 = vrot.lane.b32.xlu0 %v949, 12
      %v1509 = vpop.permute.xlu0 %1508
      %1510 = vrot.lane.b32.xlu0 %v950, 12
      %v1511 = vpop.permute.xlu0 %1510
      %1512 = vrot.lane.b32.xlu0 %v951, 12
      %v1513 = vpop.permute.xlu0 %1512
      %1514 = vrot.lane.b32.xlu0 %v952, 12
      %v1515 = vpop.permute.xlu0 %1514
      %1516 = vrot.lane.b32.xlu0 %v953, 12
      %v1517 = vpop.permute.xlu0 %1516
      %1518 = vrot.lane.b32.xlu0 %v954, 12
      %v1519 = vpop.permute.xlu0 %1518
      %1520 = vrot.lane.b32.xlu0 %v955, 12
      %v1521 = vpop.permute.xlu0 %1520
      %1522 = vrot.lane.b32.xlu0 %v956, 12
      %v1523 = vpop.permute.xlu0 %1522
      %1524 = vrot.lane.b32.xlu0 %v957, 12
      %v1525 = vpop.permute.xlu0 %1524
      %1526 = vrot.lane.b32.xlu0 %v958, 12
      %v1527 = vpop.permute.xlu0 %1526
      %1528 = vrot.lane.b32.xlu0 %v959, 12
      %v1529 = vpop.permute.xlu0 %1528
      %1530 = vrot.lane.b32.xlu0 %v960, 12
      %v1531 = vpop.permute.xlu0 %1530
      %1532 = vrot.lane.b32.xlu0 %v961, 12
      %v1533 = vpop.permute.xlu0 %1532
      %1534 = vrot.lane.b32.xlu0 %v962, 12
      %v1535 = vpop.permute.xlu0 %1534
      %1536 = vrot.lane.b32.xlu0 %v963, 12
      %v1537 = vpop.permute.xlu0 %1536
      %1538 = vrot.lane.b32.xlu0 %v964, 12
      %v1539 = vpop.permute.xlu0 %1538
      %vm1572 = vcmask 130144
      %1573 = vst.msk [vmem:[#allocation2 + $0x1] sm:$0xff] %vm1572, %v1477
      %1574 = vst.msk [vmem:[#allocation2 + $0x9] sm:$0xff] %vm1572, %v1479
      %1575 = vst.msk [vmem:[#allocation2 + $0x11] sm:$0xff] %vm1572, %v1481
      %1576 = vst.msk [vmem:[#allocation2 + $0x19] sm:$0xff] %vm1572, %v1483
      %1577 = vst.msk [vmem:[#allocation2 + $0x21] sm:$0xff] %vm1572, %v1485
      %1578 = vst.msk [vmem:[#allocation2 + $0x29] sm:$0xff] %vm1572, %v1487
      %1579 = vst.msk [vmem:[#allocation2 + $0x31] sm:$0xff] %vm1572, %v1489
      %1580 = vst.msk [vmem:[#allocation2 + $0x39] sm:$0xff] %vm1572, %v1491
      %1581 = vst.msk [vmem:[#allocation2 + $0x41] sm:$0xff] %vm1572, %v1493
      %1582 = vst.msk [vmem:[#allocation2 + $0x49] sm:$0xff] %vm1572, %v1495
      %1583 = vst.msk [vmem:[#allocation2 + $0x51] sm:$0xff] %vm1572, %v1497
      %1584 = vst.msk [vmem:[#allocation2 + $0x59] sm:$0xff] %vm1572, %v1499
      %1585 = vst.msk [vmem:[#allocation2 + $0x61] sm:$0xff] %vm1572, %v1501
      %1586 = vst.msk [vmem:[#allocation2 + $0x69] sm:$0xff] %vm1572, %v1503
      %1587 = vst.msk [vmem:[#allocation2 + $0x71] sm:$0xff] %vm1572, %v1505
      %1588 = vst.msk [vmem:[#allocation2 + $0x79] sm:$0xff] %vm1572, %v1507
      %1589 = vst.msk [vmem:[#allocation2 + $0x81] sm:$0xff] %vm1572, %v1509
      %1590 = vst.msk [vmem:[#allocation2 + $0x89] sm:$0xff] %vm1572, %v1511
      %1591 = vst.msk [vmem:[#allocation2 + $0x91] sm:$0xff] %vm1572, %v1513
      %1592 = vst.msk [vmem:[#allocation2 + $0x99] sm:$0xff] %vm1572, %v1515
      %1593 = vst.msk [vmem:[#allocation2 + $0xa1] sm:$0xff] %vm1572, %v1517
      %1594 = vst.msk [vmem:[#allocation2 + $0xa9] sm:$0xff] %vm1572, %v1519
      %1595 = vst.msk [vmem:[#allocation2 + $0xb1] sm:$0xff] %vm1572, %v1521
      %1596 = vst.msk [vmem:[#allocation2 + $0xb9] sm:$0xff] %vm1572, %v1523
      %1597 = vst.msk [vmem:[#allocation2 + $0xc1] sm:$0xff] %vm1572, %v1525
      %1598 = vst.msk [vmem:[#allocation2 + $0xc9] sm:$0xff] %vm1572, %v1527
      %1599 = vst.msk [vmem:[#allocation2 + $0xd1] sm:$0xff] %vm1572, %v1529
      %1600 = vst.msk [vmem:[#allocation2 + $0xd9] sm:$0xff] %vm1572, %v1531
      %1601 = vst.msk [vmem:[#allocation2 + $0xe1] sm:$0xff] %vm1572, %v1533
      %1602 = vst.msk [vmem:[#allocation2 + $0xe9] sm:$0xff] %vm1572, %v1535
      %1603 = vst.msk [vmem:[#allocation2 + $0xf1] sm:$0xff] %vm1572, %v1537
      %vm1604 = vcmask 129120
      %1605 = vst.msk [vmem:[#allocation2 + $0xf9] sm:$0x7f] %vm1604, %v1539
      %1608 = vrot.lane.b32.xlu0 %v388, 16
      %v1609 = vpop.permute.xlu0 %1608
      %1610 = vrot.lane.b32.xlu0 %v389, 16
      %v1611 = vpop.permute.xlu0 %1610
      %1612 = vrot.lane.b32.xlu0 %v390, 16
      %v1613 = vpop.permute.xlu0 %1612
      %1614 = vrot.lane.b32.xlu0 %v391, 16
      %v1615 = vpop.permute.xlu0 %1614
      %1616 = vrot.lane.b32.xlu0 %v392, 16
      %v1617 = vpop.permute.xlu0 %1616
      %1618 = vrot.lane.b32.xlu0 %v393, 16
      %v1619 = vpop.permute.xlu0 %1618
      %1620 = vrot.lane.b32.xlu0 %v394, 16
      %v1621 = vpop.permute.xlu0 %1620
      %1622 = vrot.lane.b32.xlu0 %v395, 16
      %v1623 = vpop.permute.xlu0 %1622
      %1624 = vrot.lane.b32.xlu0 %v396, 16
      %v1625 = vpop.permute.xlu0 %1624
      %1626 = vrot.lane.b32.xlu0 %v397, 16
      %v1627 = vpop.permute.xlu0 %1626
      %1628 = vrot.lane.b32.xlu0 %v398, 16
      %v1629 = vpop.permute.xlu0 %1628
      %1630 = vrot.lane.b32.xlu0 %v399, 16
      %v1631 = vpop.permute.xlu0 %1630
      %1632 = vrot.lane.b32.xlu0 %v400, 16
      %v1633 = vpop.permute.xlu0 %1632
      %1634 = vrot.lane.b32.xlu0 %v401, 16
      %v1635 = vpop.permute.xlu0 %1634
      %1636 = vrot.lane.b32.xlu0 %v402, 16
      %v1637 = vpop.permute.xlu0 %1636
      %1638 = vrot.lane.b32.xlu0 %v403, 16
      %v1639 = vpop.permute.xlu0 %1638
      %1640 = vrot.lane.b32.xlu0 %v404, 16
      %v1641 = vpop.permute.xlu0 %1640
      %1642 = vrot.lane.b32.xlu0 %v405, 16
      %v1643 = vpop.permute.xlu0 %1642
      %1644 = vrot.lane.b32.xlu0 %v406, 16
      %v1645 = vpop.permute.xlu0 %1644
      %1646 = vrot.lane.b32.xlu0 %v407, 16
      %v1647 = vpop.permute.xlu0 %1646
      %1648 = vrot.lane.b32.xlu0 %v408, 16
      %v1649 = vpop.permute.xlu0 %1648
      %1650 = vrot.lane.b32.xlu0 %v409, 16
      %v1651 = vpop.permute.xlu0 %1650
      %1652 = vrot.lane.b32.xlu0 %v410, 16
      %v1653 = vpop.permute.xlu0 %1652
      %1654 = vrot.lane.b32.xlu0 %v411, 16
      %v1655 = vpop.permute.xlu0 %1654
      %1656 = vrot.lane.b32.xlu0 %v412, 16
      %v1657 = vpop.permute.xlu0 %1656
      %1658 = vrot.lane.b32.xlu0 %v413, 16
      %v1659 = vpop.permute.xlu0 %1658
      %1660 = vrot.lane.b32.xlu0 %v414, 16
      %v1661 = vpop.permute.xlu0 %1660
      %1662 = vrot.lane.b32.xlu0 %v415, 16
      %v1663 = vpop.permute.xlu0 %1662
      %1664 = vrot.lane.b32.xlu0 %v416, 16
      %v1665 = vpop.permute.xlu0 %1664
      %1666 = vrot.lane.b32.xlu0 %v417, 16
      %v1667 = vpop.permute.xlu0 %1666
      %1668 = vrot.lane.b32.xlu0 %v418, 16
      %v1669 = vpop.permute.xlu0 %1668
      %1670 = vrot.lane.b32.xlu0 %v419, 16
      %v1671 = vpop.permute.xlu0 %1670
      %vm1704 = vcmask 162944
      %1705 = vst.msk [vmem:[#allocation2] sm:$0xff] %vm1704, %v1609
      %1706 = vst.msk [vmem:[#allocation2 + $0x8] sm:$0xff] %vm1704, %v1611
      %1707 = vst.msk [vmem:[#allocation2 + $0x10] sm:$0xff] %vm1704, %v1613
      %1708 = vst.msk [vmem:[#allocation2 + $0x18] sm:$0xff] %vm1704, %v1615
      %1709 = vst.msk [vmem:[#allocation2 + $0x20] sm:$0xff] %vm1704, %v1617
      %1710 = vst.msk [vmem:[#allocation2 + $0x28] sm:$0xff] %vm1704, %v1619
      %1711 = vst.msk [vmem:[#allocation2 + $0x30] sm:$0xff] %vm1704, %v1621
      %1712 = vst.msk [vmem:[#allocation2 + $0x38] sm:$0xff] %vm1704, %v1623
      %1713 = vst.msk [vmem:[#allocation2 + $0x40] sm:$0xff] %vm1704, %v1625
      %1714 = vst.msk [vmem:[#allocation2 + $0x48] sm:$0xff] %vm1704, %v1627
      %1715 = vst.msk [vmem:[#allocation2 + $0x50] sm:$0xff] %vm1704, %v1629
      %1716 = vst.msk [vmem:[#allocation2 + $0x58] sm:$0xff] %vm1704, %v1631
      %1717 = vst.msk [vmem:[#allocation2 + $0x60] sm:$0xff] %vm1704, %v1633
      %1718 = vst.msk [vmem:[#allocation2 + $0x68] sm:$0xff] %vm1704, %v1635
      %1719 = vst.msk [vmem:[#allocation2 + $0x70] sm:$0xff] %vm1704, %v1637
      %1720 = vst.msk [vmem:[#allocation2 + $0x78] sm:$0xff] %vm1704, %v1639
      %1721 = vst.msk [vmem:[#allocation2 + $0x80] sm:$0xff] %vm1704, %v1641
      %1722 = vst.msk [vmem:[#allocation2 + $0x88] sm:$0xff] %vm1704, %v1643
      %1723 = vst.msk [vmem:[#allocation2 + $0x90] sm:$0xff] %vm1704, %v1645
      %1724 = vst.msk [vmem:[#allocation2 + $0x98] sm:$0xff] %vm1704, %v1647
      %1725 = vst.msk [vmem:[#allocation2 + $0xa0] sm:$0xff] %vm1704, %v1649
      %1726 = vst.msk [vmem:[#allocation2 + $0xa8] sm:$0xff] %vm1704, %v1651
      %1727 = vst.msk [vmem:[#allocation2 + $0xb0] sm:$0xff] %vm1704, %v1653
      %1728 = vst.msk [vmem:[#allocation2 + $0xb8] sm:$0xff] %vm1704, %v1655
      %1729 = vst.msk [vmem:[#allocation2 + $0xc0] sm:$0xff] %vm1704, %v1657
      %1730 = vst.msk [vmem:[#allocation2 + $0xc8] sm:$0xff] %vm1704, %v1659
      %1731 = vst.msk [vmem:[#allocation2 + $0xd0] sm:$0xff] %vm1704, %v1661
      %1732 = vst.msk [vmem:[#allocation2 + $0xd8] sm:$0xff] %vm1704, %v1663
      %1733 = vst.msk [vmem:[#allocation2 + $0xe0] sm:$0xff] %vm1704, %v1665
      %1734 = vst.msk [vmem:[#allocation2 + $0xe8] sm:$0xff] %vm1704, %v1667
      %1735 = vst.msk [vmem:[#allocation2 + $0xf0] sm:$0xff] %vm1704, %v1669
      %1736 = vst.msk [vmem:[#allocation2 + $0xf8] sm:$0xff] %vm1704, %v1671
      %vm1737 = vcmask 188576
      %1738 = vst.msk [vmem:[#allocation2 + $0xff] sm:$0x1] %vm1737, 0.0
      %1740 = vrot.lane.b32.xlu0 %v1061, 20
      %v1741 = vpop.permute.xlu0 %1740
      %1742 = vrot.lane.b32.xlu0 %v1062, 20
      %v1743 = vpop.permute.xlu0 %1742
      %1744 = vrot.lane.b32.xlu0 %v1063, 20
      %v1745 = vpop.permute.xlu0 %1744
      %1746 = vrot.lane.b32.xlu0 %v1064, 20
      %v1747 = vpop.permute.xlu0 %1746
      %1748 = vrot.lane.b32.xlu0 %v1065, 20
      %v1749 = vpop.permute.xlu0 %1748
      %1750 = vrot.lane.b32.xlu0 %v1066, 20
      %v1751 = vpop.permute.xlu0 %1750
      %1752 = vrot.lane.b32.xlu0 %v1067, 20
      %v1753 = vpop.permute.xlu0 %1752
      %1754 = vrot.lane.b32.xlu0 %v1068, 20
      %v1755 = vpop.permute.xlu0 %1754
      %1756 = vrot.lane.b32.xlu0 %v1069, 20
      %v1757 = vpop.permute.xlu0 %1756
      %1758 = vrot.lane.b32.xlu0 %v1070, 20
      %v1759 = vpop.permute.xlu0 %1758
      %1760 = vrot.lane.b32.xlu0 %v1071, 20
      %v1761 = vpop.permute.xlu0 %1760
      %1762 = vrot.lane.b32.xlu0 %v1072, 20
      %v1763 = vpop.permute.xlu0 %1762
      %1764 = vrot.lane.b32.xlu0 %v1073, 20
      %v1765 = vpop.permute.xlu0 %1764
      %1766 = vrot.lane.b32.xlu0 %v1074, 20
      %v1767 = vpop.permute.xlu0 %1766
      %1768 = vrot.lane.b32.xlu0 %v1075, 20
      %v1769 = vpop.permute.xlu0 %1768
      %1770 = vrot.lane.b32.xlu0 %v1076, 20
      %v1771 = vpop.permute.xlu0 %1770
      %1772 = vrot.lane.b32.xlu0 %v1077, 20
      %v1773 = vpop.permute.xlu0 %1772
      %1774 = vrot.lane.b32.xlu0 %v1078, 20
      %v1775 = vpop.permute.xlu0 %1774
      %1776 = vrot.lane.b32.xlu0 %v1079, 20
      %v1777 = vpop.permute.xlu0 %1776
      %1778 = vrot.lane.b32.xlu0 %v1080, 20
      %v1779 = vpop.permute.xlu0 %1778
      %1780 = vrot.lane.b32.xlu0 %v1081, 20
      %v1781 = vpop.permute.xlu0 %1780
      %1782 = vrot.lane.b32.xlu0 %v1082, 20
      %v1783 = vpop.permute.xlu0 %1782
      %1784 = vrot.lane.b32.xlu0 %v1083, 20
      %v1785 = vpop.permute.xlu0 %1784
      %1786 = vrot.lane.b32.xlu0 %v1084, 20
      %v1787 = vpop.permute.xlu0 %1786
      %1788 = vrot.lane.b32.xlu0 %v1085, 20
      %v1789 = vpop.permute.xlu0 %1788
      %1790 = vrot.lane.b32.xlu0 %v1086, 20
      %v1791 = vpop.permute.xlu0 %1790
      %1792 = vrot.lane.b32.xlu0 %v1087, 20
      %v1793 = vpop.permute.xlu0 %1792
      %1794 = vrot.lane.b32.xlu0 %v1088, 20
      %v1795 = vpop.permute.xlu0 %1794
      %1796 = vrot.lane.b32.xlu0 %v1089, 20
      %v1797 = vpop.permute.xlu0 %1796
      %1798 = vrot.lane.b32.xlu0 %v1090, 20
      %v1799 = vpop.permute.xlu0 %1798
      %1800 = vrot.lane.b32.xlu0 %v1091, 20
      %v1801 = vpop.permute.xlu0 %1800
      %1802 = vrot.lane.b32.xlu0 %v1092, 20
      %v1803 = vpop.permute.xlu0 %1802
      %vm1836 = vcmask 195745
      %1837 = vst.msk [vmem:[#allocation2 - $0x1] sm:$0xfe] %vm1836, %v1741
      %vm1838 = vcmask 195744
      %1839 = vst.msk [vmem:[#allocation2 + $0x7] sm:$0xff] %vm1838, %v1743
      %1840 = vst.msk [vmem:[#allocation2 + $0xf] sm:$0xff] %vm1838, %v1745
      %1841 = vst.msk [vmem:[#allocation2 + $0x17] sm:$0xff] %vm1838, %v1747
      %1842 = vst.msk [vmem:[#allocation2 + $0x1f] sm:$0xff] %vm1838, %v1749
      %1843 = vst.msk [vmem:[#allocation2 + $0x27] sm:$0xff] %vm1838, %v1751
      %1844 = vst.msk [vmem:[#allocation2 + $0x2f] sm:$0xff] %vm1838, %v1753
      %1845 = vst.msk [vmem:[#allocation2 + $0x37] sm:$0xff] %vm1838, %v1755
      %1846 = vst.msk [vmem:[#allocation2 + $0x3f] sm:$0xff] %vm1838, %v1757
      %1847 = vst.msk [vmem:[#allocation2 + $0x47] sm:$0xff] %vm1838, %v1759
      %1848 = vst.msk [vmem:[#allocation2 + $0x4f] sm:$0xff] %vm1838, %v1761
      %1849 = vst.msk [vmem:[#allocation2 + $0x57] sm:$0xff] %vm1838, %v1763
      %1850 = vst.msk [vmem:[#allocation2 + $0x5f] sm:$0xff] %vm1838, %v1765
      %1851 = vst.msk [vmem:[#allocation2 + $0x67] sm:$0xff] %vm1838, %v1767
      %1852 = vst.msk [vmem:[#allocation2 + $0x6f] sm:$0xff] %vm1838, %v1769
      %1853 = vst.msk [vmem:[#allocation2 + $0x77] sm:$0xff] %vm1838, %v1771
      %1854 = vst.msk [vmem:[#allocation2 + $0x7f] sm:$0xff] %vm1838, %v1773
      %1855 = vst.msk [vmem:[#allocation2 + $0x87] sm:$0xff] %vm1838, %v1775
      %1856 = vst.msk [vmem:[#allocation2 + $0x8f] sm:$0xff] %vm1838, %v1777
      %1857 = vst.msk [vmem:[#allocation2 + $0x97] sm:$0xff] %vm1838, %v1779
      %1858 = vst.msk [vmem:[#allocation2 + $0x9f] sm:$0xff] %vm1838, %v1781
      %1859 = vst.msk [vmem:[#allocation2 + $0xa7] sm:$0xff] %vm1838, %v1783
      %1860 = vst.msk [vmem:[#allocation2 + $0xaf] sm:$0xff] %vm1838, %v1785
      %1861 = vst.msk [vmem:[#allocation2 + $0xb7] sm:$0xff] %vm1838, %v1787
      %1862 = vst.msk [vmem:[#allocation2 + $0xbf] sm:$0xff] %vm1838, %v1789
      %1863 = vst.msk [vmem:[#allocation2 + $0xc7] sm:$0xff] %vm1838, %v1791
      %1864 = vst.msk [vmem:[#allocation2 + $0xcf] sm:$0xff] %vm1838, %v1793
      %1865 = vst.msk [vmem:[#allocation2 + $0xd7] sm:$0xff] %vm1838, %v1795
      %1866 = vst.msk [vmem:[#allocation2 + $0xdf] sm:$0xff] %vm1838, %v1797
      %1867 = vst.msk [vmem:[#allocation2 + $0xe7] sm:$0xff] %vm1838, %v1799
      %1868 = vst.msk [vmem:[#allocation2 + $0xef] sm:$0xff] %vm1838, %v1801
      %1869 = vst.msk [vmem:[#allocation2 + $0xf7] sm:$0xff] %vm1838, %v1803
      %vm1870 = vcmask 228544
      %1871 = vst.msk [vmem:[#allocation2 + $0xf1] sm:$0xff] %vm1870, 0.0
      %vm1872 = vcmask 227520
      %1873 = vst.msk [vmem:[#allocation2 + $0xf9] sm:$0x7f] %vm1872, 0.0
      %1874 = vrot.lane.b32.xlu0 %v934, 24
      %v1875 = vpop.permute.xlu0 %1874
      %1876 = vrot.lane.b32.xlu0 %v935, 24
      %v1877 = vpop.permute.xlu0 %1876
      %1878 = vrot.lane.b32.xlu0 %v936, 24
      %v1879 = vpop.permute.xlu0 %1878
      %1880 = vrot.lane.b32.xlu0 %v937, 24
      %v1881 = vpop.permute.xlu0 %1880
      %1882 = vrot.lane.b32.xlu0 %v938, 24
      %v1883 = vpop.permute.xlu0 %1882
      %1884 = vrot.lane.b32.xlu0 %v939, 24
      %v1885 = vpop.permute.xlu0 %1884
      %1886 = vrot.lane.b32.xlu0 %v940, 24
      %v1887 = vpop.permute.xlu0 %1886
      %1888 = vrot.lane.b32.xlu0 %v941, 24
      %v1889 = vpop.permute.xlu0 %1888
      %1890 = vrot.lane.b32.xlu0 %v942, 24
      %v1891 = vpop.permute.xlu0 %1890
      %1892 = vrot.lane.b32.xlu0 %v943, 24
      %v1893 = vpop.permute.xlu0 %1892
      %1894 = vrot.lane.b32.xlu0 %v944, 24
      %v1895 = vpop.permute.xlu0 %1894
      %1896 = vrot.lane.b32.xlu0 %v945, 24
      %v1897 = vpop.permute.xlu0 %1896
      %1898 = vrot.lane.b32.xlu0 %v946, 24
      %v1899 = vpop.permute.xlu0 %1898
      %1900 = vrot.lane.b32.xlu0 %v947, 24
      %v1901 = vpop.permute.xlu0 %1900
      %1902 = vrot.lane.b32.xlu0 %v948, 24
      %v1903 = vpop.permute.xlu0 %1902
      %1904 = vrot.lane.b32.xlu0 %v949, 24
      %v1905 = vpop.permute.xlu0 %1904
      %1906 = vrot.lane.b32.xlu0 %v950, 24
      %v1907 = vpop.permute.xlu0 %1906
      %1908 = vrot.lane.b32.xlu0 %v951, 24
      %v1909 = vpop.permute.xlu0 %1908
      %1910 = vrot.lane.b32.xlu0 %v952, 24
      %v1911 = vpop.permute.xlu0 %1910
      %1912 = vrot.lane.b32.xlu0 %v953, 24
      %v1913 = vpop.permute.xlu0 %1912
      %1914 = vrot.lane.b32.xlu0 %v954, 24
      %v1915 = vpop.permute.xlu0 %1914
      %1916 = vrot.lane.b32.xlu0 %v955, 24
      %v1917 = vpop.permute.xlu0 %1916
      %1918 = vrot.lane.b32.xlu0 %v956, 24
      %v1919 = vpop.permute.xlu0 %1918
      %1920 = vrot.lane.b32.xlu0 %v957, 24
      %v1921 = vpop.permute.xlu0 %1920
      %1922 = vrot.lane.b32.xlu0 %v958, 24
      %v1923 = vpop.permute.xlu0 %1922
      %1924 = vrot.lane.b32.xlu0 %v959, 24
      %v1925 = vpop.permute.xlu0 %1924
      %1926 = vrot.lane.b32.xlu0 %v960, 24
      %v1927 = vpop.permute.xlu0 %1926
      %1928 = vrot.lane.b32.xlu0 %v961, 24
      %v1929 = vpop.permute.xlu0 %1928
      %1930 = vrot.lane.b32.xlu0 %v962, 24
      %v1931 = vpop.permute.xlu0 %1930
      %1932 = vrot.lane.b32.xlu0 %v963, 24
      %v1933 = vpop.permute.xlu0 %1932
      %1934 = vrot.lane.b32.xlu0 %v964, 24
      %v1935 = vpop.permute.xlu0 %1934
      %vm1967 = vcmask 228551
      %1968 = vst.msk [vmem:[#allocation2 - $0x7] sm:$0x80] %vm1967, %v1875
      %1969 = vst.msk [vmem:[#allocation2 + $0x1] sm:$0xff] %vm1870, %v1877
      %1970 = vst.msk [vmem:[#allocation2 + $0x9] sm:$0xff] %vm1870, %v1879
      %1971 = vst.msk [vmem:[#allocation2 + $0x11] sm:$0xff] %vm1870, %v1881
      %1972 = vst.msk [vmem:[#allocation2 + $0x19] sm:$0xff] %vm1870, %v1883
      %1973 = vst.msk [vmem:[#allocation2 + $0x21] sm:$0xff] %vm1870, %v1885
      %1974 = vst.msk [vmem:[#allocation2 + $0x29] sm:$0xff] %vm1870, %v1887
      %1975 = vst.msk [vmem:[#allocation2 + $0x31] sm:$0xff] %vm1870, %v1889
      %1976 = vst.msk [vmem:[#allocation2 + $0x39] sm:$0xff] %vm1870, %v1891
      %1977 = vst.msk [vmem:[#allocation2 + $0x41] sm:$0xff] %vm1870, %v1893
      %1978 = vst.msk [vmem:[#allocation2 + $0x49] sm:$0xff] %vm1870, %v1895
      %1979 = vst.msk [vmem:[#allocation2 + $0x51] sm:$0xff] %vm1870, %v1897
      %1980 = vst.msk [vmem:[#allocation2 + $0x59] sm:$0xff] %vm1870, %v1899
      %1981 = vst.msk [vmem:[#allocation2 + $0x61] sm:$0xff] %vm1870, %v1901
      %1982 = vst.msk [vmem:[#allocation2 + $0x69] sm:$0xff] %vm1870, %v1903
      %1983 = vst.msk [vmem:[#allocation2 + $0x71] sm:$0xff] %vm1870, %v1905
      %1984 = vst.msk [vmem:[#allocation2 + $0x79] sm:$0xff] %vm1870, %v1907
      %1985 = vst.msk [vmem:[#allocation2 + $0x81] sm:$0xff] %vm1870, %v1909
      %1986 = vst.msk [vmem:[#allocation2 + $0x89] sm:$0xff] %vm1870, %v1911
      %1987 = vst.msk [vmem:[#allocation2 + $0x91] sm:$0xff] %vm1870, %v1913
      %1988 = vst.msk [vmem:[#allocation2 + $0x99] sm:$0xff] %vm1870, %v1915
      %1989 = vst.msk [vmem:[#allocation2 + $0xa1] sm:$0xff] %vm1870, %v1917
      %1990 = vst.msk [vmem:[#allocation2 + $0xa9] sm:$0xff] %vm1870, %v1919
      %1991 = vst.msk [vmem:[#allocation2 + $0xb1] sm:$0xff] %vm1870, %v1921
      %1992 = vst.msk [vmem:[#allocation2 + $0xb9] sm:$0xff] %vm1870, %v1923
      %1993 = vst.msk [vmem:[#allocation2 + $0xc1] sm:$0xff] %vm1870, %v1925
      %1994 = vst.msk [vmem:[#allocation2 + $0xc9] sm:$0xff] %vm1870, %v1927
      %1995 = vst.msk [vmem:[#allocation2 + $0xd1] sm:$0xff] %vm1870, %v1929
      %1996 = vst.msk [vmem:[#allocation2 + $0xd9] sm:$0xff] %vm1870, %v1931
      %1997 = vst.msk [vmem:[#allocation2 + $0xe1] sm:$0xff] %vm1870, %v1933
      %1998 = vst.msk [vmem:[#allocation2 + $0xe9] sm:$0xff] %vm1870, %v1935
      %vm1999 = vcmask 261344
      %2000 = vst.msk [vmem:[#allocation2 + $0xf0] sm:$0xff] %vm1999, 0.0
      %2001 = vst.msk [vmem:[#allocation2 + $0xf8] sm:$0xff] %vm1999, 0.0
      %2002 = vrot.lane.b32.xlu0 %v390, 28
      %v2003 = vpop.permute.xlu0 %2002
      %2004 = vrot.lane.b32.xlu0 %v391, 28
      %v2005 = vpop.permute.xlu0 %2004
      %2006 = vrot.lane.b32.xlu0 %v392, 28
      %v2007 = vpop.permute.xlu0 %2006
      %2008 = vrot.lane.b32.xlu0 %v393, 28
      %v2009 = vpop.permute.xlu0 %2008
      %2010 = vrot.lane.b32.xlu0 %v394, 28
      %v2011 = vpop.permute.xlu0 %2010
      %2012 = vrot.lane.b32.xlu0 %v395, 28
      %v2013 = vpop.permute.xlu0 %2012
      %2014 = vrot.lane.b32.xlu0 %v396, 28
      %v2015 = vpop.permute.xlu0 %2014
      %2016 = vrot.lane.b32.xlu0 %v397, 28
      %v2017 = vpop.permute.xlu0 %2016
      %2018 = vrot.lane.b32.xlu0 %v398, 28
      %v2019 = vpop.permute.xlu0 %2018
      %2020 = vrot.lane.b32.xlu0 %v399, 28
      %v2021 = vpop.permute.xlu0 %2020
      %2022 = vrot.lane.b32.xlu0 %v400, 28
      %v2023 = vpop.permute.xlu0 %2022
      %2024 = vrot.lane.b32.xlu0 %v401, 28
      %v2025 = vpop.permute.xlu0 %2024
      %2026 = vrot.lane.b32.xlu0 %v402, 28
      %v2027 = vpop.permute.xlu0 %2026
      %2028 = vrot.lane.b32.xlu0 %v403, 28
      %v2029 = vpop.permute.xlu0 %2028
      %2030 = vrot.lane.b32.xlu0 %v404, 28
      %v2031 = vpop.permute.xlu0 %2030
      %2032 = vrot.lane.b32.xlu0 %v405, 28
      %v2033 = vpop.permute.xlu0 %2032
      %2034 = vrot.lane.b32.xlu0 %v406, 28
      %v2035 = vpop.permute.xlu0 %2034
      %2036 = vrot.lane.b32.xlu0 %v407, 28
      %v2037 = vpop.permute.xlu0 %2036
      %2038 = vrot.lane.b32.xlu0 %v408, 28
      %v2039 = vpop.permute.xlu0 %2038
      %2040 = vrot.lane.b32.xlu0 %v409, 28
      %v2041 = vpop.permute.xlu0 %2040
      %2042 = vrot.lane.b32.xlu0 %v410, 28
      %v2043 = vpop.permute.xlu0 %2042
      %2044 = vrot.lane.b32.xlu0 %v411, 28
      %v2045 = vpop.permute.xlu0 %2044
      %2046 = vrot.lane.b32.xlu0 %v412, 28
      %v2047 = vpop.permute.xlu0 %2046
      %2048 = vrot.lane.b32.xlu0 %v413, 28
      %v2049 = vpop.permute.xlu0 %2048
      %2050 = vrot.lane.b32.xlu0 %v414, 28
      %v2051 = vpop.permute.xlu0 %2050
      %2052 = vrot.lane.b32.xlu0 %v415, 28
      %v2053 = vpop.permute.xlu0 %2052
      %2054 = vrot.lane.b32.xlu0 %v416, 28
      %v2055 = vpop.permute.xlu0 %2054
      %2056 = vrot.lane.b32.xlu0 %v417, 28
      %v2057 = vpop.permute.xlu0 %2056
      %2058 = vrot.lane.b32.xlu0 %v418, 28
      %v2059 = vpop.permute.xlu0 %2058
      %2060 = vrot.lane.b32.xlu0 %v419, 28
      %v2061 = vpop.permute.xlu0 %2060
      %2092 = vst.msk [vmem:[#allocation2] sm:$0xff] %vm1999, %v2003
      %2093 = vst.msk [vmem:[#allocation2 + $0x8] sm:$0xff] %vm1999, %v2005
      %2094 = vst.msk [vmem:[#allocation2 + $0x10] sm:$0xff] %vm1999, %v2007
      %2095 = vst.msk [vmem:[#allocation2 + $0x18] sm:$0xff] %vm1999, %v2009
      %2096 = vst.msk [vmem:[#allocation2 + $0x20] sm:$0xff] %vm1999, %v2011
      %2097 = vst.msk [vmem:[#allocation2 + $0x28] sm:$0xff] %vm1999, %v2013
      %2098 = vst.msk [vmem:[#allocation2 + $0x30] sm:$0xff] %vm1999, %v2015
      %2099 = vst.msk [vmem:[#allocation2 + $0x38] sm:$0xff] %vm1999, %v2017
      %2100 = vst.msk [vmem:[#allocation2 + $0x40] sm:$0xff] %vm1999, %v2019
      %2101 = vst.msk [vmem:[#allocation2 + $0x48] sm:$0xff] %vm1999, %v2021
      %2102 = vst.msk [vmem:[#allocation2 + $0x50] sm:$0xff] %vm1999, %v2023
      %2103 = vst.msk [vmem:[#allocation2 + $0x58] sm:$0xff] %vm1999, %v2025
      %2104 = vst.msk [vmem:[#allocation2 + $0x60] sm:$0xff] %vm1999, %v2027
      %2105 = vst.msk [vmem:[#allocation2 + $0x68] sm:$0xff] %vm1999, %v2029
      %2106 = vst.msk [vmem:[#allocation2 + $0x70] sm:$0xff] %vm1999, %v2031
      %2107 = vst.msk [vmem:[#allocation2 + $0x78] sm:$0xff] %vm1999, %v2033
      %2108 = vst.msk [vmem:[#allocation2 + $0x80] sm:$0xff] %vm1999, %v2035
      %2109 = vst.msk [vmem:[#allocation2 + $0x88] sm:$0xff] %vm1999, %v2037
      %2110 = vst.msk [vmem:[#allocation2 + $0x90] sm:$0xff] %vm1999, %v2039
      %2111 = vst.msk [vmem:[#allocation2 + $0x98] sm:$0xff] %vm1999, %v2041
      %2112 = vst.msk [vmem:[#allocation2 + $0xa0] sm:$0xff] %vm1999, %v2043
      %2113 = vst.msk [vmem:[#allocation2 + $0xa8] sm:$0xff] %vm1999, %v2045
      %2114 = vst.msk [vmem:[#allocation2 + $0xb0] sm:$0xff] %vm1999, %v2047
      %2115 = vst.msk [vmem:[#allocation2 + $0xb8] sm:$0xff] %vm1999, %v2049
      %2116 = vst.msk [vmem:[#allocation2 + $0xc0] sm:$0xff] %vm1999, %v2051
      %2117 = vst.msk [vmem:[#allocation2 + $0xc8] sm:$0xff] %vm1999, %v2053
      %2118 = vst.msk [vmem:[#allocation2 + $0xd0] sm:$0xff] %vm1999, %v2055
      %2119 = vst.msk [vmem:[#allocation2 + $0xd8] sm:$0xff] %vm1999, %v2057
      %2120 = vst.msk [vmem:[#allocation2 + $0xe0] sm:$0xff] %vm1999, %v2059
      %2121 = vst.msk [vmem:[#allocation2 + $0xe8] sm:$0xff] %vm1999, %v2061
      %vm2122 = vcmask 294144
      %2123 = vst.msk [vmem:[#allocation2 + $0xef] sm:$0xff] %vm2122, 0.0
      %2124 = vst.msk [vmem:[#allocation2 + $0xf7] sm:$0xff] %vm2122, 0.0
      %vm2125 = vcmask 286976
      %2126 = vst.msk [vmem:[#allocation2 + $0xff] sm:$0x1] %vm2125, 0.0
      %2127 = vrot.lane.b32.xlu0 %v1063, 32
      %v2128 = vpop.permute.xlu0 %2127
      %2129 = vrot.lane.b32.xlu0 %v1064, 32
      %v2130 = vpop.permute.xlu0 %2129
      %2131 = vrot.lane.b32.xlu0 %v1065, 32
      %v2132 = vpop.permute.xlu0 %2131
      %2133 = vrot.lane.b32.xlu0 %v1066, 32
      %v2134 = vpop.permute.xlu0 %2133
      %2135 = vrot.lane.b32.xlu0 %v1067, 32
      %v2136 = vpop.permute.xlu0 %2135
      %2137 = vrot.lane.b32.xlu0 %v1068, 32
      %v2138 = vpop.permute.xlu0 %2137
      %2139 = vrot.lane.b32.xlu0 %v1069, 32
      %v2140 = vpop.permute.xlu0 %2139
      %2141 = vrot.lane.b32.xlu0 %v1070, 32
      %v2142 = vpop.permute.xlu0 %2141
      %2143 = vrot.lane.b32.xlu0 %v1071, 32
      %v2144 = vpop.permute.xlu0 %2143
      %2145 = vrot.lane.b32.xlu0 %v1072, 32
      %v2146 = vpop.permute.xlu0 %2145
      %2147 = vrot.lane.b32.xlu0 %v1073, 32
      %v2148 = vpop.permute.xlu0 %2147
      %2149 = vrot.lane.b32.xlu0 %v1074, 32
      %v2150 = vpop.permute.xlu0 %2149
      %2151 = vrot.lane.b32.xlu0 %v1075, 32
      %v2152 = vpop.permute.xlu0 %2151
      %2153 = vrot.lane.b32.xlu0 %v1076, 32
      %v2154 = vpop.permute.xlu0 %2153
      %2155 = vrot.lane.b32.xlu0 %v1077, 32
      %v2156 = vpop.permute.xlu0 %2155
      %2157 = vrot.lane.b32.xlu0 %v1078, 32
      %v2158 = vpop.permute.xlu0 %2157
      %2159 = vrot.lane.b32.xlu0 %v1079, 32
      %v2160 = vpop.permute.xlu0 %2159
      %2161 = vrot.lane.b32.xlu0 %v1080, 32
      %v2162 = vpop.permute.xlu0 %2161
      %2163 = vrot.lane.b32.xlu0 %v1081, 32
      %v2164 = vpop.permute.xlu0 %2163
      %2165 = vrot.lane.b32.xlu0 %v1082, 32
      %v2166 = vpop.permute.xlu0 %2165
      %2167 = vrot.lane.b32.xlu0 %v1083, 32
      %v2168 = vpop.permute.xlu0 %2167
      %2169 = vrot.lane.b32.xlu0 %v1084, 32
      %v2170 = vpop.permute.xlu0 %2169
      %2171 = vrot.lane.b32.xlu0 %v1085, 32
      %v2172 = vpop.permute.xlu0 %2171
      %2173 = vrot.lane.b32.xlu0 %v1086, 32
      %v2174 = vpop.permute.xlu0 %2173
      %2175 = vrot.lane.b32.xlu0 %v1087, 32
      %v2176 = vpop.permute.xlu0 %2175
      %2177 = vrot.lane.b32.xlu0 %v1088, 32
      %v2178 = vpop.permute.xlu0 %2177
      %2179 = vrot.lane.b32.xlu0 %v1089, 32
      %v2180 = vpop.permute.xlu0 %2179
      %2181 = vrot.lane.b32.xlu0 %v1090, 32
      %v2182 = vpop.permute.xlu0 %2181
      %2183 = vrot.lane.b32.xlu0 %v1091, 32
      %v2184 = vpop.permute.xlu0 %2183
      %2185 = vrot.lane.b32.xlu0 %v1092, 32
      %v2186 = vpop.permute.xlu0 %2185
      %vm2217 = vcmask 294145
      %2218 = vst.msk [vmem:[#allocation2 - $0x1] sm:$0xfe] %vm2217, %v2128
      %2219 = vst.msk [vmem:[#allocation2 + $0x7] sm:$0xff] %vm2122, %v2130
      %2220 = vst.msk [vmem:[#allocation2 + $0xf] sm:$0xff] %vm2122, %v2132
      %2221 = vst.msk [vmem:[#allocation2 + $0x17] sm:$0xff] %vm2122, %v2134
      %2222 = vst.msk [vmem:[#allocation2 + $0x1f] sm:$0xff] %vm2122, %v2136
      %2223 = vst.msk [vmem:[#allocation2 + $0x27] sm:$0xff] %vm2122, %v2138
      %2224 = vst.msk [vmem:[#allocation2 + $0x2f] sm:$0xff] %vm2122, %v2140
      %2225 = vst.msk [vmem:[#allocation2 + $0x37] sm:$0xff] %vm2122, %v2142
      %2226 = vst.msk [vmem:[#allocation2 + $0x3f] sm:$0xff] %vm2122, %v2144
      %2227 = vst.msk [vmem:[#allocation2 + $0x47] sm:$0xff] %vm2122, %v2146
      %2228 = vst.msk [vmem:[#allocation2 + $0x4f] sm:$0xff] %vm2122, %v2148
      %2229 = vst.msk [vmem:[#allocation2 + $0x57] sm:$0xff] %vm2122, %v2150
      %2230 = vst.msk [vmem:[#allocation2 + $0x5f] sm:$0xff] %vm2122, %v2152
      %2231 = vst.msk [vmem:[#allocation2 + $0x67] sm:$0xff] %vm2122, %v2154
      %2232 = vst.msk [vmem:[#allocation2 + $0x6f] sm:$0xff] %vm2122, %v2156
      %2233 = vst.msk [vmem:[#allocation2 + $0x77] sm:$0xff] %vm2122, %v2158
      %2234 = vst.msk [vmem:[#allocation2 + $0x7f] sm:$0xff] %vm2122, %v2160
      %2235 = vst.msk [vmem:[#allocation2 + $0x87] sm:$0xff] %vm2122, %v2162
      %2236 = vst.msk [vmem:[#allocation2 + $0x8f] sm:$0xff] %vm2122, %v2164
      %2237 = vst.msk [vmem:[#allocation2 + $0x97] sm:$0xff] %vm2122, %v2166
      %2238 = vst.msk [vmem:[#allocation2 + $0x9f] sm:$0xff] %vm2122, %v2168
      %2239 = vst.msk [vmem:[#allocation2 + $0xa7] sm:$0xff] %vm2122, %v2170
      %2240 = vst.msk [vmem:[#allocation2 + $0xaf] sm:$0xff] %vm2122, %v2172
      %2241 = vst.msk [vmem:[#allocation2 + $0xb7] sm:$0xff] %vm2122, %v2174
      %2242 = vst.msk [vmem:[#allocation2 + $0xbf] sm:$0xff] %vm2122, %v2176
      %2243 = vst.msk [vmem:[#allocation2 + $0xc7] sm:$0xff] %vm2122, %v2178
      %2244 = vst.msk [vmem:[#allocation2 + $0xcf] sm:$0xff] %vm2122, %v2180
      %2245 = vst.msk [vmem:[#allocation2 + $0xd7] sm:$0xff] %vm2122, %v2182
      %2246 = vst.msk [vmem:[#allocation2 + $0xdf] sm:$0xff] %vm2122, %v2184
      %2247 = vst.msk [vmem:[#allocation2 + $0xe7] sm:$0xff] %vm2122, %v2186
      %v2248 = vld [vmem:[#allocation2] sm:$0xff]
      %v2249 = vld [vmem:[#allocation2 + $0x8] sm:$0xff]
      %v2250 = vld [vmem:[#allocation2 + $0x10] sm:$0xff]
      %v2251 = vld [vmem:[#allocation2 + $0x18] sm:$0xff]
      %v2252 = vld [vmem:[#allocation2 + $0x20] sm:$0xff]
      %v2253 = vld [vmem:[#allocation2 + $0x28] sm:$0xff]
      %v2254 = vld [vmem:[#allocation2 + $0x30] sm:$0xff]
      %v2255 = vld [vmem:[#allocation2 + $0x38] sm:$0xff]
      %v2256 = vld [vmem:[#allocation2 + $0x40] sm:$0xff]
      %v2257 = vld [vmem:[#allocation2 + $0x48] sm:$0xff]
      %v2258 = vld [vmem:[#allocation2 + $0x50] sm:$0xff]
      %v2259 = vld [vmem:[#allocation2 + $0x58] sm:$0xff]
      %v2260 = vld [vmem:[#allocation2 + $0x60] sm:$0xff]
      %v2261 = vld [vmem:[#allocation2 + $0x68] sm:$0xff]
      %v2262 = vld [vmem:[#allocation2 + $0x70] sm:$0xff]
      %v2263 = vld [vmem:[#allocation2 + $0x78] sm:$0xff]
      %v2264 = vld [vmem:[#allocation2 + $0x80] sm:$0xff]
      %v2265 = vld [vmem:[#allocation2 + $0x88] sm:$0xff]
      %v2266 = vld [vmem:[#allocation2 + $0x90] sm:$0xff]
      %v2267 = vld [vmem:[#allocation2 + $0x98] sm:$0xff]
      %v2268 = vld [vmem:[#allocation2 + $0xa0] sm:$0xff]
      %v2269 = vld [vmem:[#allocation2 + $0xa8] sm:$0xff]
      %v2270 = vld [vmem:[#allocation2 + $0xb0] sm:$0xff]
      %v2271 = vld [vmem:[#allocation2 + $0xb8] sm:$0xff]
      %v2272 = vld [vmem:[#allocation2 + $0xc0] sm:$0xff]
      %v2273 = vld [vmem:[#allocation2 + $0xc8] sm:$0xff]
      %v2274 = vld [vmem:[#allocation2 + $0xd0] sm:$0xff]
      %v2275 = vld [vmem:[#allocation2 + $0xd8] sm:$0xff]
      %v2276 = vld [vmem:[#allocation2 + $0xe0] sm:$0xff]
      %v2277 = vld [vmem:[#allocation2 + $0xe8] sm:$0xff]
      %v2278 = vld [vmem:[#allocation2 + $0xf0] sm:$0xff]
      %v2279 = vld [vmem:[#allocation2 + $0xf8] sm:$0xff]
      %v2280 = vpack.c.bf16 %v2249, %v2248
      %v2281 = vpack.c.bf16 %v2251, %v2250
      %v2282 = vpack.c.bf16 %v2253, %v2252
      %v2283 = vpack.c.bf16 %v2255, %v2254
      %v2284 = vpack.c.bf16 %v2257, %v2256
      %v2285 = vpack.c.bf16 %v2259, %v2258
      %v2286 = vpack.c.bf16 %v2261, %v2260
      %v2287 = vpack.c.bf16 %v2263, %v2262
      %v2288 = vpack.c.bf16 %v2265, %v2264
      %v2289 = vpack.c.bf16 %v2267, %v2266
      %v2290 = vpack.c.bf16 %v2269, %v2268
      %v2291 = vpack.c.bf16 %v2271, %v2270
      %v2292 = vpack.c.bf16 %v2273, %v2272
      %v2293 = vpack.c.bf16 %v2275, %v2274
      %v2294 = vpack.c.bf16 %v2277, %v2276
      %v2295 = vpack.c.bf16 %v2279, %v2278
      %v2296 = vld [vmem:[%s266] sm:$0xff]
      %v2297 = vld [vmem:[%s266 + $0x8] sm:$0xff]
      %v2298 = vld [vmem:[%s266 + $0x10] sm:$0xff]
      %v2299 = vld [vmem:[%s266 + $0x18] sm:$0xff]
      %v2300 = vld [vmem:[%s266 + $0x20] sm:$0xff]
      %v2301 = vld [vmem:[%s266 + $0x28] sm:$0xff]
      %v2302 = vld [vmem:[%s266 + $0x30] sm:$0xff]
      %v2303 = vld [vmem:[%s266 + $0x38] sm:$0xff]
      %v2304 = vld [vmem:[%s266 + $0x40] sm:$0xff]
      %v2305 = vld [vmem:[%s266 + $0x48] sm:$0xff]
      %v2306 = vld [vmem:[%s266 + $0x50] sm:$0xff]
      %v2307 = vld [vmem:[%s266 + $0x58] sm:$0xff]
      %v2308 = vld [vmem:[%s266 + $0x60] sm:$0xff]
      %v2309 = vld [vmem:[%s266 + $0x68] sm:$0xff]
      %v2310 = vld [vmem:[%s266 + $0x70] sm:$0xff]
      %v2311 = vld [vmem:[%s266 + $0x78] sm:$0xff]
      %v2312 = vld [vmem:[%s266 + $0x80] sm:$0xff]
      %v2313 = vld [vmem:[%s266 + $0x88] sm:$0xff]
      %v2314 = vld [vmem:[%s266 + $0x90] sm:$0xff]
      %v2315 = vld [vmem:[%s266 + $0x98] sm:$0xff]
      %v2316 = vld [vmem:[%s266 + $0xa0] sm:$0xff]
      %v2317 = vld [vmem:[%s266 + $0xa8] sm:$0xff]
      %v2318 = vld [vmem:[%s266 + $0xb0] sm:$0xff]
      %v2319 = vld [vmem:[%s266 + $0xb8] sm:$0xff]
      %v2320 = vld [vmem:[%s266 + $0xc0] sm:$0xff]
      %v2321 = vld [vmem:[%s266 + $0xc8] sm:$0xff]
      %v2322 = vld [vmem:[%s266 + $0xd0] sm:$0xff]
      %v2323 = vld [vmem:[%s266 + $0xd8] sm:$0xff]
      %v2324 = vld [vmem:[%s266 + $0xe0] sm:$0xff]
      %v2325 = vld [vmem:[%s266 + $0xe8] sm:$0xff]
      %v2326 = vld [vmem:[%s266 + $0xf0] sm:$0xff]
      %v2327 = vld [vmem:[%s266 + $0xf8] sm:$0xff]
      %v2328 = vsel %vm1093, %v2296, 0.0
      %v2329 = vsel %vm1093, %v2297, 0.0
      %v2330 = vsel %vm1093, %v2298, 0.0
      %v2331 = vsel %vm1093, %v2299, 0.0
      %v2332 = vsel %vm1093, %v2300, 0.0
      %v2333 = vsel %vm1093, %v2301, 0.0
      %v2334 = vsel %vm1093, %v2302, 0.0
      %v2335 = vsel %vm1093, %v2303, 0.0
      %v2336 = vsel %vm1093, %v2304, 0.0
      %v2337 = vsel %vm1093, %v2305, 0.0
      %v2338 = vsel %vm1093, %v2306, 0.0
      %v2339 = vsel %vm1093, %v2307, 0.0
      %v2340 = vsel %vm1093, %v2308, 0.0
      %v2341 = vsel %vm1093, %v2309, 0.0
      %v2342 = vsel %vm1093, %v2310, 0.0
      %v2343 = vsel %vm1093, %v2311, 0.0
      %v2344 = vsel %vm1093, %v2312, 0.0
      %v2345 = vsel %vm1093, %v2313, 0.0
      %v2346 = vsel %vm1093, %v2314, 0.0
      %v2347 = vsel %vm1093, %v2315, 0.0
      %v2348 = vsel %vm1093, %v2316, 0.0
      %v2349 = vsel %vm1093, %v2317, 0.0
      %v2350 = vsel %vm1093, %v2318, 0.0
      %v2351 = vsel %vm1093, %v2319, 0.0
      %v2352 = vsel %vm1093, %v2320, 0.0
      %v2353 = vsel %vm1093, %v2321, 0.0
      %v2354 = vsel %vm1093, %v2322, 0.0
      %v2355 = vsel %vm1093, %v2323, 0.0
      %v2356 = vsel %vm1093, %v2324, 0.0
      %v2357 = vsel %vm1093, %v2325, 0.0
      %v2358 = vsel %vm1093, %v2326, 0.0
      %v2359 = vsel %vm1093, %v2327, 0.0
      %v2360 = vld [vmem:[%s5] sm:$0x1]
      %v2362 = vlaneseq
      %v2363 = vshrl.u32 %v2362, 7
      %v2364 = vsub.s32 0, %v2363
      %v2365 = vrot.slane %v2360, %v2364
      %v2372 = vunpack.c.l.b16 %v307
      %v2373 = vunpack.c.l.b16 %v308
      %v2374 = vunpack.c.l.b16 %v309
      %v2375 = vunpack.c.l.b16 %v310
      %v2376 = vunpack.c.l.b16 %v311
      %v2377 = vpack.c.b16 %v2373, %v2372
      %v2378 = vpack.c.b16 %v2375, %v2374
      %v2379 = vpack.c.b16 %v2376, %v2376
      %vm2382 = vcmask 293888
      %v2384 = vsel %vm2382, %v2280, 0
      %v2387 = vsel %vm2382, %v2281, 0
      %v2390 = vsel %vm2382, %v2282, 0
      %v2393 = vsel %vm2382, %v2283, 0
      %v2396 = vsel %vm2382, %v2284, 0
      %v2399 = vsel %vm2382, %v2285, 0
      %v2402 = vsel %vm2382, %v2286, 0
      %v2405 = vsel %vm2382, %v2287, 0
      %v2408 = vsel %vm2382, %v2288, 0
      %v2411 = vsel %vm2382, %v2289, 0
      %v2414 = vsel %vm2382, %v2290, 0
      %v2417 = vsel %vm2382, %v2291, 0
      %v2420 = vsel %vm2382, %v2292, 0
      %v2423 = vsel %vm2382, %v2293, 0
      %v2426 = vsel %vm2382, %v2294, 0
      %v2429 = vsel %vm2382, %v2295, 0
      %vm2431 = vcmask 1041408
      %v2433 = vsel %vm2431, %v2379, 0
      %2435 = vmatprep.subr.bf16.mxu0 0
      %2436 = vmatpush1.bf16.msra.mxu0 %v2377
      %2437 = vmatprep.subr.bf16.mxu0 0
      %2438 = vmatpush1.bf16.msra.mxu0 %v2378
      %2439 = vmatprep.subr.bf16.mxu0 0
      %2440 = vmatpush1.bf16.msra.mxu0 %v2433
      %2441 = vmatprep.subr.bf16.mxu0 0
      %2442 = vmatpush1.bf16.msra.mxu0 0
      %2443 = vmatprep.subr.bf16.mxu0 0
      %2444 = vmatpush1.bf16.msra.mxu0 0
      %2445 = vmatprep.subr.bf16.mxu0 0
      %2446 = vmatpush1.bf16.msra.mxu0 0
      %2447 = vmatprep.subr.bf16.mxu0 0
      %2448 = vmatpush1.bf16.msra.mxu0 0
      %2449 = vmatprep.subr.bf16.mxu0 0
      %2450 = vmatpush1.bf16.msra.mxu0 0
      %2451 = vmatprep.subr.bf16.mxu0 0
      %2452 = vmatpush1.bf16.msra.mxu0 0
      %2453 = vmatprep.subr.bf16.mxu0 0
      %2454 = vmatpush1.bf16.msra.mxu0 0
      %2455 = vmatprep.subr.bf16.mxu0 0
      %2456 = vmatpush1.bf16.msra.mxu0 0
      %2457 = vmatprep.subr.bf16.mxu0 0
      %2458 = vmatpush1.bf16.msra.mxu0 0
      %2459 = vmatprep.subr.bf16.mxu0 0
      %2460 = vmatpush1.bf16.msra.mxu0 0
      %2461 = vmatprep.subr.bf16.mxu0 0
      %2462 = vmatpush1.bf16.msra.mxu0 0
      %2463 = vmatprep.subr.bf16.mxu0 0
      %2464 = vmatpush1.bf16.msra.mxu0 0
      %2465 = vmatprep.subr.bf16.mxu0 0
      %2466 = vmatpush1.bf16.msra.mxu0 0
      %2467 = vmatprep.mubr.bf16.mxu0 0
      %2468 = vmatmul.mubr.bf16.gmra.mrb[0].mxu0 %v2384
      %v2469 = vpop.f32.mrb[0].mxu0
      %v2470 = vadd.f32 %v2365, %v2469
      %v2471 = vpop.f32.mrb[0].mxu0
      %v2472 = vpop.f32.mrb[0].mxu0
      %v2473 = vadd.f32 %v2365, %v2472
      %v2474 = vpop.f32.mrb[0].mxu0
      %2475 = vmatprep.mubr.bf16.mxu0 0
      %2476 = vmatmul.mubr.bf16.gmra.mrb[0].mxu0 %v2387
      %v2477 = vpop.f32.mrb[0].mxu0
      %v2478 = vadd.f32 %v2365, %v2477
      %v2479 = vpop.f32.mrb[0].mxu0
      %v2480 = vpop.f32.mrb[0].mxu0
      %v2481 = vadd.f32 %v2365, %v2480
      %v2482 = vpop.f32.mrb[0].mxu0
      %2483 = vmatprep.mubr.bf16.mxu0 0
      %2484 = vmatmul.mubr.bf16.gmra.mrb[0].mxu0 %v2390
      %v2485 = vpop.f32.mrb[0].mxu0
      %v2486 = vadd.f32 %v2365, %v2485
      %v2487 = vpop.f32.mrb[0].mxu0
      %v2488 = vpop.f32.mrb[0].mxu0
      %v2489 = vadd.f32 %v2365, %v2488
      %v2490 = vpop.f32.mrb[0].mxu0
      %2491 = vmatprep.mubr.bf16.mxu0 0
      %2492 = vmatmul.mubr.bf16.gmra.mrb[0].mxu0 %v2393
      %v2493 = vpop.f32.mrb[0].mxu0
      %v2494 = vadd.f32 %v2365, %v2493
      %v2495 = vpop.f32.mrb[0].mxu0
      %v2496 = vpop.f32.mrb[0].mxu0
      %v2497 = vadd.f32 %v2365, %v2496
      %v2498 = vpop.f32.mrb[0].mxu0
      %2499 = vmatprep.mubr.bf16.mxu0 0
      %2500 = vmatmul.mubr.bf16.gmra.mrb[0].mxu0 %v2396
      %v2501 = vpop.f32.mrb[0].mxu0
      %v2502 = vadd.f32 %v2365, %v2501
      %v2503 = vpop.f32.mrb[0].mxu0
      %v2504 = vpop.f32.mrb[0].mxu0
      %v2505 = vadd.f32 %v2365, %v2504
      %v2506 = vpop.f32.mrb[0].mxu0
      %2507 = vmatprep.mubr.bf16.mxu0 0
      %2508 = vmatmul.mubr.bf16.gmra.mrb[0].mxu0 %v2399
      %v2509 = vpop.f32.mrb[0].mxu0
      %v2510 = vadd.f32 %v2365, %v2509
      %v2511 = vpop.f32.mrb[0].mxu0
      %v2512 = vpop.f32.mrb[0].mxu0
      %v2513 = vadd.f32 %v2365, %v2512
      %v2514 = vpop.f32.mrb[0].mxu0
      %2515 = vmatprep.mubr.bf16.mxu0 0
      %2516 = vmatmul.mubr.bf16.gmra.mrb[0].mxu0 %v2402
      %v2517 = vpop.f32.mrb[0].mxu0
      %v2518 = vadd.f32 %v2365, %v2517
      %v2519 = vpop.f32.mrb[0].mxu0
      %v2520 = vpop.f32.mrb[0].mxu0
      %v2521 = vadd.f32 %v2365, %v2520
      %v2522 = vpop.f32.mrb[0].mxu0
      %2523 = vmatprep.mubr.bf16.mxu0 0
      %2524 = vmatmul.mubr.bf16.gmra.mrb[0].mxu0 %v2405
      %v2525 = vpop.f32.mrb[0].mxu0
      %v2526 = vadd.f32 %v2365, %v2525
      %v2527 = vpop.f32.mrb[0].mxu0
      %v2528 = vpop.f32.mrb[0].mxu0
      %v2529 = vadd.f32 %v2365, %v2528
      %v2530 = vpop.f32.mrb[0].mxu0
      %2531 = vmatprep.mubr.bf16.mxu0 0
      %2532 = vmatmul.mubr.bf16.gmra.mrb[0].mxu0 %v2408
      %v2533 = vpop.f32.mrb[0].mxu0
      %v2534 = vadd.f32 %v2365, %v2533
      %v2535 = vpop.f32.mrb[0].mxu0
      %v2536 = vpop.f32.mrb[0].mxu0
      %v2537 = vadd.f32 %v2365, %v2536
      %v2538 = vpop.f32.mrb[0].mxu0
      %2539 = vmatprep.mubr.bf16.mxu0 0
      %2540 = vmatmul.mubr.bf16.gmra.mrb[0].mxu0 %v2411
      %v2541 = vpop.f32.mrb[0].mxu0
      %v2542 = vadd.f32 %v2365, %v2541
      %v2543 = vpop.f32.mrb[0].mxu0
      %v2544 = vpop.f32.mrb[0].mxu0
      %v2545 = vadd.f32 %v2365, %v2544
      %v2546 = vpop.f32.mrb[0].mxu0
      %2547 = vmatprep.mubr.bf16.mxu0 0
      %2548 = vmatmul.mubr.bf16.gmra.mrb[0].mxu0 %v2414
      %v2549 = vpop.f32.mrb[0].mxu0
      %v2550 = vadd.f32 %v2365, %v2549
      %v2551 = vpop.f32.mrb[0].mxu0
      %v2552 = vpop.f32.mrb[0].mxu0
      %v2553 = vadd.f32 %v2365, %v2552
      %v2554 = vpop.f32.mrb[0].mxu0
      %2555 = vmatprep.mubr.bf16.mxu0 0
      %2556 = vmatmul.mubr.bf16.gmra.mrb[0].mxu0 %v2417
      %v2557 = vpop.f32.mrb[0].mxu0
      %v2558 = vadd.f32 %v2365, %v2557
      %v2559 = vpop.f32.mrb[0].mxu0
      %v2560 = vpop.f32.mrb[0].mxu0
      %v2561 = vadd.f32 %v2365, %v2560
      %v2562 = vpop.f32.mrb[0].mxu0
      %2563 = vmatprep.mubr.bf16.mxu0 0
      %2564 = vmatmul.mubr.bf16.gmra.mrb[0].mxu0 %v2420
      %v2565 = vpop.f32.mrb[0].mxu0
      %v2566 = vadd.f32 %v2365, %v2565
      %v2567 = vpop.f32.mrb[0].mxu0
      %v2568 = vpop.f32.mrb[0].mxu0
      %v2569 = vadd.f32 %v2365, %v2568
      %v2570 = vpop.f32.mrb[0].mxu0
      %2571 = vmatprep.mubr.bf16.mxu0 0
      %2572 = vmatmul.mubr.bf16.gmra.mrb[0].mxu0 %v2423
      %v2573 = vpop.f32.mrb[0].mxu0
      %v2574 = vadd.f32 %v2365, %v2573
      %v2575 = vpop.f32.mrb[0].mxu0
      %v2576 = vpop.f32.mrb[0].mxu0
      %v2577 = vadd.f32 %v2365, %v2576
      %v2578 = vpop.f32.mrb[0].mxu0
      %2579 = vmatprep.mubr.bf16.mxu0 0
      %2580 = vmatmul.mubr.bf16.gmra.mrb[0].mxu0 %v2426
      %v2581 = vpop.f32.mrb[0].mxu0
      %v2582 = vadd.f32 %v2365, %v2581
      %v2583 = vpop.f32.mrb[0].mxu0
      %v2584 = vpop.f32.mrb[0].mxu0
      %v2585 = vadd.f32 %v2365, %v2584
      %v2586 = vpop.f32.mrb[0].mxu0
      %2587 = vmatprep.mubr.bf16.mxu0 0
      %2588 = vmatmul.mubr.bf16.gmra.mrb[0].mxu0 %v2429
      %v2589 = vpop.f32.mrb[0].mxu0
      %v2590 = vadd.f32 %v2365, %v2589
      %v2591 = vpop.f32.mrb[0].mxu0
      %v2592 = vpop.f32.mrb[0].mxu0
      %v2593 = vadd.f32 %v2365, %v2592
      %v2594 = vpop.f32.mrb[0].mxu0
      %2595 = vdwg.mxu0
      %v2596 = vadd.f32 %v2470, %v2328
      %v2597 = vadd.f32 %v2473, %v2329
      %v2598 = vadd.f32 %v2478, %v2330
      %v2599 = vadd.f32 %v2481, %v2331
      %v2600 = vadd.f32 %v2486, %v2332
      %v2601 = vadd.f32 %v2489, %v2333
      %v2602 = vadd.f32 %v2494, %v2334
      %v2603 = vadd.f32 %v2497, %v2335
      %v2604 = vadd.f32 %v2502, %v2336
      %v2605 = vadd.f32 %v2505, %v2337
      %v2606 = vadd.f32 %v2510, %v2338
      %v2607 = vadd.f32 %v2513, %v2339
      %v2608 = vadd.f32 %v2518, %v2340
      %v2609 = vadd.f32 %v2521, %v2341
      %v2610 = vadd.f32 %v2526, %v2342
      %v2611 = vadd.f32 %v2529, %v2343
      %v2612 = vadd.f32 %v2534, %v2344
      %v2613 = vadd.f32 %v2537, %v2345
      %v2614 = vadd.f32 %v2542, %v2346
      %v2615 = vadd.f32 %v2545, %v2347
      %v2616 = vadd.f32 %v2550, %v2348
      %v2617 = vadd.f32 %v2553, %v2349
      %v2618 = vadd.f32 %v2558, %v2350
      %v2619 = vadd.f32 %v2561, %v2351
      %v2620 = vadd.f32 %v2566, %v2352
      %v2621 = vadd.f32 %v2569, %v2353
      %v2622 = vadd.f32 %v2574, %v2354
      %v2623 = vadd.f32 %v2577, %v2355
      %v2624 = vadd.f32 %v2582, %v2356
      %v2625 = vadd.f32 %v2585, %v2357
      %v2626 = vadd.f32 %v2590, %v2358
      %v2627 = vadd.f32 %v2593, %v2359
      %2628 = vst [vmem:[%s271] sm:$0xff] %v2596
      %2629 = vst [vmem:[%s271 + $0x8] sm:$0xff] %v2597
      %2630 = vst [vmem:[%s271 + $0x10] sm:$0xff] %v2598
      %2631 = vst [vmem:[%s271 + $0x18] sm:$0xff] %v2599
      %2632 = vst [vmem:[%s271 + $0x20] sm:$0xff] %v2600
      %2633 = vst [vmem:[%s271 + $0x28] sm:$0xff] %v2601
      %2634 = vst [vmem:[%s271 + $0x30] sm:$0xff] %v2602
      %2635 = vst [vmem:[%s271 + $0x38] sm:$0xff] %v2603
      %2636 = vst [vmem:[%s271 + $0x40] sm:$0xff] %v2604
      %2637 = vst [vmem:[%s271 + $0x48] sm:$0xff] %v2605
      %2638 = vst [vmem:[%s271 + $0x50] sm:$0xff] %v2606
      %2639 = vst [vmem:[%s271 + $0x58] sm:$0xff] %v2607
      %2640 = vst [vmem:[%s271 + $0x60] sm:$0xff] %v2608
      %2641 = vst [vmem:[%s271 + $0x68] sm:$0xff] %v2609
      %2642 = vst [vmem:[%s271 + $0x70] sm:$0xff] %v2610
      %2643 = vst [vmem:[%s271 + $0x78] sm:$0xff] %v2611
      %2644 = vst [vmem:[%s271 + $0x80] sm:$0xff] %v2612
      %2645 = vst [vmem:[%s271 + $0x88] sm:$0xff] %v2613
      %2646 = vst [vmem:[%s271 + $0x90] sm:$0xff] %v2614
      %2647 = vst [vmem:[%s271 + $0x98] sm:$0xff] %v2615
      %2648 = vst [vmem:[%s271 + $0xa0] sm:$0xff] %v2616
      %2649 = vst [vmem:[%s271 + $0xa8] sm:$0xff] %v2617
      %2650 = vst [vmem:[%s271 + $0xb0] sm:$0xff] %v2618
      %2651 = vst [vmem:[%s271 + $0xb8] sm:$0xff] %v2619
      %2652 = vst [vmem:[%s271 + $0xc0] sm:$0xff] %v2620
      %2653 = vst [vmem:[%s271 + $0xc8] sm:$0xff] %v2621
      %2654 = vst [vmem:[%s271 + $0xd0] sm:$0xff] %v2622
      %2655 = vst [vmem:[%s271 + $0xd8] sm:$0xff] %v2623
      %2656 = vst [vmem:[%s271 + $0xe0] sm:$0xff] %v2624
      %2657 = vst [vmem:[%s271 + $0xe8] sm:$0xff] %v2625
      %2658 = vst [vmem:[%s271 + $0xf0] sm:$0xff] %v2626
      %2659 = vst [vmem:[%s271 + $0xf8] sm:$0xff] %v2627
      %p2660 = scmp.lt.s32.totalorder %s17, 1
      %s2661 = scalar_select %p2660, %s17, 1
      %s2662 = smul.addr %s2661, 32
      %s2663 = smul.addr %s2662, 8
      %s2664 = scalar_lea.vmem %s6, %s2663
      // Predicated region
      $region45: #{basic_block_curve_forward.3} parent=43 // pred_check
        %p2665 = pneg %p171
      $region46: #{basic_block_curve_forward.3} parent=43 // pred_check_branch
        %2667 = sbr.rel (%p2665) target = $region48
      $region47: #{basic_block_curve_forward.3} parent=43 // pred_region
        _
      $region48: #{basic_block_curve_forward.3} parent=43 // pred_fallthru
        _
    $region44: #{basic_block_curve_forward.3} parent=5 // pred_fallthru
      _
    %p2668 = scmp.le.s32.totalorder 2, %s12
    // Predicated region
    $region49: #{basic_block_curve_forward.3} parent=5 // pred_check
      %p2669 = pneg %p2668
    $region50: #{basic_block_curve_forward.3} parent=5 // pred_check_branch
      %2671 = sbr.rel (%p2669) target = $region52
    $region51: #{basic_block_curve_forward.3} parent=5 // pred_region
      %s2672 = ssub.s32 %s12, 2
      // Predicated region
      $region53: #{basic_block_curve_forward.3} parent=51 // pred_check
        %p2673 = pneg %p177
      $region54: #{basic_block_curve_forward.3} parent=51 // pred_check_branch
        %2675 = sbr.rel (%p2673) target = $region56
      $region55: #{basic_block_curve_forward.3} parent=51 // pred_region
        %p2676 = scmp.lt.s32.totalorder %s18, 1
        %s2677 = scalar_select %p2676, %s18, 1
        %s2678 = smul.addr %s2677, 32
        %s2679 = smul.addr %s2678, 8
        %s2680 = scalar_lea.vmem %s6, %s2679
      $region56: #{basic_block_curve_forward.3} parent=51 // pred_fallthru
        _
    $region52: #{basic_block_curve_forward.3} parent=5 // pred_fallthru
      _
  $region6: #{basic_block_curve_forward.3} parent=0 // loop_footer
    %s16 = sadd.s32 1, %s12
  $region7: #{basic_block_curve_forward.3} parent=0 // loop_footer_branch
    %11 = sbr.rel target = $region3
  $region8: #{basic_block_curve_forward.3} parent=0 // loop_exit
    _

</llo_original>
